<compile_context>
chip_gen: v6e
topology: v6e:2x2x1
jax: 0.10.0
libtpu: 0.0.40
codegen_flags: <defaults>
</compile_context>

<pallas_src>
import jax
import jax.numpy as jnp
from jax.experimental import pallas as pl
from jax.experimental.pallas import tpu as pltpu
import numpy as np


# ---------------------------------------------------------------------------
# Kernel: one fused affine map per batch tile (VPU multiply + XLU lane reduce).
# ---------------------------------------------------------------------------
def fused_mlp_kernel(x_ref, w_ref, b_ref, o_ref):
    # x_ref: (bm, D) activation tile (double-buffered across the grid)
    # w_ref: (1, D)  fused weight row, lane-dense, VMEM-resident (const index_map)
    # b_ref: (1, 1)  fused bias
    # o_ref: (bm, 1) output tile (tiny; lane-sparse store is negligible here)
    prod = x_ref[...] * w_ref[...]                       # VPU broadcast multiply
    acc = jnp.sum(prod, axis=-1, keepdims=True)          # XLU cross-lane reduce
    o_ref[...] = (acc + b_ref[...]).astype(o_ref.dtype)


def _round_up(n, m):
    return ((n + m - 1) // m) * m


# ---------------------------------------------------------------------------
# One-time parameter fusion (done at param-load time, NOT per call).
# ---------------------------------------------------------------------------
def fuse_params(params):
    """Fold [W1,b1,...,W5,b5] (W as [in,out], b as [1,out]) into (w_row, b_fused).

    Returns w_row with shape [1, D] (lane-dense) and b_fused with shape [1, 1].
    """
    w_fused = params[0]
    b_fused = params[1]
    for i in range(2, len(params), 2):
        w_i, b_i = params[i], params[i + 1]
        w_fused = jnp.dot(w_fused, w_i, preferred_element_type=jnp.float32)
        b_fused = jnp.dot(b_fused, w_i, preferred_element_type=jnp.float32) + b_i
    return w_fused.T, b_fused  # [1, D], [1, 1]


# ---------------------------------------------------------------------------
# Tile sizing: memory-bound streaming kernel, so tiles want to be big.
# ---------------------------------------------------------------------------
_MAX_BM = 2048   # 2048x768 f32 tile = 6 MiB; 12 MiB double-buffered fits every
                 # generation's scoped-VMEM default (v5e 16 MiB, v6e/v7x 32 MiB).
_MIN_BM = 512    # below ~512 the ~0.35us/step overhead pulls us off the HBM roofline.


def _choose_bm(B):
    # Aim for >= 2 grid steps (v7x megacore sharding) without dropping tiles
    # below _MIN_BM or above _MAX_BM; never allocate a tile larger than B.
    bm = _round_up(pl.cdiv(B, 2), 8)
    bm = max(_MIN_BM, min(_MAX_BM, bm))
    return min(bm, _round_up(B, 8))


# ---------------------------------------------------------------------------
# Wrapper: batch-tiled pallas_call with a tiny-batch XLA bypass.
# ---------------------------------------------------------------------------
def mlp_forward(x, w_row, b_fused, *, min_pallas_batch=1024):
    """x: [B, D] float32 -> [B, 1] float32. w_row: [1, D], b_fused: [1, 1]."""
    B, D = x.shape

    if B == 0:
        return jnp.zeros((0, 1), x.dtype)

    # Tiny batches (the .score() path is B=1..few hundred): pallas_call launch
    # and pipeline setup dominate the ~KB of traffic; plain XLA is at least as fast.
    if B < min_pallas_batch:
        return (jnp.dot(x, w_row.T, preferred_element_type=jnp.float32)
                + b_fused).astype(x.dtype)

    bm = _choose_bm(B)
    grid = (pl.cdiv(B, bm),)   # no wrapper-side pad: edge block is partial

    out = pl.pallas_call(
        fused_mlp_kernel,
        out_shape=jax.ShapeDtypeStruct((B, 1), x.dtype),
        grid_spec=pltpu.PrefetchScalarGridSpec(
            num_scalar_prefetch=0,
            grid=grid,
            in_specs=[
                # activation tile: marches over the batch (double-buffered)
                pl.BlockSpec((bm, D), lambda i: (i, 0)),
                # fused weight row / bias: constant block index -> DMA'd once,
                # stays VMEM resident across all grid steps
                pl.BlockSpec((1, D), lambda i: (0, 0)),
                pl.BlockSpec((1, 1), lambda i: (0, 0)),
            ],
            out_specs=pl.BlockSpec((bm, 1), lambda i: (i, 0)),
        ),
        compiler_params=pltpu.CompilerParams(
            # batch axis is embarrassingly parallel -> shards grid steps across
            # the two TensorCores on v7x; harmless on v5e/v6e.
            dimension_semantics=("parallel",),
        ),
        cost_estimate=pl.CostEstimate(
            flops=2 * B * D,
            transcendentals=0,
            bytes_accessed=(B * D + D + 1 + B) * 4,
        ),
    )(x, w_row, b_fused)

    return out


# ---------------------------------------------------------------------------
# Parameter init (matches nn.Linear's uniform bound) and pure-JAX reference.
# ---------------------------------------------------------------------------
def init_params(key, input_size):
    """Weights stored as [in, out] (transpose of torch), biases as [1, out]."""
    dims = [(input_size, 1024), (1024, 128), (128, 64), (64, 16), (16, 1)]
    params = []
    for i, (d_in, d_out) in enumerate(dims):
        kw, kb, key = jax.random.split(jax.random.fold_in(key, i), 3)
        bound = 1.0 / np.sqrt(d_in)
        w = jax.random.uniform(kw, (d_in, d_out), jnp.float32, -bound, bound)
        b = jax.random.uniform(kb, (1, d_out), jnp.float32, -bound, bound)
        params += [w, b]
    return params


def mlp_reference(x, params):
    """Unfused layer-by-layer reference (Dropout = identity in eval)."""
    h = x
    for i in range(0, len(params), 2):
        h = h @ params[i] + params[i + 1]
    return h


if __name__ == "__main__":
    input_size = 768   # CLIP ViT-L/14 image_embeds dimension

    key = jax.random.PRNGKey(0)
    kx, kp = jax.random.split(key)
    params = init_params(kp, input_size)

    # One-time fusion at "param load" time.
    w_row, b_fused = fuse_params(params)
    assert w_row.shape == (1, input_size) and b_fused.shape == (1, 1)

    # --- 1) tiny batch (the .score() usage): dispatches to the XLA bypass ---
    x_small = jax.random.normal(kx, (2, input_size), dtype=jnp.float32)
    x_small = x_small / jnp.linalg.norm(x_small, axis=-1, keepdims=True)
    out_small = jax.block_until_ready(mlp_forward(x_small, w_row, b_fused))
    ref_small = mlp_reference(x_small, params)
    np.testing.assert_allclose(np.asarray(out_small), np.asarray(ref_small),
                               rtol=1e-4, atol=1e-4)
    assert out_small.shape == (2, 1)

    # --- 2) streaming batch: exercises the Pallas kernel with 2 grid steps ---
    #     (and a partial tail block, since 2500 % 1256 != 0 -> no wrapper pad)
    B_big = 2500
    x_big = jax.random.normal(jax.random.fold_in(kx, 1), (B_big, input_size),
                              dtype=jnp.float32)
    x_big = x_big / jnp.linalg.norm(x_big, axis=-1, keepdims=True)
    out_big = jax.block_until_ready(mlp_forward(x_big, w_row, b_fused))
    ref_big = mlp_reference(x_big, params)
    np.testing.assert_allclose(np.asarray(out_big), np.asarray(ref_big),
                               rtol=1e-4, atol=1e-4)
    assert out_big.shape == (B_big, 1)

    print("KERNEL_OK")
</pallas_src>

<mosaic_0001>
module attributes {stable_mosaic.version = 11 : i64} {
  func.func @fused_mlp_kernel(%arg0: i32, %arg1: memref<1256x768xf32, #tpu.memory_space<vmem>>, %arg2: memref<1x768xf32, #tpu.memory_space<vmem>>, %arg3: memref<1x1xf32, #tpu.memory_space<vmem>>, %arg4: memref<1256x1xf32, #tpu.memory_space<vmem>>) attributes {dimension_semantics = [#tpu.dimension_semantics<parallel>], iteration_bounds = array<i64: 2>, scalar_prefetch = 0 : i64, scratch_operands = 0 : i64, tpu.core_type = #tpu.core_type<tc>, window_params = [{transform_indices = @transform_0, window_bounds = array<i64: 1256, 768>}, {pipeline_mode = #tpu.pipeline_mode<synchronous>, transform_indices = @transform_1, window_bounds = array<i64: 1, 768>}, {pipeline_mode = #tpu.pipeline_mode<synchronous>, transform_indices = @transform_2, window_bounds = array<i64: 1, 1>}, {transform_indices = @transform_3, window_bounds = array<i64: 1256, 1>}]} {
    %c0 = arith.constant 0 : index
    %c0_0 = arith.constant 0 : index
    %0 = vector.load %arg1[%c0, %c0_0] : memref<1256x768xf32, #tpu.memory_space<vmem>>, vector<1256x768xf32>
    %c0_1 = arith.constant 0 : index
    %c0_2 = arith.constant 0 : index
    %1 = vector.load %arg2[%c0_1, %c0_2] : memref<1x768xf32, #tpu.memory_space<vmem>>, vector<1x768xf32>
    %2 = vector.broadcast %1 : vector<1x768xf32> to vector<1256x768xf32>
    %3 = arith.mulf %0, %2 : vector<1256x768xf32>
    %cst = arith.constant dense<0.000000e+00> : vector<1256xf32>
    %4 = vector.multi_reduction <add>, %3, %cst [1] : vector<1256x768xf32> to vector<1256xf32>
    %5 = vector.shape_cast %4 : vector<1256xf32> to vector<1256x1xf32>
    %c0_3 = arith.constant 0 : index
    %c0_4 = arith.constant 0 : index
    %6 = vector.load %arg3[%c0_3, %c0_4] : memref<1x1xf32, #tpu.memory_space<vmem>>, vector<1x1xf32>
    %7 = vector.broadcast %6 : vector<1x1xf32> to vector<1256x1xf32>
    %8 = arith.addf %5, %7 : vector<1256x1xf32>
    %c0_5 = arith.constant 0 : index
    %c0_6 = arith.constant 0 : index
    %9 = vector.load %arg4[%c0_5, %c0_6] : memref<1256x1xf32, #tpu.memory_space<vmem>>, vector<1256x1xf32>
    tpu.vector_store %arg4[%c0_5, %c0_6], %8 {strides = array<i32>} : memref<1256x1xf32, #tpu.memory_space<vmem>>, vector<1256x1xf32>,
    return
  }
  func.func @transform_0(%arg0: i32) -> (i32, i32) {
    %c0_i32 = arith.constant 0 : i32
    %c0_i32_0 = arith.constant 0 : i32
    return %arg0, %c0_i32 : i32, i32
  }
  func.func @transform_1(%arg0: i32) -> (i32, i32) {
    %c0_i32 = arith.constant 0 : i32
    %c0_i32_0 = arith.constant 0 : i32
    %c0_i32_1 = arith.constant 0 : i32
    return %c0_i32, %c0_i32_0 : i32, i32
  }
  func.func @transform_2(%arg0: i32) -> (i32, i32) {
    %c0_i32 = arith.constant 0 : i32
    %c0_i32_0 = arith.constant 0 : i32
    %c0_i32_1 = arith.constant 0 : i32
    return %c0_i32, %c0_i32_0 : i32, i32
  }
  func.func @transform_3(%arg0: i32) -> (i32, i32) {
    %c0_i32 = arith.constant 0 : i32
    %c0_i32_0 = arith.constant 0 : i32
    return %arg0, %c0_i32 : i32, i32
  }
}

</mosaic_0001>

<llo_original>
// kernel: tpu_custom_call.1
$region0: #{tpu_custom_call.1}
  #allocation0 [shape = 'u32[]', space=smem, size = 0x4, offset = 0x4, fixed_abs, tag = 'smem constant byte address 0x4 - core index']
  #allocation1 [shape = 'u32[144,128]{1,0:T(1,128)}', space=vmem, size = 0x12000, scoped, tag = 'internal scratch']
  #allocation2 [shape = 'f32[1,1]{1,0:T(1,128)S(1)}', space=vmem, size = 0x200, scoped, tag = 'scoped memory for tpu_custom_call.1']
  %s0 = inlined_call_operand.hbm [shape: f32[2500,768], index: 0, kind: input, shape index: {}]
  %s1 = inlined_call_operand.hbm [shape: f32[1,768], index: 1, kind: input, shape index: {}]
  %s2 = inlined_call_operand.<no memory space> [shape: f32[1,1], index: 2, kind: input, shape index: {}]
  %s3 = inlined_call_operand.vmem [shape: f32[2500,1], index: 3, kind: output, shape index: {}]
  %s4 = sld [smem:[#allocation0]]
  $region101: #{tpu_custom_call.1} parent=0
    _
  %s6 = ssub.s32 1, %s4
  %s7 = scalar_select 0, %s6, %s4
  %v8 = vstv %s2
  %9 = vst [vmem:[#allocation2] sm:$0x1] %v8
  $region1: #{tpu_custom_call.1} parent=0
    #allocation3 [shape = 'u8[7716864]{0}', space=vmem, size = 0x75c000, scoped, tag = 'input window, operand 0']
    #allocation4 [shape = 's32[2]{0}', space=sflag, size = 0x8, scoped, tag = 'scoped memory for tpu_custom_call.1']
    #allocation5 [shape = 'u8[3072]{0}', space=vmem, size = 0xc00, scoped, tag = 'input window, operand 1, single buffered']
    #allocation6 [shape = 's32[1]{0}', space=sflag, size = 0x4, scoped, tag = 'scoped memory for tpu_custom_call.1']
    #allocation7 [shape = 'u8[1286144]{0}', space=vmem, size = 0x13a000, scoped, tag = 'output window, operand 0']
    %10 = vsyncpa [#allocation4], 0
    %s11 = scalar_lea.sflag [#allocation4], 1
    %12 = vsyncpa %s11, 0
    %13 = vsyncpa [#allocation6], 0
    loop: start=0, step=1, limit=4
    $region2: #{tpu_custom_call.1} parent=1 // loop_pre_header
      _
    $region3: #{tpu_custom_call.1} parent=1 // loop_header
      %s15 = sphi 0, %s19
      %p16 = scmp.ge.s32.totalorder %s15, 4
      %s25 = sphi 0, %s27
      %s28 = sphi 0, %s25
      %s29 = sphi 0, %s28
      %s45 = sphi 0, %s29
      %s49 = sphi 0, %s49
      %s51 = sphi 0, %s49
      %s52 = sphi 0, %s51
      %s66 = sphi 0, %s52
      %s70 = sphi 0, %s70
      %s72 = sphi 0, %s70
      %s73 = sphi 0, %s72
      %s87 = sphi 0, %s73
      %s93 = sphi 0, %s95
      %s96 = sphi 0, %s93
      %s97 = sphi 0, %s96
      %s113 = sphi 0, %s97
    $region4: #{tpu_custom_call.1} parent=1 // loop_header_branch
      %18 = sbr.rel (%p16) target = $region8
    $region5: #{tpu_custom_call.1} parent=1 // loop_body
      %s20 = ssub.s32 %s15, 1
      %s21 = ssub.s32 %s15, 2
      %s22 = sadd.s32 %s15, 1
      %s23 = ssub.s32 %s15, %s22
      %p24 = scmp.eq.s32.totalorder %s23, 0
      %s26 = sadd.s32 %s25, 1
      %s27 = scalar_select %p24, %s25, %s26
      %p30 = pneg %p24
      %p31 = scmp.eq.s32.totalorder %s15, 1
      %p32 = por %p30, %p31
      %p33 = scmp.ne.s32.totalorder %s25, %s28
      %p34 = scmp.eq.s32.totalorder %s15, 0
      %p35 = por %p33, %p34
      %p36 = scmp.ne.s32.totalorder %s25, %s28
      %p37 = scmp.eq.s32.totalorder %s20, 1
      %p38 = por %p36, %p37
      %p39 = scmp.ne.s32.totalorder %s28, %s29
      %p40 = scmp.eq.s32.totalorder %s20, 0
      %p41 = por %p39, %p40
      %p42 = scmp.ne.s32.totalorder %s28, %s29
      %p43 = scmp.eq.s32.totalorder %s21, 1
      %p44 = por %p42, %p43
      %p46 = scmp.ne.s32.totalorder %s29, %s45
      %p47 = scmp.eq.s32.totalorder %s21, 0
      %p48 = por %p46, %p47
      %s50 = sadd.s32 %s49, 1
      %p53 = scmp.eq.s32.totalorder %s15, 1
      %p54 = scmp.ne.s32.totalorder %s49, %s51
      %p55 = scmp.eq.s32.totalorder %s15, 0
      %p56 = por %p54, %p55
      %p57 = scmp.ne.s32.totalorder %s49, %s51
      %p58 = scmp.eq.s32.totalorder %s20, 1
      %p59 = por %p57, %p58
      %p60 = scmp.ne.s32.totalorder %s51, %s52
      %p61 = scmp.eq.s32.totalorder %s20, 0
      %p62 = por %p60, %p61
      %p63 = scmp.ne.s32.totalorder %s51, %s52
      %p64 = scmp.eq.s32.totalorder %s21, 1
      %p65 = por %p63, %p64
      %p67 = scmp.ne.s32.totalorder %s52, %s66
      %p68 = scmp.eq.s32.totalorder %s21, 0
      %p69 = por %p67, %p68
      %s71 = sadd.s32 %s70, 1
      %p74 = scmp.eq.s32.totalorder %s15, 1
      %p75 = scmp.ne.s32.totalorder %s70, %s72
      %p76 = scmp.eq.s32.totalorder %s15, 0
      %p77 = por %p75, %p76
      %p78 = scmp.ne.s32.totalorder %s70, %s72
      %p79 = scmp.eq.s32.totalorder %s20, 1
      %p80 = por %p78, %p79
      %p81 = scmp.ne.s32.totalorder %s72, %s73
      %p82 = scmp.eq.s32.totalorder %s20, 0
      %p83 = por %p81, %p82
      %p84 = scmp.ne.s32.totalorder %s72, %s73
      %p85 = scmp.eq.s32.totalorder %s21, 1
      %p86 = por %p84, %p85
      %p88 = scmp.ne.s32.totalorder %s73, %s87
      %p89 = scmp.eq.s32.totalorder %s21, 0
      %p90 = por %p88, %p89
      %s91 = ssub.s32 %s15, %s22
      %p92 = scmp.eq.s32.totalorder %s91, 0
      %s94 = sadd.s32 %s93, 1
      %s95 = scalar_select %p92, %s93, %s94
      %p98 = pneg %p92
      %p99 = scmp.eq.s32.totalorder %s15, 1
      %p100 = por %p98, %p99
      %p101 = scmp.ne.s32.totalorder %s93, %s96
      %p102 = scmp.eq.s32.totalorder %s15, 0
      %p103 = por %p101, %p102
      %p104 = scmp.ne.s32.totalorder %s93, %s96
      %p105 = scmp.eq.s32.totalorder %s20, 1
      %p106 = por %p104, %p105
      %p107 = scmp.ne.s32.totalorder %s96, %s97
      %p108 = scmp.eq.s32.totalorder %s20, 0
      %p109 = por %p107, %p108
      %p110 = scmp.ne.s32.totalorder %s96, %s97
      %p111 = scmp.eq.s32.totalorder %s21, 1
      %p112 = por %p110, %p111
      %p114 = scmp.ne.s32.totalorder %s97, %s113
      %p115 = scmp.eq.s32.totalorder %s21, 0
      %p116 = por %p114, %p115
      %p117 = scmp.le.s32.totalorder 1, %s15
      %p118 = scmp.lt.s32.totalorder %s15, 3
      %p119 = pnand %p117, %p118
      %p120 = pneg %p119
      // Predicated region
      $region9: #{tpu_custom_call.1} parent=5 // pred_check
        _
      $region10: #{tpu_custom_call.1} parent=5 // pred_check_branch
        %122 = sbr.rel (%p119) target = $region12
      $region11: #{tpu_custom_call.1} parent=5 // pred_region
        %s123 = ssub.s32 %s15, 1
        // Predicated region
        $region13: #{tpu_custom_call.1} parent=11 // pred_check
          %p124 = pneg %p62
        $region14: #{tpu_custom_call.1} parent=11 // pred_check_branch
          %126 = sbr.rel (%p124) target = $region16
        $region15: #{tpu_custom_call.1} parent=11 // pred_region
          %s128 = ssub.s32 96, 96
          %129 = vsyncadd [#allocation6], %s128
          %s131 = sshll.u32 [#allocation5], 4
          %s132 = int_to_ptr.vmem [resolvable:$true] %s131
          %134 = dma.hbm_to_vmem [thread:$0]  %s1, 96, %s132, [#allocation6]
        $region16: #{tpu_custom_call.1} parent=11 // pred_fallthru
          _
        // Predicated region
        $region17: #{tpu_custom_call.1} parent=11 // pred_check
          %p135 = pneg %p83
        $region18: #{tpu_custom_call.1} parent=11 // pred_check_branch
          %137 = sbr.rel (%p135) target = $region20
        $region19: #{tpu_custom_call.1} parent=11 // pred_region
          _
        $region20: #{tpu_custom_call.1} parent=11 // pred_fallthru
          _
      $region12: #{tpu_custom_call.1} parent=5 // pred_fallthru
        _
      %p138 = scmp.lt.s32.totalorder %s15, 2
      // Predicated region
      $region21: #{tpu_custom_call.1} parent=5 // pred_check
        %p139 = pneg %p138
      $region22: #{tpu_custom_call.1} parent=5 // pred_check_branch
        %141 = sbr.rel (%p139) target = $region24
      $region23: #{tpu_custom_call.1} parent=5 // pred_region
        // Predicated region
        $region25: #{tpu_custom_call.1} parent=23 // pred_check
          %p142 = pneg %p35
        $region26: #{tpu_custom_call.1} parent=23 // pred_check_branch
          %144 = sbr.rel (%p142) target = $region28
        $region27: #{tpu_custom_call.1} parent=23 // pred_region
          %s145 = sand.u32 %s25, 1
          %s146 = scalar_lea.sflag [#allocation4], %s145
          %s147 = sand.u32 %s25, 1
          %s148 = smul.addr %s147, 7536
          %s149 = scalar_lea.vmem [#allocation3], %s148
          %s150 = smul.u32 157, %s15
          %s151 = ssub.s32 313, %s150
          %p152 = scmp.lt.s32.totalorder %s151, 157
          %s153 = scalar_select %p152, %s151, 157
          %s154 = smul.u32 128, %s153
          %s155 = smul.u32 %s154, 6
          %s157 = ssub.s32 120576, %s155
          %158 = vsyncadd %s146, %s157
          %p159 = scmp.ne.s32.totalorder 0, %s155
          %s160 = smul.addr %s150, 6
          %s161 = smul.addr %s160, 128
          %s162 = scalar_lea.hbm %s0, %s161
          %s163 = smul.u32 48, %s153
          %s164 = sshll.u32 %s149, 4
          %s165 = int_to_ptr.vmem [resolvable:$true] %s164
          %s166 = sshll.u32 %s163, 4
          %170 = dma.hbm_to_vmem [thread:$0]  (%p159), %s162, %s166, %s165, %s146, 768, 768, 48
        $region28: #{tpu_custom_call.1} parent=23 // pred_fallthru
          _
      $region24: #{tpu_custom_call.1} parent=5 // pred_fallthru
        _
      %p171 = scmp.le.s32.totalorder 1, %s15
      %p172 = scmp.lt.s32.totalorder %s15, 3
      %p173 = pnand %p171, %p172
      %p174 = pneg %p173
      // Predicated region
      $region29: #{tpu_custom_call.1} parent=5 // pred_check
        _
      $region30: #{tpu_custom_call.1} parent=5 // pred_check_branch
        %176 = sbr.rel (%p173) target = $region32
      $region31: #{tpu_custom_call.1} parent=5 // pred_region
        %s177 = ssub.s32 %s15, 1
        %s178 = sand.u32 %s28, 1
        %s179 = scalar_lea.sflag [#allocation4], %s178
        %s180 = sand.u32 %s28, 1
        %s181 = smul.addr %s180, 7536
        %s182 = scalar_lea.vmem [#allocation3], %s181
        // Predicated region
        $region33: #{tpu_custom_call.1} parent=31 // pred_check
          %p183 = pneg %p41
        $region34: #{tpu_custom_call.1} parent=31 // pred_check_branch
          %185 = sbr.rel (%p183) target = $region36
        $region35: #{tpu_custom_call.1} parent=31 // pred_region
          %186 = dma.done %s179, 120576
        $region36: #{tpu_custom_call.1} parent=31 // pred_fallthru
          _
        // Predicated region
        $region37: #{tpu_custom_call.1} parent=31 // pred_check
          %p187 = pneg %p62
        $region38: #{tpu_custom_call.1} parent=31 // pred_check_branch
          %189 = sbr.rel (%p187) target = $region40
        $region39: #{tpu_custom_call.1} parent=31 // pred_region
          %190 = dma.done [#allocation6], 96
        $region40: #{tpu_custom_call.1} parent=31 // pred_fallthru
          _
        %s191 = sand.u32 %s28, 1
        %s192 = scalar_lea.sflag [#allocation4], %s191
        %s193 = sand.u32 %s28, 1
        %s194 = smul.addr %s193, 7536
        %s195 = scalar_lea.vmem [#allocation3], %s194
        %p196 = pneg %p41
        %p197 = pneg %p38
        %p198 = pneg %p62
        %p199 = pneg %p59
        %p200 = pneg %p83
        %p201 = pneg %p80
        %p202 = pneg %p109
        %p203 = pneg %p106
        %s204 = sand.u32 %s96, 1
        %s205 = sand.u32 %s96, 1
        %s206 = smul.addr %s205, 1256
        %s207 = scalar_lea.vmem [#allocation7], %s206
        %s208 = smul.u32 157, %s20
        %s209 = ssub.s32 313, %s208
        %p210 = scmp.lt.s32.totalorder %s209, 157
        %s211 = scalar_select %p210, %s209, 157
        %s212 = smul.u32 128, %s211
        %s213 = smul.u32 %s212, 6
        %s214 = smul.u32 157, %s20
        %s215 = ssub.s32 313, %s214
        %p216 = scmp.lt.s32.totalorder %s215, 157
        %s217 = scalar_select %p216, %s215, 157
        %s218 = smul.u32 128, %s217
        %v219 = vld [vmem:[%s182] sm:$0xff]
        %v220 = vld [vmem:[%s182 + $0x8] sm:$0xff]
        %v221 = vld [vmem:[%s182 + $0x10] sm:$0xff]
        %v222 = vld [vmem:[%s182 + $0x18] sm:$0xff]
        %v223 = vld [vmem:[%s182 + $0x20] sm:$0xff]
        %v224 = vld [vmem:[%s182 + $0x28] sm:$0xff]
        %v225 = vld [vmem:[%s182 + $0x30] sm:$0xff]
        %v226 = vld [vmem:[%s182 + $0x38] sm:$0xff]
        %v227 = vld [vmem:[%s182 + $0x40] sm:$0xff]
        %v228 = vld [vmem:[%s182 + $0x48] sm:$0xff]
        %v229 = vld [vmem:[%s182 + $0x50] sm:$0xff]
        %v230 = vld [vmem:[%s182 + $0x58] sm:$0xff]
        %v231 = vld [vmem:[%s182 + $0x60] sm:$0xff]
        %v232 = vld [vmem:[%s182 + $0x68] sm:$0xff]
        %v233 = vld [vmem:[%s182 + $0x70] sm:$0xff]
        %v234 = vld [vmem:[%s182 + $0x78] sm:$0xff]
        %v235 = vld [vmem:[%s182 + $0x80] sm:$0xff]
        %v236 = vld [vmem:[%s182 + $0x88] sm:$0xff]
        %v237 = vld [vmem:[%s182 + $0x90] sm:$0xff]
        %v238 = vld [vmem:[%s182 + $0x98] sm:$0xff]
        %v239 = vld [vmem:[%s182 + $0xa0] sm:$0xff]
        %v240 = vld [vmem:[%s182 + $0xa8] sm:$0xff]
        %v241 = vld [vmem:[%s182 + $0xb0] sm:$0xff]
        %v242 = vld [vmem:[%s182 + $0xb8] sm:$0xff]
        %v243 = vld [vmem:[%s182 + $0xc0] sm:$0xff]
        %v244 = vld [vmem:[%s182 + $0xc8] sm:$0xff]
        %v245 = vld [vmem:[%s182 + $0xd0] sm:$0xff]
        %v246 = vld [vmem:[%s182 + $0xd8] sm:$0xff]
        %v247 = vld [vmem:[%s182 + $0xe0] sm:$0xff]
        %v248 = vld [vmem:[%s182 + $0xe8] sm:$0xff]
        %v249 = vld [vmem:[%s182 + $0xf0] sm:$0xff]
        %v250 = vld [vmem:[%s182 + $0xf8] sm:$0xff]
        %v251 = vld [vmem:[%s182 + $0x100] sm:$0xff]
        %v252 = vld [vmem:[%s182 + $0x108] sm:$0xff]
        %v253 = vld [vmem:[%s182 + $0x110] sm:$0xff]
        %v254 = vld [vmem:[%s182 + $0x118] sm:$0xff]
        %v255 = vld [vmem:[%s182 + $0x120] sm:$0xff]
        %v256 = vld [vmem:[%s182 + $0x128] sm:$0xff]
        %v257 = vld [vmem:[%s182 + $0x130] sm:$0xff]
        %v258 = vld [vmem:[%s182 + $0x138] sm:$0xff]
        %v259 = vld [vmem:[%s182 + $0x140] sm:$0xff]
        %v260 = vld [vmem:[%s182 + $0x148] sm:$0xff]
        %v261 = vld [vmem:[%s182 + $0x150] sm:$0xff]
        %v262 = vld [vmem:[%s182 + $0x158] sm:$0xff]
        %v263 = vld [vmem:[%s182 + $0x160] sm:$0xff]
        %v264 = vld [vmem:[%s182 + $0x168] sm:$0xff]
        %v265 = vld [vmem:[%s182 + $0x170] sm:$0xff]
        %v266 = vld [vmem:[%s182 + $0x178] sm:$0xff]
        %v267 = vld [vmem:[%s182 + $0x180] sm:$0xff]
        %v268 = vld [vmem:[%s182 + $0x188] sm:$0xff]
        %v269 = vld [vmem:[%s182 + $0x190] sm:$0xff]
        %v270 = vld [vmem:[%s182 + $0x198] sm:$0xff]
        %v271 = vld [vmem:[%s182 + $0x1a0] sm:$0xff]
        %v272 = vld [vmem:[%s182 + $0x1a8] sm:$0xff]
        %v273 = vld [vmem:[%s182 + $0x1b0] sm:$0xff]
        %v274 = vld [vmem:[%s182 + $0x1b8] sm:$0xff]
        %v275 = vld [vmem:[%s182 + $0x1c0] sm:$0xff]
        %v276 = vld [vmem:[%s182 + $0x1c8] sm:$0xff]
        %v277 = vld [vmem:[%s182 + $0x1d0] sm:$0xff]
        %v278 = vld [vmem:[%s182 + $0x1d8] sm:$0xff]
        %v279 = vld [vmem:[%s182 + $0x1e0] sm:$0xff]
        %v280 = vld [vmem:[%s182 + $0x1e8] sm:$0xff]
        %v281 = vld [vmem:[%s182 + $0x1f0] sm:$0xff]
        %v282 = vld [vmem:[%s182 + $0x1f8] sm:$0xff]
        %v283 = vld [vmem:[%s182 + $0x200] sm:$0xff]
        %v284 = vld [vmem:[%s182 + $0x208] sm:$0xff]
        %v285 = vld [vmem:[%s182 + $0x210] sm:$0xff]
        %v286 = vld [vmem:[%s182 + $0x218] sm:$0xff]
        %v287 = vld [vmem:[%s182 + $0x220] sm:$0xff]
        %v288 = vld [vmem:[%s182 + $0x228] sm:$0xff]
        %v289 = vld [vmem:[%s182 + $0x230] sm:$0xff]
        %v290 = vld [vmem:[%s182 + $0x238] sm:$0xff]
        %v291 = vld [vmem:[%s182 + $0x240] sm:$0xff]
        %v292 = vld [vmem:[%s182 + $0x248] sm:$0xff]
        %v293 = vld [vmem:[%s182 + $0x250] sm:$0xff]
        %v294 = vld [vmem:[%s182 + $0x258] sm:$0xff]
        %v295 = vld [vmem:[%s182 + $0x260] sm:$0xff]
        %v296 = vld [vmem:[%s182 + $0x268] sm:$0xff]
        %v297 = vld [vmem:[%s182 + $0x270] sm:$0xff]
        %v298 = vld [vmem:[%s182 + $0x278] sm:$0xff]
        %v299 = vld [vmem:[%s182 + $0x280] sm:$0xff]
        %v300 = vld [vmem:[%s182 + $0x288] sm:$0xff]
        %v301 = vld [vmem:[%s182 + $0x290] sm:$0xff]
        %v302 = vld [vmem:[%s182 + $0x298] sm:$0xff]
        %v303 = vld [vmem:[%s182 + $0x2a0] sm:$0xff]
        %v304 = vld [vmem:[%s182 + $0x2a8] sm:$0xff]
        %v305 = vld [vmem:[%s182 + $0x2b0] sm:$0xff]
        %v306 = vld [vmem:[%s182 + $0x2b8] sm:$0xff]
        %v307 = vld [vmem:[%s182 + $0x2c0] sm:$0xff]
        %v308 = vld [vmem:[%s182 + $0x2c8] sm:$0xff]
        %v309 = vld [vmem:[%s182 + $0x2d0] sm:$0xff]
        %v310 = vld [vmem:[%s182 + $0x2d8] sm:$0xff]
        %v311 = vld [vmem:[%s182 + $0x2e0] sm:$0xff]
        %v312 = vld [vmem:[%s182 + $0x2e8] sm:$0xff]
        %v313 = vld [vmem:[%s182 + $0x2f0] sm:$0xff]
        %v314 = vld [vmem:[%s182 + $0x2f8] sm:$0xff]
        %v315 = vld [vmem:[%s182 + $0x300] sm:$0xff]
        %v316 = vld [vmem:[%s182 + $0x308] sm:$0xff]
        %v317 = vld [vmem:[%s182 + $0x310] sm:$0xff]
        %v318 = vld [vmem:[%s182 + $0x318] sm:$0xff]
        %v319 = vld [vmem:[%s182 + $0x320] sm:$0xff]
        %v320 = vld [vmem:[%s182 + $0x328] sm:$0xff]
        %v321 = vld [vmem:[%s182 + $0x330] sm:$0xff]
        %v322 = vld [vmem:[%s182 + $0x338] sm:$0xff]
        %v323 = vld [vmem:[%s182 + $0x340] sm:$0xff]
        %v324 = vld [vmem:[%s182 + $0x348] sm:$0xff]
        %v325 = vld [vmem:[%s182 + $0x350] sm:$0xff]
        %v326 = vld [vmem:[%s182 + $0x358] sm:$0xff]
        %v327 = vld [vmem:[%s182 + $0x360] sm:$0xff]
        %v328 = vld [vmem:[%s182 + $0x368] sm:$0xff]
        %v329 = vld [vmem:[%s182 + $0x370] sm:$0xff]
        %v330 = vld [vmem:[%s182 + $0x378] sm:$0xff]
        %v331 = vld [vmem:[%s182 + $0x380] sm:$0xff]
        %v332 = vld [vmem:[%s182 + $0x388] sm:$0xff]
        %v333 = vld [vmem:[%s182 + $0x390] sm:$0xff]
        %v334 = vld [vmem:[%s182 + $0x398] sm:$0xff]
        %v335 = vld [vmem:[%s182 + $0x3a0] sm:$0xff]
        %v336 = vld [vmem:[%s182 + $0x3a8] sm:$0xff]
        %v337 = vld [vmem:[%s182 + $0x3b0] sm:$0xff]
        %v338 = vld [vmem:[%s182 + $0x3b8] sm:$0xff]
        %v339 = vld [vmem:[%s182 + $0x3c0] sm:$0xff]
        %v340 = vld [vmem:[%s182 + $0x3c8] sm:$0xff]
        %v341 = vld [vmem:[%s182 + $0x3d0] sm:$0xff]
        %v342 = vld [vmem:[%s182 + $0x3d8] sm:$0xff]
        %v343 = vld [vmem:[%s182 + $0x3e0] sm:$0xff]
        %v344 = vld [vmem:[%s182 + $0x3e8] sm:$0xff]
        %v345 = vld [vmem:[%s182 + $0x3f0] sm:$0xff]
        %v346 = vld [vmem:[%s182 + $0x3f8] sm:$0xff]
        %v347 = vld [vmem:[%s182 + $0x400] sm:$0xff]
        %v348 = vld [vmem:[%s182 + $0x408] sm:$0xff]
        %v349 = vld [vmem:[%s182 + $0x410] sm:$0xff]
        %v350 = vld [vmem:[%s182 + $0x418] sm:$0xff]
        %v351 = vld [vmem:[%s182 + $0x420] sm:$0xff]
        %v352 = vld [vmem:[%s182 + $0x428] sm:$0xff]
        %v353 = vld [vmem:[%s182 + $0x430] sm:$0xff]
        %v354 = vld [vmem:[%s182 + $0x438] sm:$0xff]
        %v355 = vld [vmem:[%s182 + $0x440] sm:$0xff]
        %v356 = vld [vmem:[%s182 + $0x448] sm:$0xff]
        %v357 = vld [vmem:[%s182 + $0x450] sm:$0xff]
        %v358 = vld [vmem:[%s182 + $0x458] sm:$0xff]
        %v359 = vld [vmem:[%s182 + $0x460] sm:$0xff]
        %v360 = vld [vmem:[%s182 + $0x468] sm:$0xff]
        %v361 = vld [vmem:[%s182 + $0x470] sm:$0xff]
        %v362 = vld [vmem:[%s182 + $0x478] sm:$0xff]
        %v363 = vld [vmem:[%s182 + $0x480] sm:$0xff]
        %v364 = vld [vmem:[%s182 + $0x488] sm:$0xff]
        %v365 = vld [vmem:[%s182 + $0x490] sm:$0xff]
        %v366 = vld [vmem:[%s182 + $0x498] sm:$0xff]
        %v367 = vld [vmem:[%s182 + $0x4a0] sm:$0xff]
        %v368 = vld [vmem:[%s182 + $0x4a8] sm:$0xff]
        %v369 = vld [vmem:[%s182 + $0x4b0] sm:$0xff]
        %v370 = vld [vmem:[%s182 + $0x4b8] sm:$0xff]
        %v371 = vld [vmem:[%s182 + $0x4c0] sm:$0xff]
        %v372 = vld [vmem:[%s182 + $0x4c8] sm:$0xff]
        %v373 = vld [vmem:[%s182 + $0x4d0] sm:$0xff]
        %v374 = vld [vmem:[%s182 + $0x4d8] sm:$0xff]
        %v375 = vld [vmem:[%s182 + $0x4e0] sm:$0xff]
        %v376 = vld [vmem:[%s182 + $0x4e8] sm:$0xff]
        %v377 = vld [vmem:[%s182 + $0x4f0] sm:$0xff]
        %v378 = vld [vmem:[%s182 + $0x4f8] sm:$0xff]
        %v379 = vld [vmem:[%s182 + $0x500] sm:$0xff]
        %v380 = vld [vmem:[%s182 + $0x508] sm:$0xff]
        %v381 = vld [vmem:[%s182 + $0x510] sm:$0xff]
        %v382 = vld [vmem:[%s182 + $0x518] sm:$0xff]
        %v383 = vld [vmem:[%s182 + $0x520] sm:$0xff]
        %v384 = vld [vmem:[%s182 + $0x528] sm:$0xff]
        %v385 = vld [vmem:[%s182 + $0x530] sm:$0xff]
        %v386 = vld [vmem:[%s182 + $0x538] sm:$0xff]
        %v387 = vld [vmem:[%s182 + $0x540] sm:$0xff]
        %v388 = vld [vmem:[%s182 + $0x548] sm:$0xff]
        %v389 = vld [vmem:[%s182 + $0x550] sm:$0xff]
        %v390 = vld [vmem:[%s182 + $0x558] sm:$0xff]
        %v391 = vld [vmem:[%s182 + $0x560] sm:$0xff]
        %v392 = vld [vmem:[%s182 + $0x568] sm:$0xff]
        %v393 = vld [vmem:[%s182 + $0x570] sm:$0xff]
        %v394 = vld [vmem:[%s182 + $0x578] sm:$0xff]
        %v395 = vld [vmem:[%s182 + $0x580] sm:$0xff]
        %v396 = vld [vmem:[%s182 + $0x588] sm:$0xff]
        %v397 = vld [vmem:[%s182 + $0x590] sm:$0xff]
        %v398 = vld [vmem:[%s182 + $0x598] sm:$0xff]
        %v399 = vld [vmem:[%s182 + $0x5a0] sm:$0xff]
        %v400 = vld [vmem:[%s182 + $0x5a8] sm:$0xff]
        %v401 = vld [vmem:[%s182 + $0x5b0] sm:$0xff]
        %v402 = vld [vmem:[%s182 + $0x5b8] sm:$0xff]
        %v403 = vld [vmem:[%s182 + $0x5c0] sm:$0xff]
        %v404 = vld [vmem:[%s182 + $0x5c8] sm:$0xff]
        %v405 = vld [vmem:[%s182 + $0x5d0] sm:$0xff]
        %v406 = vld [vmem:[%s182 + $0x5d8] sm:$0xff]
        %v407 = vld [vmem:[%s182 + $0x5e0] sm:$0xff]
        %v408 = vld [vmem:[%s182 + $0x5e8] sm:$0xff]
        %v409 = vld [vmem:[%s182 + $0x5f0] sm:$0xff]
        %v410 = vld [vmem:[%s182 + $0x5f8] sm:$0xff]
        %v411 = vld [vmem:[%s182 + $0x600] sm:$0xff]
        %v412 = vld [vmem:[%s182 + $0x608] sm:$0xff]
        %v413 = vld [vmem:[%s182 + $0x610] sm:$0xff]
        %v414 = vld [vmem:[%s182 + $0x618] sm:$0xff]
        %v415 = vld [vmem:[%s182 + $0x620] sm:$0xff]
        %v416 = vld [vmem:[%s182 + $0x628] sm:$0xff]
        %v417 = vld [vmem:[%s182 + $0x630] sm:$0xff]
        %v418 = vld [vmem:[%s182 + $0x638] sm:$0xff]
        %v419 = vld [vmem:[%s182 + $0x640] sm:$0xff]
        %v420 = vld [vmem:[%s182 + $0x648] sm:$0xff]
        %v421 = vld [vmem:[%s182 + $0x650] sm:$0xff]
        %v422 = vld [vmem:[%s182 + $0x658] sm:$0xff]
        %v423 = vld [vmem:[%s182 + $0x660] sm:$0xff]
        %v424 = vld [vmem:[%s182 + $0x668] sm:$0xff]
        %v425 = vld [vmem:[%s182 + $0x670] sm:$0xff]
        %v426 = vld [vmem:[%s182 + $0x678] sm:$0xff]
        %v427 = vld [vmem:[%s182 + $0x680] sm:$0xff]
        %v428 = vld [vmem:[%s182 + $0x688] sm:$0xff]
        %v429 = vld [vmem:[%s182 + $0x690] sm:$0xff]
        %v430 = vld [vmem:[%s182 + $0x698] sm:$0xff]
        %v431 = vld [vmem:[%s182 + $0x6a0] sm:$0xff]
        %v432 = vld [vmem:[%s182 + $0x6a8] sm:$0xff]
        %v433 = vld [vmem:[%s182 + $0x6b0] sm:$0xff]
        %v434 = vld [vmem:[%s182 + $0x6b8] sm:$0xff]
        %v435 = vld [vmem:[%s182 + $0x6c0] sm:$0xff]
        %v436 = vld [vmem:[%s182 + $0x6c8] sm:$0xff]
        %v437 = vld [vmem:[%s182 + $0x6d0] sm:$0xff]
        %v438 = vld [vmem:[%s182 + $0x6d8] sm:$0xff]
        %v439 = vld [vmem:[%s182 + $0x6e0] sm:$0xff]
        %v440 = vld [vmem:[%s182 + $0x6e8] sm:$0xff]
        %v441 = vld [vmem:[%s182 + $0x6f0] sm:$0xff]
        %v442 = vld [vmem:[%s182 + $0x6f8] sm:$0xff]
        %v443 = vld [vmem:[%s182 + $0x700] sm:$0xff]
        %v444 = vld [vmem:[%s182 + $0x708] sm:$0xff]
        %v445 = vld [vmem:[%s182 + $0x710] sm:$0xff]
        %v446 = vld [vmem:[%s182 + $0x718] sm:$0xff]
        %v447 = vld [vmem:[%s182 + $0x720] sm:$0xff]
        %v448 = vld [vmem:[%s182 + $0x728] sm:$0xff]
        %v449 = vld [vmem:[%s182 + $0x730] sm:$0xff]
        %v450 = vld [vmem:[%s182 + $0x738] sm:$0xff]
        %v451 = vld [vmem:[%s182 + $0x740] sm:$0xff]
        %v452 = vld [vmem:[%s182 + $0x748] sm:$0xff]
        %v453 = vld [vmem:[%s182 + $0x750] sm:$0xff]
        %v454 = vld [vmem:[%s182 + $0x758] sm:$0xff]
        %v455 = vld [vmem:[%s182 + $0x760] sm:$0xff]
        %v456 = vld [vmem:[%s182 + $0x768] sm:$0xff]
        %v457 = vld [vmem:[%s182 + $0x770] sm:$0xff]
        %v458 = vld [vmem:[%s182 + $0x778] sm:$0xff]
        %v459 = vld [vmem:[%s182 + $0x780] sm:$0xff]
        %v460 = vld [vmem:[%s182 + $0x788] sm:$0xff]
        %v461 = vld [vmem:[%s182 + $0x790] sm:$0xff]
        %v462 = vld [vmem:[%s182 + $0x798] sm:$0xff]
        %v463 = vld [vmem:[%s182 + $0x7a0] sm:$0xff]
        %v464 = vld [vmem:[%s182 + $0x7a8] sm:$0xff]
        %v465 = vld [vmem:[%s182 + $0x7b0] sm:$0xff]
        %v466 = vld [vmem:[%s182 + $0x7b8] sm:$0xff]
        %v467 = vld [vmem:[%s182 + $0x7c0] sm:$0xff]
        %v468 = vld [vmem:[%s182 + $0x7c8] sm:$0xff]
        %v469 = vld [vmem:[%s182 + $0x7d0] sm:$0xff]
        %v470 = vld [vmem:[%s182 + $0x7d8] sm:$0xff]
        %v471 = vld [vmem:[%s182 + $0x7e0] sm:$0xff]
        %v472 = vld [vmem:[%s182 + $0x7e8] sm:$0xff]
        %v473 = vld [vmem:[%s182 + $0x7f0] sm:$0xff]
        %v474 = vld [vmem:[%s182 + $0x7f8] sm:$0xff]
        %v475 = vld [vmem:[%s182 + $0x800] sm:$0xff]
        %v476 = vld [vmem:[%s182 + $0x808] sm:$0xff]
        %v477 = vld [vmem:[%s182 + $0x810] sm:$0xff]
        %v478 = vld [vmem:[%s182 + $0x818] sm:$0xff]
        %v479 = vld [vmem:[%s182 + $0x820] sm:$0xff]
        %v480 = vld [vmem:[%s182 + $0x828] sm:$0xff]
        %v481 = vld [vmem:[%s182 + $0x830] sm:$0xff]
        %v482 = vld [vmem:[%s182 + $0x838] sm:$0xff]
        %v483 = vld [vmem:[%s182 + $0x840] sm:$0xff]
        %v484 = vld [vmem:[%s182 + $0x848] sm:$0xff]
        %v485 = vld [vmem:[%s182 + $0x850] sm:$0xff]
        %v486 = vld [vmem:[%s182 + $0x858] sm:$0xff]
        %v487 = vld [vmem:[%s182 + $0x860] sm:$0xff]
        %v488 = vld [vmem:[%s182 + $0x868] sm:$0xff]
        %v489 = vld [vmem:[%s182 + $0x870] sm:$0xff]
        %v490 = vld [vmem:[%s182 + $0x878] sm:$0xff]
        %v491 = vld [vmem:[%s182 + $0x880] sm:$0xff]
        %v492 = vld [vmem:[%s182 + $0x888] sm:$0xff]
        %v493 = vld [vmem:[%s182 + $0x890] sm:$0xff]
        %v494 = vld [vmem:[%s182 + $0x898] sm:$0xff]
        %v495 = vld [vmem:[%s182 + $0x8a0] sm:$0xff]
        %v496 = vld [vmem:[%s182 + $0x8a8] sm:$0xff]
        %v497 = vld [vmem:[%s182 + $0x8b0] sm:$0xff]
        %v498 = vld [vmem:[%s182 + $0x8b8] sm:$0xff]
        %v499 = vld [vmem:[%s182 + $0x8c0] sm:$0xff]
        %v500 = vld [vmem:[%s182 + $0x8c8] sm:$0xff]
        %v501 = vld [vmem:[%s182 + $0x8d0] sm:$0xff]
        %v502 = vld [vmem:[%s182 + $0x8d8] sm:$0xff]
        %v503 = vld [vmem:[%s182 + $0x8e0] sm:$0xff]
        %v504 = vld [vmem:[%s182 + $0x8e8] sm:$0xff]
        %v505 = vld [vmem:[%s182 + $0x8f0] sm:$0xff]
        %v506 = vld [vmem:[%s182 + $0x8f8] sm:$0xff]
        %v507 = vld [vmem:[%s182 + $0x900] sm:$0xff]
        %v508 = vld [vmem:[%s182 + $0x908] sm:$0xff]
        %v509 = vld [vmem:[%s182 + $0x910] sm:$0xff]
        %v510 = vld [vmem:[%s182 + $0x918] sm:$0xff]
        %v511 = vld [vmem:[%s182 + $0x920] sm:$0xff]
        %v512 = vld [vmem:[%s182 + $0x928] sm:$0xff]
        %v513 = vld [vmem:[%s182 + $0x930] sm:$0xff]
        %v514 = vld [vmem:[%s182 + $0x938] sm:$0xff]
        %v515 = vld [vmem:[%s182 + $0x940] sm:$0xff]
        %v516 = vld [vmem:[%s182 + $0x948] sm:$0xff]
        %v517 = vld [vmem:[%s182 + $0x950] sm:$0xff]
        %v518 = vld [vmem:[%s182 + $0x958] sm:$0xff]
        %v519 = vld [vmem:[%s182 + $0x960] sm:$0xff]
        %v520 = vld [vmem:[%s182 + $0x968] sm:$0xff]
        %v521 = vld [vmem:[%s182 + $0x970] sm:$0xff]
        %v522 = vld [vmem:[%s182 + $0x978] sm:$0xff]
        %v523 = vld [vmem:[%s182 + $0x980] sm:$0xff]
        %v524 = vld [vmem:[%s182 + $0x988] sm:$0xff]
        %v525 = vld [vmem:[%s182 + $0x990] sm:$0xff]
        %v526 = vld [vmem:[%s182 + $0x998] sm:$0xff]
        %v527 = vld [vmem:[%s182 + $0x9a0] sm:$0xff]
        %v528 = vld [vmem:[%s182 + $0x9a8] sm:$0xff]
        %v529 = vld [vmem:[%s182 + $0x9b0] sm:$0xff]
        %v530 = vld [vmem:[%s182 + $0x9b8] sm:$0xff]
        %v531 = vld [vmem:[%s182 + $0x9c0] sm:$0xff]
        %v532 = vld [vmem:[%s182 + $0x9c8] sm:$0xff]
        %v533 = vld [vmem:[%s182 + $0x9d0] sm:$0xff]
        %v534 = vld [vmem:[%s182 + $0x9d8] sm:$0xff]
        %v535 = vld [vmem:[%s182 + $0x9e0] sm:$0xff]
        %v536 = vld [vmem:[%s182 + $0x9e8] sm:$0xff]
        %v537 = vld [vmem:[%s182 + $0x9f0] sm:$0xff]
        %v538 = vld [vmem:[%s182 + $0x9f8] sm:$0xff]
        %v539 = vld [vmem:[%s182 + $0xa00] sm:$0xff]
        %v540 = vld [vmem:[%s182 + $0xa08] sm:$0xff]
        %v541 = vld [vmem:[%s182 + $0xa10] sm:$0xff]
        %v542 = vld [vmem:[%s182 + $0xa18] sm:$0xff]
        %v543 = vld [vmem:[%s182 + $0xa20] sm:$0xff]
        %v544 = vld [vmem:[%s182 + $0xa28] sm:$0xff]
        %v545 = vld [vmem:[%s182 + $0xa30] sm:$0xff]
        %v546 = vld [vmem:[%s182 + $0xa38] sm:$0xff]
        %v547 = vld [vmem:[%s182 + $0xa40] sm:$0xff]
        %v548 = vld [vmem:[%s182 + $0xa48] sm:$0xff]
        %v549 = vld [vmem:[%s182 + $0xa50] sm:$0xff]
        %v550 = vld [vmem:[%s182 + $0xa58] sm:$0xff]
        %v551 = vld [vmem:[%s182 + $0xa60] sm:$0xff]
        %v552 = vld [vmem:[%s182 + $0xa68] sm:$0xff]
        %v553 = vld [vmem:[%s182 + $0xa70] sm:$0xff]
        %v554 = vld [vmem:[%s182 + $0xa78] sm:$0xff]
        %v555 = vld [vmem:[%s182 + $0xa80] sm:$0xff]
        %v556 = vld [vmem:[%s182 + $0xa88] sm:$0xff]
        %v557 = vld [vmem:[%s182 + $0xa90] sm:$0xff]
        %v558 = vld [vmem:[%s182 + $0xa98] sm:$0xff]
        %v559 = vld [vmem:[%s182 + $0xaa0] sm:$0xff]
        %v560 = vld [vmem:[%s182 + $0xaa8] sm:$0xff]
        %v561 = vld [vmem:[%s182 + $0xab0] sm:$0xff]
        %v562 = vld [vmem:[%s182 + $0xab8] sm:$0xff]
        %v563 = vld [vmem:[%s182 + $0xac0] sm:$0xff]
        %v564 = vld [vmem:[%s182 + $0xac8] sm:$0xff]
        %v565 = vld [vmem:[%s182 + $0xad0] sm:$0xff]
        %v566 = vld [vmem:[%s182 + $0xad8] sm:$0xff]
        %v567 = vld [vmem:[%s182 + $0xae0] sm:$0xff]
        %v568 = vld [vmem:[%s182 + $0xae8] sm:$0xff]
        %v569 = vld [vmem:[%s182 + $0xaf0] sm:$0xff]
        %v570 = vld [vmem:[%s182 + $0xaf8] sm:$0xff]
        %v571 = vld [vmem:[%s182 + $0xb00] sm:$0xff]
        %v572 = vld [vmem:[%s182 + $0xb08] sm:$0xff]
        %v573 = vld [vmem:[%s182 + $0xb10] sm:$0xff]
        %v574 = vld [vmem:[%s182 + $0xb18] sm:$0xff]
        %v575 = vld [vmem:[%s182 + $0xb20] sm:$0xff]
        %v576 = vld [vmem:[%s182 + $0xb28] sm:$0xff]
        %v577 = vld [vmem:[%s182 + $0xb30] sm:$0xff]
        %v578 = vld [vmem:[%s182 + $0xb38] sm:$0xff]
        %v579 = vld [vmem:[%s182 + $0xb40] sm:$0xff]
        %v580 = vld [vmem:[%s182 + $0xb48] sm:$0xff]
        %v581 = vld [vmem:[%s182 + $0xb50] sm:$0xff]
        %v582 = vld [vmem:[%s182 + $0xb58] sm:$0xff]
        %v583 = vld [vmem:[%s182 + $0xb60] sm:$0xff]
        %v584 = vld [vmem:[%s182 + $0xb68] sm:$0xff]
        %v585 = vld [vmem:[%s182 + $0xb70] sm:$0xff]
        %v586 = vld [vmem:[%s182 + $0xb78] sm:$0xff]
        %v587 = vld [vmem:[%s182 + $0xb80] sm:$0xff]
        %v588 = vld [vmem:[%s182 + $0xb88] sm:$0xff]
        %v589 = vld [vmem:[%s182 + $0xb90] sm:$0xff]
        %v590 = vld [vmem:[%s182 + $0xb98] sm:$0xff]
        %v591 = vld [vmem:[%s182 + $0xba0] sm:$0xff]
        %v592 = vld [vmem:[%s182 + $0xba8] sm:$0xff]
        %v593 = vld [vmem:[%s182 + $0xbb0] sm:$0xff]
        %v594 = vld [vmem:[%s182 + $0xbb8] sm:$0xff]
        %v595 = vld [vmem:[%s182 + $0xbc0] sm:$0xff]
        %v596 = vld [vmem:[%s182 + $0xbc8] sm:$0xff]
        %v597 = vld [vmem:[%s182 + $0xbd0] sm:$0xff]
        %v598 = vld [vmem:[%s182 + $0xbd8] sm:$0xff]
        %v599 = vld [vmem:[%s182 + $0xbe0] sm:$0xff]
        %v600 = vld [vmem:[%s182 + $0xbe8] sm:$0xff]
        %v601 = vld [vmem:[%s182 + $0xbf0] sm:$0xff]
        %v602 = vld [vmem:[%s182 + $0xbf8] sm:$0xff]
        %v603 = vld [vmem:[%s182 + $0xc00] sm:$0xff]
        %v604 = vld [vmem:[%s182 + $0xc08] sm:$0xff]
        %v605 = vld [vmem:[%s182 + $0xc10] sm:$0xff]
        %v606 = vld [vmem:[%s182 + $0xc18] sm:$0xff]
        %v607 = vld [vmem:[%s182 + $0xc20] sm:$0xff]
        %v608 = vld [vmem:[%s182 + $0xc28] sm:$0xff]
        %v609 = vld [vmem:[%s182 + $0xc30] sm:$0xff]
        %v610 = vld [vmem:[%s182 + $0xc38] sm:$0xff]
        %v611 = vld [vmem:[%s182 + $0xc40] sm:$0xff]
        %v612 = vld [vmem:[%s182 + $0xc48] sm:$0xff]
        %v613 = vld [vmem:[%s182 + $0xc50] sm:$0xff]
        %v614 = vld [vmem:[%s182 + $0xc58] sm:$0xff]
        %v615 = vld [vmem:[%s182 + $0xc60] sm:$0xff]
        %v616 = vld [vmem:[%s182 + $0xc68] sm:$0xff]
        %v617 = vld [vmem:[%s182 + $0xc70] sm:$0xff]
        %v618 = vld [vmem:[%s182 + $0xc78] sm:$0xff]
        %v619 = vld [vmem:[%s182 + $0xc80] sm:$0xff]
        %v620 = vld [vmem:[%s182 + $0xc88] sm:$0xff]
        %v621 = vld [vmem:[%s182 + $0xc90] sm:$0xff]
        %v622 = vld [vmem:[%s182 + $0xc98] sm:$0xff]
        %v623 = vld [vmem:[%s182 + $0xca0] sm:$0xff]
        %v624 = vld [vmem:[%s182 + $0xca8] sm:$0xff]
        %v625 = vld [vmem:[%s182 + $0xcb0] sm:$0xff]
        %v626 = vld [vmem:[%s182 + $0xcb8] sm:$0xff]
        %v627 = vld [vmem:[%s182 + $0xcc0] sm:$0xff]
        %v628 = vld [vmem:[%s182 + $0xcc8] sm:$0xff]
        %v629 = vld [vmem:[%s182 + $0xcd0] sm:$0xff]
        %v630 = vld [vmem:[%s182 + $0xcd8] sm:$0xff]
        %v631 = vld [vmem:[%s182 + $0xce0] sm:$0xff]
        %v632 = vld [vmem:[%s182 + $0xce8] sm:$0xff]
        %v633 = vld [vmem:[%s182 + $0xcf0] sm:$0xff]
        %v634 = vld [vmem:[%s182 + $0xcf8] sm:$0xff]
        %v635 = vld [vmem:[%s182 + $0xd00] sm:$0xff]
        %v636 = vld [vmem:[%s182 + $0xd08] sm:$0xff]
        %v637 = vld [vmem:[%s182 + $0xd10] sm:$0xff]
        %v638 = vld [vmem:[%s182 + $0xd18] sm:$0xff]
        %v639 = vld [vmem:[%s182 + $0xd20] sm:$0xff]
        %v640 = vld [vmem:[%s182 + $0xd28] sm:$0xff]
        %v641 = vld [vmem:[%s182 + $0xd30] sm:$0xff]
        %v642 = vld [vmem:[%s182 + $0xd38] sm:$0xff]
        %v643 = vld [vmem:[%s182 + $0xd40] sm:$0xff]
        %v644 = vld [vmem:[%s182 + $0xd48] sm:$0xff]
        %v645 = vld [vmem:[%s182 + $0xd50] sm:$0xff]
        %v646 = vld [vmem:[%s182 + $0xd58] sm:$0xff]
        %v647 = vld [vmem:[%s182 + $0xd60] sm:$0xff]
        %v648 = vld [vmem:[%s182 + $0xd68] sm:$0xff]
        %v649 = vld [vmem:[%s182 + $0xd70] sm:$0xff]
        %v650 = vld [vmem:[%s182 + $0xd78] sm:$0xff]
        %v651 = vld [vmem:[%s182 + $0xd80] sm:$0xff]
        %v652 = vld [vmem:[%s182 + $0xd88] sm:$0xff]
        %v653 = vld [vmem:[%s182 + $0xd90] sm:$0xff]
        %v654 = vld [vmem:[%s182 + $0xd98] sm:$0xff]
        %v655 = vld [vmem:[%s182 + $0xda0] sm:$0xff]
        %v656 = vld [vmem:[%s182 + $0xda8] sm:$0xff]
        %v657 = vld [vmem:[%s182 + $0xdb0] sm:$0xff]
        %v658 = vld [vmem:[%s182 + $0xdb8] sm:$0xff]
        %v659 = vld [vmem:[%s182 + $0xdc0] sm:$0xff]
        %v660 = vld [vmem:[%s182 + $0xdc8] sm:$0xff]
        %v661 = vld [vmem:[%s182 + $0xdd0] sm:$0xff]
        %v662 = vld [vmem:[%s182 + $0xdd8] sm:$0xff]
        %v663 = vld [vmem:[%s182 + $0xde0] sm:$0xff]
        %v664 = vld [vmem:[%s182 + $0xde8] sm:$0xff]
        %v665 = vld [vmem:[%s182 + $0xdf0] sm:$0xff]
        %v666 = vld [vmem:[%s182 + $0xdf8] sm:$0xff]
        %v667 = vld [vmem:[%s182 + $0xe00] sm:$0xff]
        %v668 = vld [vmem:[%s182 + $0xe08] sm:$0xff]
        %v669 = vld [vmem:[%s182 + $0xe10] sm:$0xff]
        %v670 = vld [vmem:[%s182 + $0xe18] sm:$0xff]
        %v671 = vld [vmem:[%s182 + $0xe20] sm:$0xff]
        %v672 = vld [vmem:[%s182 + $0xe28] sm:$0xff]
        %v673 = vld [vmem:[%s182 + $0xe30] sm:$0xff]
        %v674 = vld [vmem:[%s182 + $0xe38] sm:$0xff]
        %v675 = vld [vmem:[%s182 + $0xe40] sm:$0xff]
        %v676 = vld [vmem:[%s182 + $0xe48] sm:$0xff]
        %v677 = vld [vmem:[%s182 + $0xe50] sm:$0xff]
        %v678 = vld [vmem:[%s182 + $0xe58] sm:$0xff]
        %v679 = vld [vmem:[%s182 + $0xe60] sm:$0xff]
        %v680 = vld [vmem:[%s182 + $0xe68] sm:$0xff]
        %v681 = vld [vmem:[%s182 + $0xe70] sm:$0xff]
        %v682 = vld [vmem:[%s182 + $0xe78] sm:$0xff]
        %v683 = vld [vmem:[%s182 + $0xe80] sm:$0xff]
        %v684 = vld [vmem:[%s182 + $0xe88] sm:$0xff]
        %v685 = vld [vmem:[%s182 + $0xe90] sm:$0xff]
        %v686 = vld [vmem:[%s182 + $0xe98] sm:$0xff]
        %v687 = vld [vmem:[%s182 + $0xea0] sm:$0xff]
        %v688 = vld [vmem:[%s182 + $0xea8] sm:$0xff]
        %v689 = vld [vmem:[%s182 + $0xeb0] sm:$0xff]
        %v690 = vld [vmem:[%s182 + $0xeb8] sm:$0xff]
        %v691 = vld [vmem:[%s182 + $0xec0] sm:$0xff]
        %v692 = vld [vmem:[%s182 + $0xec8] sm:$0xff]
        %v693 = vld [vmem:[%s182 + $0xed0] sm:$0xff]
        %v694 = vld [vmem:[%s182 + $0xed8] sm:$0xff]
        %v695 = vld [vmem:[%s182 + $0xee0] sm:$0xff]
        %v696 = vld [vmem:[%s182 + $0xee8] sm:$0xff]
        %v697 = vld [vmem:[%s182 + $0xef0] sm:$0xff]
        %v698 = vld [vmem:[%s182 + $0xef8] sm:$0xff]
        %v699 = vld [vmem:[%s182 + $0xf00] sm:$0xff]
        %v700 = vld [vmem:[%s182 + $0xf08] sm:$0xff]
        %v701 = vld [vmem:[%s182 + $0xf10] sm:$0xff]
        %v702 = vld [vmem:[%s182 + $0xf18] sm:$0xff]
        %v703 = vld [vmem:[%s182 + $0xf20] sm:$0xff]
        %v704 = vld [vmem:[%s182 + $0xf28] sm:$0xff]
        %v705 = vld [vmem:[%s182 + $0xf30] sm:$0xff]
        %v706 = vld [vmem:[%s182 + $0xf38] sm:$0xff]
        %v707 = vld [vmem:[%s182 + $0xf40] sm:$0xff]
        %v708 = vld [vmem:[%s182 + $0xf48] sm:$0xff]
        %v709 = vld [vmem:[%s182 + $0xf50] sm:$0xff]
        %v710 = vld [vmem:[%s182 + $0xf58] sm:$0xff]
        %v711 = vld [vmem:[%s182 + $0xf60] sm:$0xff]
        %v712 = vld [vmem:[%s182 + $0xf68] sm:$0xff]
        %v713 = vld [vmem:[%s182 + $0xf70] sm:$0xff]
        %v714 = vld [vmem:[%s182 + $0xf78] sm:$0xff]
        %v715 = vld [vmem:[%s182 + $0xf80] sm:$0xff]
        %v716 = vld [vmem:[%s182 + $0xf88] sm:$0xff]
        %v717 = vld [vmem:[%s182 + $0xf90] sm:$0xff]
        %v718 = vld [vmem:[%s182 + $0xf98] sm:$0xff]
        %v719 = vld [vmem:[%s182 + $0xfa0] sm:$0xff]
        %v720 = vld [vmem:[%s182 + $0xfa8] sm:$0xff]
        %v721 = vld [vmem:[%s182 + $0xfb0] sm:$0xff]
        %v722 = vld [vmem:[%s182 + $0xfb8] sm:$0xff]
        %v723 = vld [vmem:[%s182 + $0xfc0] sm:$0xff]
        %v724 = vld [vmem:[%s182 + $0xfc8] sm:$0xff]
        %v725 = vld [vmem:[%s182 + $0xfd0] sm:$0xff]
        %v726 = vld [vmem:[%s182 + $0xfd8] sm:$0xff]
        %v727 = vld [vmem:[%s182 + $0xfe0] sm:$0xff]
        %v728 = vld [vmem:[%s182 + $0xfe8] sm:$0xff]
        %v729 = vld [vmem:[%s182 + $0xff0] sm:$0xff]
        %v730 = vld [vmem:[%s182 + $0xff8] sm:$0xff]
        %v731 = vld [vmem:[%s182 + $0x1000] sm:$0xff]
        %v732 = vld [vmem:[%s182 + $0x1008] sm:$0xff]
        %v733 = vld [vmem:[%s182 + $0x1010] sm:$0xff]
        %v734 = vld [vmem:[%s182 + $0x1018] sm:$0xff]
        %v735 = vld [vmem:[%s182 + $0x1020] sm:$0xff]
        %v736 = vld [vmem:[%s182 + $0x1028] sm:$0xff]
        %v737 = vld [vmem:[%s182 + $0x1030] sm:$0xff]
        %v738 = vld [vmem:[%s182 + $0x1038] sm:$0xff]
        %v739 = vld [vmem:[%s182 + $0x1040] sm:$0xff]
        %v740 = vld [vmem:[%s182 + $0x1048] sm:$0xff]
        %v741 = vld [vmem:[%s182 + $0x1050] sm:$0xff]
        %v742 = vld [vmem:[%s182 + $0x1058] sm:$0xff]
        %v743 = vld [vmem:[%s182 + $0x1060] sm:$0xff]
        %v744 = vld [vmem:[%s182 + $0x1068] sm:$0xff]
        %v745 = vld [vmem:[%s182 + $0x1070] sm:$0xff]
        %v746 = vld [vmem:[%s182 + $0x1078] sm:$0xff]
        %v747 = vld [vmem:[%s182 + $0x1080] sm:$0xff]
        %v748 = vld [vmem:[%s182 + $0x1088] sm:$0xff]
        %v749 = vld [vmem:[%s182 + $0x1090] sm:$0xff]
        %v750 = vld [vmem:[%s182 + $0x1098] sm:$0xff]
        %v751 = vld [vmem:[%s182 + $0x10a0] sm:$0xff]
        %v752 = vld [vmem:[%s182 + $0x10a8] sm:$0xff]
        %v753 = vld [vmem:[%s182 + $0x10b0] sm:$0xff]
        %v754 = vld [vmem:[%s182 + $0x10b8] sm:$0xff]
        %v755 = vld [vmem:[%s182 + $0x10c0] sm:$0xff]
        %v756 = vld [vmem:[%s182 + $0x10c8] sm:$0xff]
        %v757 = vld [vmem:[%s182 + $0x10d0] sm:$0xff]
        %v758 = vld [vmem:[%s182 + $0x10d8] sm:$0xff]
        %v759 = vld [vmem:[%s182 + $0x10e0] sm:$0xff]
        %v760 = vld [vmem:[%s182 + $0x10e8] sm:$0xff]
        %v761 = vld [vmem:[%s182 + $0x10f0] sm:$0xff]
        %v762 = vld [vmem:[%s182 + $0x10f8] sm:$0xff]
        %v763 = vld [vmem:[%s182 + $0x1100] sm:$0xff]
        %v764 = vld [vmem:[%s182 + $0x1108] sm:$0xff]
        %v765 = vld [vmem:[%s182 + $0x1110] sm:$0xff]
        %v766 = vld [vmem:[%s182 + $0x1118] sm:$0xff]
        %v767 = vld [vmem:[%s182 + $0x1120] sm:$0xff]
        %v768 = vld [vmem:[%s182 + $0x1128] sm:$0xff]
        %v769 = vld [vmem:[%s182 + $0x1130] sm:$0xff]
        %v770 = vld [vmem:[%s182 + $0x1138] sm:$0xff]
        %v771 = vld [vmem:[%s182 + $0x1140] sm:$0xff]
        %v772 = vld [vmem:[%s182 + $0x1148] sm:$0xff]
        %v773 = vld [vmem:[%s182 + $0x1150] sm:$0xff]
        %v774 = vld [vmem:[%s182 + $0x1158] sm:$0xff]
        %v775 = vld [vmem:[%s182 + $0x1160] sm:$0xff]
        %v776 = vld [vmem:[%s182 + $0x1168] sm:$0xff]
        %v777 = vld [vmem:[%s182 + $0x1170] sm:$0xff]
        %v778 = vld [vmem:[%s182 + $0x1178] sm:$0xff]
        %v779 = vld [vmem:[%s182 + $0x1180] sm:$0xff]
        %v780 = vld [vmem:[%s182 + $0x1188] sm:$0xff]
        %v781 = vld [vmem:[%s182 + $0x1190] sm:$0xff]
        %v782 = vld [vmem:[%s182 + $0x1198] sm:$0xff]
        %v783 = vld [vmem:[%s182 + $0x11a0] sm:$0xff]
        %v784 = vld [vmem:[%s182 + $0x11a8] sm:$0xff]
        %v785 = vld [vmem:[%s182 + $0x11b0] sm:$0xff]
        %v786 = vld [vmem:[%s182 + $0x11b8] sm:$0xff]
        %v787 = vld [vmem:[%s182 + $0x11c0] sm:$0xff]
        %v788 = vld [vmem:[%s182 + $0x11c8] sm:$0xff]
        %v789 = vld [vmem:[%s182 + $0x11d0] sm:$0xff]
        %v790 = vld [vmem:[%s182 + $0x11d8] sm:$0xff]
        %v791 = vld [vmem:[%s182 + $0x11e0] sm:$0xff]
        %v792 = vld [vmem:[%s182 + $0x11e8] sm:$0xff]
        %v793 = vld [vmem:[%s182 + $0x11f0] sm:$0xff]
        %v794 = vld [vmem:[%s182 + $0x11f8] sm:$0xff]
        %v795 = vld [vmem:[%s182 + $0x1200] sm:$0xff]
        %v796 = vld [vmem:[%s182 + $0x1208] sm:$0xff]
        %v797 = vld [vmem:[%s182 + $0x1210] sm:$0xff]
        %v798 = vld [vmem:[%s182 + $0x1218] sm:$0xff]
        %v799 = vld [vmem:[%s182 + $0x1220] sm:$0xff]
        %v800 = vld [vmem:[%s182 + $0x1228] sm:$0xff]
        %v801 = vld [vmem:[%s182 + $0x1230] sm:$0xff]
        %v802 = vld [vmem:[%s182 + $0x1238] sm:$0xff]
        %v803 = vld [vmem:[%s182 + $0x1240] sm:$0xff]
        %v804 = vld [vmem:[%s182 + $0x1248] sm:$0xff]
        %v805 = vld [vmem:[%s182 + $0x1250] sm:$0xff]
        %v806 = vld [vmem:[%s182 + $0x1258] sm:$0xff]
        %v807 = vld [vmem:[%s182 + $0x1260] sm:$0xff]
        %v808 = vld [vmem:[%s182 + $0x1268] sm:$0xff]
        %v809 = vld [vmem:[%s182 + $0x1270] sm:$0xff]
        %v810 = vld [vmem:[%s182 + $0x1278] sm:$0xff]
        %v811 = vld [vmem:[%s182 + $0x1280] sm:$0xff]
        %v812 = vld [vmem:[%s182 + $0x1288] sm:$0xff]
        %v813 = vld [vmem:[%s182 + $0x1290] sm:$0xff]
        %v814 = vld [vmem:[%s182 + $0x1298] sm:$0xff]
        %v815 = vld [vmem:[%s182 + $0x12a0] sm:$0xff]
        %v816 = vld [vmem:[%s182 + $0x12a8] sm:$0xff]
        %v817 = vld [vmem:[%s182 + $0x12b0] sm:$0xff]
        %v818 = vld [vmem:[%s182 + $0x12b8] sm:$0xff]
        %v819 = vld [vmem:[%s182 + $0x12c0] sm:$0xff]
        %v820 = vld [vmem:[%s182 + $0x12c8] sm:$0xff]
        %v821 = vld [vmem:[%s182 + $0x12d0] sm:$0xff]
        %v822 = vld [vmem:[%s182 + $0x12d8] sm:$0xff]
        %v823 = vld [vmem:[%s182 + $0x12e0] sm:$0xff]
        %v824 = vld [vmem:[%s182 + $0x12e8] sm:$0xff]
        %v825 = vld [vmem:[%s182 + $0x12f0] sm:$0xff]
        %v826 = vld [vmem:[%s182 + $0x12f8] sm:$0xff]
        %v827 = vld [vmem:[%s182 + $0x1300] sm:$0xff]
        %v828 = vld [vmem:[%s182 + $0x1308] sm:$0xff]
        %v829 = vld [vmem:[%s182 + $0x1310] sm:$0xff]
        %v830 = vld [vmem:[%s182 + $0x1318] sm:$0xff]
        %v831 = vld [vmem:[%s182 + $0x1320] sm:$0xff]
        %v832 = vld [vmem:[%s182 + $0x1328] sm:$0xff]
        %v833 = vld [vmem:[%s182 + $0x1330] sm:$0xff]
        %v834 = vld [vmem:[%s182 + $0x1338] sm:$0xff]
        %v835 = vld [vmem:[%s182 + $0x1340] sm:$0xff]
        %v836 = vld [vmem:[%s182 + $0x1348] sm:$0xff]
        %v837 = vld [vmem:[%s182 + $0x1350] sm:$0xff]
        %v838 = vld [vmem:[%s182 + $0x1358] sm:$0xff]
        %v839 = vld [vmem:[%s182 + $0x1360] sm:$0xff]
        %v840 = vld [vmem:[%s182 + $0x1368] sm:$0xff]
        %v841 = vld [vmem:[%s182 + $0x1370] sm:$0xff]
        %v842 = vld [vmem:[%s182 + $0x1378] sm:$0xff]
        %v843 = vld [vmem:[%s182 + $0x1380] sm:$0xff]
        %v844 = vld [vmem:[%s182 + $0x1388] sm:$0xff]
        %v845 = vld [vmem:[%s182 + $0x1390] sm:$0xff]
        %v846 = vld [vmem:[%s182 + $0x1398] sm:$0xff]
        %v847 = vld [vmem:[%s182 + $0x13a0] sm:$0xff]
        %v848 = vld [vmem:[%s182 + $0x13a8] sm:$0xff]
        %v849 = vld [vmem:[%s182 + $0x13b0] sm:$0xff]
        %v850 = vld [vmem:[%s182 + $0x13b8] sm:$0xff]
        %v851 = vld [vmem:[%s182 + $0x13c0] sm:$0xff]
        %v852 = vld [vmem:[%s182 + $0x13c8] sm:$0xff]
        %v853 = vld [vmem:[%s182 + $0x13d0] sm:$0xff]
        %v854 = vld [vmem:[%s182 + $0x13d8] sm:$0xff]
        %v855 = vld [vmem:[%s182 + $0x13e0] sm:$0xff]
        %v856 = vld [vmem:[%s182 + $0x13e8] sm:$0xff]
        %v857 = vld [vmem:[%s182 + $0x13f0] sm:$0xff]
        %v858 = vld [vmem:[%s182 + $0x13f8] sm:$0xff]
        %v859 = vld [vmem:[%s182 + $0x1400] sm:$0xff]
        %v860 = vld [vmem:[%s182 + $0x1408] sm:$0xff]
        %v861 = vld [vmem:[%s182 + $0x1410] sm:$0xff]
        %v862 = vld [vmem:[%s182 + $0x1418] sm:$0xff]
        %v863 = vld [vmem:[%s182 + $0x1420] sm:$0xff]
        %v864 = vld [vmem:[%s182 + $0x1428] sm:$0xff]
        %v865 = vld [vmem:[%s182 + $0x1430] sm:$0xff]
        %v866 = vld [vmem:[%s182 + $0x1438] sm:$0xff]
        %v867 = vld [vmem:[%s182 + $0x1440] sm:$0xff]
        %v868 = vld [vmem:[%s182 + $0x1448] sm:$0xff]
        %v869 = vld [vmem:[%s182 + $0x1450] sm:$0xff]
        %v870 = vld [vmem:[%s182 + $0x1458] sm:$0xff]
        %v871 = vld [vmem:[%s182 + $0x1460] sm:$0xff]
        %v872 = vld [vmem:[%s182 + $0x1468] sm:$0xff]
        %v873 = vld [vmem:[%s182 + $0x1470] sm:$0xff]
        %v874 = vld [vmem:[%s182 + $0x1478] sm:$0xff]
        %v875 = vld [vmem:[%s182 + $0x1480] sm:$0xff]
        %v876 = vld [vmem:[%s182 + $0x1488] sm:$0xff]
        %v877 = vld [vmem:[%s182 + $0x1490] sm:$0xff]
        %v878 = vld [vmem:[%s182 + $0x1498] sm:$0xff]
        %v879 = vld [vmem:[%s182 + $0x14a0] sm:$0xff]
        %v880 = vld [vmem:[%s182 + $0x14a8] sm:$0xff]
        %v881 = vld [vmem:[%s182 + $0x14b0] sm:$0xff]
        %v882 = vld [vmem:[%s182 + $0x14b8] sm:$0xff]
        %v883 = vld [vmem:[%s182 + $0x14c0] sm:$0xff]
        %v884 = vld [vmem:[%s182 + $0x14c8] sm:$0xff]
        %v885 = vld [vmem:[%s182 + $0x14d0] sm:$0xff]
        %v886 = vld [vmem:[%s182 + $0x14d8] sm:$0xff]
        %v887 = vld [vmem:[%s182 + $0x14e0] sm:$0xff]
        %v888 = vld [vmem:[%s182 + $0x14e8] sm:$0xff]
        %v889 = vld [vmem:[%s182 + $0x14f0] sm:$0xff]
        %v890 = vld [vmem:[%s182 + $0x14f8] sm:$0xff]
        %v891 = vld [vmem:[%s182 + $0x1500] sm:$0xff]
        %v892 = vld [vmem:[%s182 + $0x1508] sm:$0xff]
        %v893 = vld [vmem:[%s182 + $0x1510] sm:$0xff]
        %v894 = vld [vmem:[%s182 + $0x1518] sm:$0xff]
        %v895 = vld [vmem:[%s182 + $0x1520] sm:$0xff]
        %v896 = vld [vmem:[%s182 + $0x1528] sm:$0xff]
        %v897 = vld [vmem:[%s182 + $0x1530] sm:$0xff]
        %v898 = vld [vmem:[%s182 + $0x1538] sm:$0xff]
        %v899 = vld [vmem:[%s182 + $0x1540] sm:$0xff]
        %v900 = vld [vmem:[%s182 + $0x1548] sm:$0xff]
        %v901 = vld [vmem:[%s182 + $0x1550] sm:$0xff]
        %v902 = vld [vmem:[%s182 + $0x1558] sm:$0xff]
        %v903 = vld [vmem:[%s182 + $0x1560] sm:$0xff]
        %v904 = vld [vmem:[%s182 + $0x1568] sm:$0xff]
        %v905 = vld [vmem:[%s182 + $0x1570] sm:$0xff]
        %v906 = vld [vmem:[%s182 + $0x1578] sm:$0xff]
        %v907 = vld [vmem:[%s182 + $0x1580] sm:$0xff]
        %v908 = vld [vmem:[%s182 + $0x1588] sm:$0xff]
        %v909 = vld [vmem:[%s182 + $0x1590] sm:$0xff]
        %v910 = vld [vmem:[%s182 + $0x1598] sm:$0xff]
        %v911 = vld [vmem:[%s182 + $0x15a0] sm:$0xff]
        %v912 = vld [vmem:[%s182 + $0x15a8] sm:$0xff]
        %v913 = vld [vmem:[%s182 + $0x15b0] sm:$0xff]
        %v914 = vld [vmem:[%s182 + $0x15b8] sm:$0xff]
        %v915 = vld [vmem:[%s182 + $0x15c0] sm:$0xff]
        %v916 = vld [vmem:[%s182 + $0x15c8] sm:$0xff]
        %v917 = vld [vmem:[%s182 + $0x15d0] sm:$0xff]
        %v918 = vld [vmem:[%s182 + $0x15d8] sm:$0xff]
        %v919 = vld [vmem:[%s182 + $0x15e0] sm:$0xff]
        %v920 = vld [vmem:[%s182 + $0x15e8] sm:$0xff]
        %v921 = vld [vmem:[%s182 + $0x15f0] sm:$0xff]
        %v922 = vld [vmem:[%s182 + $0x15f8] sm:$0xff]
        %v923 = vld [vmem:[%s182 + $0x1600] sm:$0xff]
        %v924 = vld [vmem:[%s182 + $0x1608] sm:$0xff]
        %v925 = vld [vmem:[%s182 + $0x1610] sm:$0xff]
        %v926 = vld [vmem:[%s182 + $0x1618] sm:$0xff]
        %v927 = vld [vmem:[%s182 + $0x1620] sm:$0xff]
        %v928 = vld [vmem:[%s182 + $0x1628] sm:$0xff]
        %v929 = vld [vmem:[%s182 + $0x1630] sm:$0xff]
        %v930 = vld [vmem:[%s182 + $0x1638] sm:$0xff]
        %v931 = vld [vmem:[%s182 + $0x1640] sm:$0xff]
        %v932 = vld [vmem:[%s182 + $0x1648] sm:$0xff]
        %v933 = vld [vmem:[%s182 + $0x1650] sm:$0xff]
        %v934 = vld [vmem:[%s182 + $0x1658] sm:$0xff]
        %v935 = vld [vmem:[%s182 + $0x1660] sm:$0xff]
        %v936 = vld [vmem:[%s182 + $0x1668] sm:$0xff]
        %v937 = vld [vmem:[%s182 + $0x1670] sm:$0xff]
        %v938 = vld [vmem:[%s182 + $0x1678] sm:$0xff]
        %v939 = vld [vmem:[%s182 + $0x1680] sm:$0xff]
        %v940 = vld [vmem:[%s182 + $0x1688] sm:$0xff]
        %v941 = vld [vmem:[%s182 + $0x1690] sm:$0xff]
        %v942 = vld [vmem:[%s182 + $0x1698] sm:$0xff]
        %v943 = vld [vmem:[%s182 + $0x16a0] sm:$0xff]
        %v944 = vld [vmem:[%s182 + $0x16a8] sm:$0xff]
        %v945 = vld [vmem:[%s182 + $0x16b0] sm:$0xff]
        %v946 = vld [vmem:[%s182 + $0x16b8] sm:$0xff]
        %v947 = vld [vmem:[%s182 + $0x16c0] sm:$0xff]
        %v948 = vld [vmem:[%s182 + $0x16c8] sm:$0xff]
        %v949 = vld [vmem:[%s182 + $0x16d0] sm:$0xff]
        %v950 = vld [vmem:[%s182 + $0x16d8] sm:$0xff]
        %v951 = vld [vmem:[%s182 + $0x16e0] sm:$0xff]
        %v952 = vld [vmem:[%s182 + $0x16e8] sm:$0xff]
        %v953 = vld [vmem:[%s182 + $0x16f0] sm:$0xff]
        %v954 = vld [vmem:[%s182 + $0x16f8] sm:$0xff]
        %v955 = vld [vmem:[%s182 + $0x1700] sm:$0xff]
        %v956 = vld [vmem:[%s182 + $0x1708] sm:$0xff]
        %v957 = vld [vmem:[%s182 + $0x1710] sm:$0xff]
        %v958 = vld [vmem:[%s182 + $0x1718] sm:$0xff]
        %v959 = vld [vmem:[%s182 + $0x1720] sm:$0xff]
        %v960 = vld [vmem:[%s182 + $0x1728] sm:$0xff]
        %v961 = vld [vmem:[%s182 + $0x1730] sm:$0xff]
        %v962 = vld [vmem:[%s182 + $0x1738] sm:$0xff]
        %v963 = vld [vmem:[%s182 + $0x1740] sm:$0xff]
        %v964 = vld [vmem:[%s182 + $0x1748] sm:$0xff]
        %v965 = vld [vmem:[%s182 + $0x1750] sm:$0xff]
        %v966 = vld [vmem:[%s182 + $0x1758] sm:$0xff]
        %v967 = vld [vmem:[%s182 + $0x1760] sm:$0xff]
        %v968 = vld [vmem:[%s182 + $0x1768] sm:$0xff]
        %v969 = vld [vmem:[%s182 + $0x1770] sm:$0xff]
        %v970 = vld [vmem:[%s182 + $0x1778] sm:$0xff]
        %v971 = vld [vmem:[%s182 + $0x1780] sm:$0xff]
        %v972 = vld [vmem:[%s182 + $0x1788] sm:$0xff]
        %v973 = vld [vmem:[%s182 + $0x1790] sm:$0xff]
        %v974 = vld [vmem:[%s182 + $0x1798] sm:$0xff]
        %v975 = vld [vmem:[%s182 + $0x17a0] sm:$0xff]
        %v976 = vld [vmem:[%s182 + $0x17a8] sm:$0xff]
        %v977 = vld [vmem:[%s182 + $0x17b0] sm:$0xff]
        %v978 = vld [vmem:[%s182 + $0x17b8] sm:$0xff]
        %v979 = vld [vmem:[%s182 + $0x17c0] sm:$0xff]
        %v980 = vld [vmem:[%s182 + $0x17c8] sm:$0xff]
        %v981 = vld [vmem:[%s182 + $0x17d0] sm:$0xff]
        %v982 = vld [vmem:[%s182 + $0x17d8] sm:$0xff]
        %v983 = vld [vmem:[%s182 + $0x17e0] sm:$0xff]
        %v984 = vld [vmem:[%s182 + $0x17e8] sm:$0xff]
        %v985 = vld [vmem:[%s182 + $0x17f0] sm:$0xff]
        %v986 = vld [vmem:[%s182 + $0x17f8] sm:$0xff]
        %v987 = vld [vmem:[%s182 + $0x1800] sm:$0xff]
        %v988 = vld [vmem:[%s182 + $0x1808] sm:$0xff]
        %v989 = vld [vmem:[%s182 + $0x1810] sm:$0xff]
        %v990 = vld [vmem:[%s182 + $0x1818] sm:$0xff]
        %v991 = vld [vmem:[%s182 + $0x1820] sm:$0xff]
        %v992 = vld [vmem:[%s182 + $0x1828] sm:$0xff]
        %v993 = vld [vmem:[%s182 + $0x1830] sm:$0xff]
        %v994 = vld [vmem:[%s182 + $0x1838] sm:$0xff]
        %v995 = vld [vmem:[%s182 + $0x1840] sm:$0xff]
        %v996 = vld [vmem:[%s182 + $0x1848] sm:$0xff]
        %v997 = vld [vmem:[%s182 + $0x1850] sm:$0xff]
        %v998 = vld [vmem:[%s182 + $0x1858] sm:$0xff]
        %v999 = vld [vmem:[%s182 + $0x1860] sm:$0xff]
        %v1000 = vld [vmem:[%s182 + $0x1868] sm:$0xff]
        %v1001 = vld [vmem:[%s182 + $0x1870] sm:$0xff]
        %v1002 = vld [vmem:[%s182 + $0x1878] sm:$0xff]
        %v1003 = vld [vmem:[%s182 + $0x1880] sm:$0xff]
        %v1004 = vld [vmem:[%s182 + $0x1888] sm:$0xff]
        %v1005 = vld [vmem:[%s182 + $0x1890] sm:$0xff]
        %v1006 = vld [vmem:[%s182 + $0x1898] sm:$0xff]
        %v1007 = vld [vmem:[%s182 + $0x18a0] sm:$0xff]
        %v1008 = vld [vmem:[%s182 + $0x18a8] sm:$0xff]
        %v1009 = vld [vmem:[%s182 + $0x18b0] sm:$0xff]
        %v1010 = vld [vmem:[%s182 + $0x18b8] sm:$0xff]
        %v1011 = vld [vmem:[%s182 + $0x18c0] sm:$0xff]
        %v1012 = vld [vmem:[%s182 + $0x18c8] sm:$0xff]
        %v1013 = vld [vmem:[%s182 + $0x18d0] sm:$0xff]
        %v1014 = vld [vmem:[%s182 + $0x18d8] sm:$0xff]
        %v1015 = vld [vmem:[%s182 + $0x18e0] sm:$0xff]
        %v1016 = vld [vmem:[%s182 + $0x18e8] sm:$0xff]
        %v1017 = vld [vmem:[%s182 + $0x18f0] sm:$0xff]
        %v1018 = vld [vmem:[%s182 + $0x18f8] sm:$0xff]
        %v1019 = vld [vmem:[%s182 + $0x1900] sm:$0xff]
        %v1020 = vld [vmem:[%s182 + $0x1908] sm:$0xff]
        %v1021 = vld [vmem:[%s182 + $0x1910] sm:$0xff]
        %v1022 = vld [vmem:[%s182 + $0x1918] sm:$0xff]
        %v1023 = vld [vmem:[%s182 + $0x1920] sm:$0xff]
        %v1024 = vld [vmem:[%s182 + $0x1928] sm:$0xff]
        %v1025 = vld [vmem:[%s182 + $0x1930] sm:$0xff]
        %v1026 = vld [vmem:[%s182 + $0x1938] sm:$0xff]
        %v1027 = vld [vmem:[%s182 + $0x1940] sm:$0xff]
        %v1028 = vld [vmem:[%s182 + $0x1948] sm:$0xff]
        %v1029 = vld [vmem:[%s182 + $0x1950] sm:$0xff]
        %v1030 = vld [vmem:[%s182 + $0x1958] sm:$0xff]
        %v1031 = vld [vmem:[%s182 + $0x1960] sm:$0xff]
        %v1032 = vld [vmem:[%s182 + $0x1968] sm:$0xff]
        %v1033 = vld [vmem:[%s182 + $0x1970] sm:$0xff]
        %v1034 = vld [vmem:[%s182 + $0x1978] sm:$0xff]
        %v1035 = vld [vmem:[%s182 + $0x1980] sm:$0xff]
        %v1036 = vld [vmem:[%s182 + $0x1988] sm:$0xff]
        %v1037 = vld [vmem:[%s182 + $0x1990] sm:$0xff]
        %v1038 = vld [vmem:[%s182 + $0x1998] sm:$0xff]
        %v1039 = vld [vmem:[%s182 + $0x19a0] sm:$0xff]
        %v1040 = vld [vmem:[%s182 + $0x19a8] sm:$0xff]
        %v1041 = vld [vmem:[%s182 + $0x19b0] sm:$0xff]
        %v1042 = vld [vmem:[%s182 + $0x19b8] sm:$0xff]
        %v1043 = vld [vmem:[%s182 + $0x19c0] sm:$0xff]
        %v1044 = vld [vmem:[%s182 + $0x19c8] sm:$0xff]
        %v1045 = vld [vmem:[%s182 + $0x19d0] sm:$0xff]
        %v1046 = vld [vmem:[%s182 + $0x19d8] sm:$0xff]
        %v1047 = vld [vmem:[%s182 + $0x19e0] sm:$0xff]
        %v1048 = vld [vmem:[%s182 + $0x19e8] sm:$0xff]
        %v1049 = vld [vmem:[%s182 + $0x19f0] sm:$0xff]
        %v1050 = vld [vmem:[%s182 + $0x19f8] sm:$0xff]
        %v1051 = vld [vmem:[%s182 + $0x1a00] sm:$0xff]
        %v1052 = vld [vmem:[%s182 + $0x1a08] sm:$0xff]
        %v1053 = vld [vmem:[%s182 + $0x1a10] sm:$0xff]
        %v1054 = vld [vmem:[%s182 + $0x1a18] sm:$0xff]
        %v1055 = vld [vmem:[%s182 + $0x1a20] sm:$0xff]
        %v1056 = vld [vmem:[%s182 + $0x1a28] sm:$0xff]
        %v1057 = vld [vmem:[%s182 + $0x1a30] sm:$0xff]
        %v1058 = vld [vmem:[%s182 + $0x1a38] sm:$0xff]
        %v1059 = vld [vmem:[%s182 + $0x1a40] sm:$0xff]
        %v1060 = vld [vmem:[%s182 + $0x1a48] sm:$0xff]
        %v1061 = vld [vmem:[%s182 + $0x1a50] sm:$0xff]
        %v1062 = vld [vmem:[%s182 + $0x1a58] sm:$0xff]
        %v1063 = vld [vmem:[%s182 + $0x1a60] sm:$0xff]
        %v1064 = vld [vmem:[%s182 + $0x1a68] sm:$0xff]
        %v1065 = vld [vmem:[%s182 + $0x1a70] sm:$0xff]
        %v1066 = vld [vmem:[%s182 + $0x1a78] sm:$0xff]
        %v1067 = vld [vmem:[%s182 + $0x1a80] sm:$0xff]
        %v1068 = vld [vmem:[%s182 + $0x1a88] sm:$0xff]
        %v1069 = vld [vmem:[%s182 + $0x1a90] sm:$0xff]
        %v1070 = vld [vmem:[%s182 + $0x1a98] sm:$0xff]
        %v1071 = vld [vmem:[%s182 + $0x1aa0] sm:$0xff]
        %v1072 = vld [vmem:[%s182 + $0x1aa8] sm:$0xff]
        %v1073 = vld [vmem:[%s182 + $0x1ab0] sm:$0xff]
        %v1074 = vld [vmem:[%s182 + $0x1ab8] sm:$0xff]
        %v1075 = vld [vmem:[%s182 + $0x1ac0] sm:$0xff]
        %v1076 = vld [vmem:[%s182 + $0x1ac8] sm:$0xff]
        %v1077 = vld [vmem:[%s182 + $0x1ad0] sm:$0xff]
        %v1078 = vld [vmem:[%s182 + $0x1ad8] sm:$0xff]
        %v1079 = vld [vmem:[%s182 + $0x1ae0] sm:$0xff]
        %v1080 = vld [vmem:[%s182 + $0x1ae8] sm:$0xff]
        %v1081 = vld [vmem:[%s182 + $0x1af0] sm:$0xff]
        %v1082 = vld [vmem:[%s182 + $0x1af8] sm:$0xff]
        %v1083 = vld [vmem:[%s182 + $0x1b00] sm:$0xff]
        %v1084 = vld [vmem:[%s182 + $0x1b08] sm:$0xff]
        %v1085 = vld [vmem:[%s182 + $0x1b10] sm:$0xff]
        %v1086 = vld [vmem:[%s182 + $0x1b18] sm:$0xff]
        %v1087 = vld [vmem:[%s182 + $0x1b20] sm:$0xff]
        %v1088 = vld [vmem:[%s182 + $0x1b28] sm:$0xff]
        %v1089 = vld [vmem:[%s182 + $0x1b30] sm:$0xff]
        %v1090 = vld [vmem:[%s182 + $0x1b38] sm:$0xff]
        %v1091 = vld [vmem:[%s182 + $0x1b40] sm:$0xff]
        %v1092 = vld [vmem:[%s182 + $0x1b48] sm:$0xff]
        %v1093 = vld [vmem:[%s182 + $0x1b50] sm:$0xff]
        %v1094 = vld [vmem:[%s182 + $0x1b58] sm:$0xff]
        %v1095 = vld [vmem:[%s182 + $0x1b60] sm:$0xff]
        %v1096 = vld [vmem:[%s182 + $0x1b68] sm:$0xff]
        %v1097 = vld [vmem:[%s182 + $0x1b70] sm:$0xff]
        %v1098 = vld [vmem:[%s182 + $0x1b78] sm:$0xff]
        %v1099 = vld [vmem:[%s182 + $0x1b80] sm:$0xff]
        %v1100 = vld [vmem:[%s182 + $0x1b88] sm:$0xff]
        %v1101 = vld [vmem:[%s182 + $0x1b90] sm:$0xff]
        %v1102 = vld [vmem:[%s182 + $0x1b98] sm:$0xff]
        %v1103 = vld [vmem:[%s182 + $0x1ba0] sm:$0xff]
        %v1104 = vld [vmem:[%s182 + $0x1ba8] sm:$0xff]
        %v1105 = vld [vmem:[%s182 + $0x1bb0] sm:$0xff]
        %v1106 = vld [vmem:[%s182 + $0x1bb8] sm:$0xff]
        %v1107 = vld [vmem:[%s182 + $0x1bc0] sm:$0xff]
        %v1108 = vld [vmem:[%s182 + $0x1bc8] sm:$0xff]
        %v1109 = vld [vmem:[%s182 + $0x1bd0] sm:$0xff]
        %v1110 = vld [vmem:[%s182 + $0x1bd8] sm:$0xff]
        %v1111 = vld [vmem:[%s182 + $0x1be0] sm:$0xff]
        %v1112 = vld [vmem:[%s182 + $0x1be8] sm:$0xff]
        %v1113 = vld [vmem:[%s182 + $0x1bf0] sm:$0xff]
        %v1114 = vld [vmem:[%s182 + $0x1bf8] sm:$0xff]
        %v1115 = vld [vmem:[%s182 + $0x1c00] sm:$0xff]
        %v1116 = vld [vmem:[%s182 + $0x1c08] sm:$0xff]
        %v1117 = vld [vmem:[%s182 + $0x1c10] sm:$0xff]
        %v1118 = vld [vmem:[%s182 + $0x1c18] sm:$0xff]
        %v1119 = vld [vmem:[%s182 + $0x1c20] sm:$0xff]
        %v1120 = vld [vmem:[%s182 + $0x1c28] sm:$0xff]
        %v1121 = vld [vmem:[%s182 + $0x1c30] sm:$0xff]
        %v1122 = vld [vmem:[%s182 + $0x1c38] sm:$0xff]
        %v1123 = vld [vmem:[%s182 + $0x1c40] sm:$0xff]
        %v1124 = vld [vmem:[%s182 + $0x1c48] sm:$0xff]
        %v1125 = vld [vmem:[%s182 + $0x1c50] sm:$0xff]
        %v1126 = vld [vmem:[%s182 + $0x1c58] sm:$0xff]
        %v1127 = vld [vmem:[%s182 + $0x1c60] sm:$0xff]
        %v1128 = vld [vmem:[%s182 + $0x1c68] sm:$0xff]
        %v1129 = vld [vmem:[%s182 + $0x1c70] sm:$0xff]
        %v1130 = vld [vmem:[%s182 + $0x1c78] sm:$0xff]
        %v1131 = vld [vmem:[%s182 + $0x1c80] sm:$0xff]
        %v1132 = vld [vmem:[%s182 + $0x1c88] sm:$0xff]
        %v1133 = vld [vmem:[%s182 + $0x1c90] sm:$0xff]
        %v1134 = vld [vmem:[%s182 + $0x1c98] sm:$0xff]
        %v1135 = vld [vmem:[%s182 + $0x1ca0] sm:$0xff]
        %v1136 = vld [vmem:[%s182 + $0x1ca8] sm:$0xff]
        %v1137 = vld [vmem:[%s182 + $0x1cb0] sm:$0xff]
        %v1138 = vld [vmem:[%s182 + $0x1cb8] sm:$0xff]
        %v1139 = vld [vmem:[%s182 + $0x1cc0] sm:$0xff]
        %v1140 = vld [vmem:[%s182 + $0x1cc8] sm:$0xff]
        %v1141 = vld [vmem:[%s182 + $0x1cd0] sm:$0xff]
        %v1142 = vld [vmem:[%s182 + $0x1cd8] sm:$0xff]
        %v1143 = vld [vmem:[%s182 + $0x1ce0] sm:$0xff]
        %v1144 = vld [vmem:[%s182 + $0x1ce8] sm:$0xff]
        %v1145 = vld [vmem:[%s182 + $0x1cf0] sm:$0xff]
        %v1146 = vld [vmem:[%s182 + $0x1cf8] sm:$0xff]
        %v1147 = vld [vmem:[%s182 + $0x1d00] sm:$0xff]
        %v1148 = vld [vmem:[%s182 + $0x1d08] sm:$0xff]
        %v1149 = vld [vmem:[%s182 + $0x1d10] sm:$0xff]
        %v1150 = vld [vmem:[%s182 + $0x1d18] sm:$0xff]
        %v1151 = vld [vmem:[%s182 + $0x1d20] sm:$0xff]
        %v1152 = vld [vmem:[%s182 + $0x1d28] sm:$0xff]
        %v1153 = vld [vmem:[%s182 + $0x1d30] sm:$0xff]
        %v1154 = vld [vmem:[%s182 + $0x1d38] sm:$0xff]
        %v1155 = vld [vmem:[%s182 + $0x1d40] sm:$0xff]
        %v1156 = vld [vmem:[%s182 + $0x1d48] sm:$0xff]
        %v1157 = vld [vmem:[%s182 + $0x1d50] sm:$0xff]
        %v1158 = vld [vmem:[%s182 + $0x1d58] sm:$0xff]
        %v1159 = vld [vmem:[%s182 + $0x1d60] sm:$0xff]
        %v1160 = vld [vmem:[%s182 + $0x1d68] sm:$0xff]
        %v1161 = vld [vmem:[#allocation5] sm:$0x3f]
        %v1163 = vlaneseq
        %v1164 = vshrl.u32 %v1163, 7
        %v1165 = vsub.s32 0, %v1164
        %v1166 = vrot.slane %v1161, %v1165
        %v1167 = vlaneseq
        %v1168 = vshrl.u32 %v1167, 7
        %v1169 = vsub.s32 1, %v1168
        %v1170 = vrot.slane %v1161, %v1169
        %v1171 = vlaneseq
        %v1172 = vshrl.u32 %v1171, 7
        %v1173 = vsub.s32 2, %v1172
        %v1174 = vrot.slane %v1161, %v1173
        %v1175 = vlaneseq
        %v1176 = vshrl.u32 %v1175, 7
        %v1177 = vsub.s32 3, %v1176
        %v1178 = vrot.slane %v1161, %v1177
        %v1179 = vlaneseq
        %v1180 = vshrl.u32 %v1179, 7
        %v1181 = vsub.s32 4, %v1180
        %v1182 = vrot.slane %v1161, %v1181
        %v1183 = vlaneseq
        %v1184 = vshrl.u32 %v1183, 7
        %v1185 = vsub.s32 5, %v1184
        %v1186 = vrot.slane %v1161, %v1185
        %v1193 = vmul.f32 %v219, %v1166
        %v1194 = vmul.f32 %v220, %v1170
        %v1195 = vmul.f32 %v221, %v1174
        %v1196 = vmul.f32 %v222, %v1178
        %v1197 = vmul.f32 %v223, %v1182
        %v1198 = vmul.f32 %v224, %v1186
        %v1199 = vmul.f32 %v225, %v1166
        %v1200 = vmul.f32 %v226, %v1170
        %v1201 = vmul.f32 %v227, %v1174
        %v1202 = vmul.f32 %v228, %v1178
        %v1203 = vmul.f32 %v229, %v1182
        %v1204 = vmul.f32 %v230, %v1186
        %v1205 = vmul.f32 %v231, %v1166
        %v1206 = vmul.f32 %v232, %v1170
        %v1207 = vmul.f32 %v233, %v1174
        %v1208 = vmul.f32 %v234, %v1178
        %v1209 = vmul.f32 %v235, %v1182
        %v1210 = vmul.f32 %v236, %v1186
        %v1211 = vmul.f32 %v237, %v1166
        %v1212 = vmul.f32 %v238, %v1170
        %v1213 = vmul.f32 %v239, %v1174
        %v1214 = vmul.f32 %v240, %v1178
        %v1215 = vmul.f32 %v241, %v1182
        %v1216 = vmul.f32 %v242, %v1186
        %v1217 = vmul.f32 %v243, %v1166
        %v1218 = vmul.f32 %v244, %v1170
        %v1219 = vmul.f32 %v245, %v1174
        %v1220 = vmul.f32 %v246, %v1178
        %v1221 = vmul.f32 %v247, %v1182
        %v1222 = vmul.f32 %v248, %v1186
        %v1223 = vmul.f32 %v249, %v1166
        %v1224 = vmul.f32 %v250, %v1170
        %v1225 = vmul.f32 %v251, %v1174
        %v1226 = vmul.f32 %v252, %v1178
        %v1227 = vmul.f32 %v253, %v1182
        %v1228 = vmul.f32 %v254, %v1186
        %v1229 = vmul.f32 %v255, %v1166
        %v1230 = vmul.f32 %v256, %v1170
        %v1231 = vmul.f32 %v257, %v1174
        %v1232 = vmul.f32 %v258, %v1178
        %v1233 = vmul.f32 %v259, %v1182
        %v1234 = vmul.f32 %v260, %v1186
        %v1235 = vmul.f32 %v261, %v1166
        %v1236 = vmul.f32 %v262, %v1170
        %v1237 = vmul.f32 %v263, %v1174
        %v1238 = vmul.f32 %v264, %v1178
        %v1239 = vmul.f32 %v265, %v1182
        %v1240 = vmul.f32 %v266, %v1186
        %v1241 = vmul.f32 %v267, %v1166
        %v1242 = vmul.f32 %v268, %v1170
        %v1243 = vmul.f32 %v269, %v1174
        %v1244 = vmul.f32 %v270, %v1178
        %v1245 = vmul.f32 %v271, %v1182
        %v1246 = vmul.f32 %v272, %v1186
        %v1247 = vmul.f32 %v273, %v1166
        %v1248 = vmul.f32 %v274, %v1170
        %v1249 = vmul.f32 %v275, %v1174
        %v1250 = vmul.f32 %v276, %v1178
        %v1251 = vmul.f32 %v277, %v1182
        %v1252 = vmul.f32 %v278, %v1186
        %v1253 = vmul.f32 %v279, %v1166
        %v1254 = vmul.f32 %v280, %v1170
        %v1255 = vmul.f32 %v281, %v1174
        %v1256 = vmul.f32 %v282, %v1178
        %v1257 = vmul.f32 %v283, %v1182
        %v1258 = vmul.f32 %v284, %v1186
        %v1259 = vmul.f32 %v285, %v1166
        %v1260 = vmul.f32 %v286, %v1170
        %v1261 = vmul.f32 %v287, %v1174
        %v1262 = vmul.f32 %v288, %v1178
        %v1263 = vmul.f32 %v289, %v1182
        %v1264 = vmul.f32 %v290, %v1186
        %v1265 = vmul.f32 %v291, %v1166
        %v1266 = vmul.f32 %v292, %v1170
        %v1267 = vmul.f32 %v293, %v1174
        %v1268 = vmul.f32 %v294, %v1178
        %v1269 = vmul.f32 %v295, %v1182
        %v1270 = vmul.f32 %v296, %v1186
        %v1271 = vmul.f32 %v297, %v1166
        %v1272 = vmul.f32 %v298, %v1170
        %v1273 = vmul.f32 %v299, %v1174
        %v1274 = vmul.f32 %v300, %v1178
        %v1275 = vmul.f32 %v301, %v1182
        %v1276 = vmul.f32 %v302, %v1186
        %v1277 = vmul.f32 %v303, %v1166
        %v1278 = vmul.f32 %v304, %v1170
        %v1279 = vmul.f32 %v305, %v1174
        %v1280 = vmul.f32 %v306, %v1178
        %v1281 = vmul.f32 %v307, %v1182
        %v1282 = vmul.f32 %v308, %v1186
        %v1283 = vmul.f32 %v309, %v1166
        %v1284 = vmul.f32 %v310, %v1170
        %v1285 = vmul.f32 %v311, %v1174
        %v1286 = vmul.f32 %v312, %v1178
        %v1287 = vmul.f32 %v313, %v1182
        %v1288 = vmul.f32 %v314, %v1186
        %v1289 = vmul.f32 %v315, %v1166
        %v1290 = vmul.f32 %v316, %v1170
        %v1291 = vmul.f32 %v317, %v1174
        %v1292 = vmul.f32 %v318, %v1178
        %v1293 = vmul.f32 %v319, %v1182
        %v1294 = vmul.f32 %v320, %v1186
        %v1295 = vmul.f32 %v321, %v1166
        %v1296 = vmul.f32 %v322, %v1170
        %v1297 = vmul.f32 %v323, %v1174
        %v1298 = vmul.f32 %v324, %v1178
        %v1299 = vmul.f32 %v325, %v1182
        %v1300 = vmul.f32 %v326, %v1186
        %v1301 = vmul.f32 %v327, %v1166
        %v1302 = vmul.f32 %v328, %v1170
        %v1303 = vmul.f32 %v329, %v1174
        %v1304 = vmul.f32 %v330, %v1178
        %v1305 = vmul.f32 %v331, %v1182
        %v1306 = vmul.f32 %v332, %v1186
        %v1307 = vmul.f32 %v333, %v1166
        %v1308 = vmul.f32 %v334, %v1170
        %v1309 = vmul.f32 %v335, %v1174
        %v1310 = vmul.f32 %v336, %v1178
        %v1311 = vmul.f32 %v337, %v1182
        %v1312 = vmul.f32 %v338, %v1186
        %v1313 = vmul.f32 %v339, %v1166
        %v1314 = vmul.f32 %v340, %v1170
        %v1315 = vmul.f32 %v341, %v1174
        %v1316 = vmul.f32 %v342, %v1178
        %v1317 = vmul.f32 %v343, %v1182
        %v1318 = vmul.f32 %v344, %v1186
        %v1319 = vmul.f32 %v345, %v1166
        %v1320 = vmul.f32 %v346, %v1170
        %v1321 = vmul.f32 %v347, %v1174
        %v1322 = vmul.f32 %v348, %v1178
        %v1323 = vmul.f32 %v349, %v1182
        %v1324 = vmul.f32 %v350, %v1186
        %v1325 = vmul.f32 %v351, %v1166
        %v1326 = vmul.f32 %v352, %v1170
        %v1327 = vmul.f32 %v353, %v1174
        %v1328 = vmul.f32 %v354, %v1178
        %v1329 = vmul.f32 %v355, %v1182
        %v1330 = vmul.f32 %v356, %v1186
        %v1331 = vmul.f32 %v357, %v1166
        %v1332 = vmul.f32 %v358, %v1170
        %v1333 = vmul.f32 %v359, %v1174
        %v1334 = vmul.f32 %v360, %v1178
        %v1335 = vmul.f32 %v361, %v1182
        %v1336 = vmul.f32 %v362, %v1186
        %v1337 = vmul.f32 %v363, %v1166
        %v1338 = vmul.f32 %v364, %v1170
        %v1339 = vmul.f32 %v365, %v1174
        %v1340 = vmul.f32 %v366, %v1178
        %v1341 = vmul.f32 %v367, %v1182
        %v1342 = vmul.f32 %v368, %v1186
        %v1343 = vmul.f32 %v369, %v1166
        %v1344 = vmul.f32 %v370, %v1170
        %v1345 = vmul.f32 %v371, %v1174
        %v1346 = vmul.f32 %v372, %v1178
        %v1347 = vmul.f32 %v373, %v1182
        %v1348 = vmul.f32 %v374, %v1186
        %v1349 = vmul.f32 %v375, %v1166
        %v1350 = vmul.f32 %v376, %v1170
        %v1351 = vmul.f32 %v377, %v1174
        %v1352 = vmul.f32 %v378, %v1178
        %v1353 = vmul.f32 %v379, %v1182
        %v1354 = vmul.f32 %v380, %v1186
        %v1355 = vmul.f32 %v381, %v1166
        %v1356 = vmul.f32 %v382, %v1170
        %v1357 = vmul.f32 %v383, %v1174
        %v1358 = vmul.f32 %v384, %v1178
        %v1359 = vmul.f32 %v385, %v1182
        %v1360 = vmul.f32 %v386, %v1186
        %v1361 = vmul.f32 %v387, %v1166
        %v1362 = vmul.f32 %v388, %v1170
        %v1363 = vmul.f32 %v389, %v1174
        %v1364 = vmul.f32 %v390, %v1178
        %v1365 = vmul.f32 %v391, %v1182
        %v1366 = vmul.f32 %v392, %v1186
        %v1367 = vmul.f32 %v393, %v1166
        %v1368 = vmul.f32 %v394, %v1170
        %v1369 = vmul.f32 %v395, %v1174
        %v1370 = vmul.f32 %v396, %v1178
        %v1371 = vmul.f32 %v397, %v1182
        %v1372 = vmul.f32 %v398, %v1186
        %v1373 = vmul.f32 %v399, %v1166
        %v1374 = vmul.f32 %v400, %v1170
        %v1375 = vmul.f32 %v401, %v1174
        %v1376 = vmul.f32 %v402, %v1178
        %v1377 = vmul.f32 %v403, %v1182
        %v1378 = vmul.f32 %v404, %v1186
        %v1379 = vmul.f32 %v405, %v1166
        %v1380 = vmul.f32 %v406, %v1170
        %v1381 = vmul.f32 %v407, %v1174
        %v1382 = vmul.f32 %v408, %v1178
        %v1383 = vmul.f32 %v409, %v1182
        %v1384 = vmul.f32 %v410, %v1186
        %v1385 = vmul.f32 %v411, %v1166
        %v1386 = vmul.f32 %v412, %v1170
        %v1387 = vmul.f32 %v413, %v1174
        %v1388 = vmul.f32 %v414, %v1178
        %v1389 = vmul.f32 %v415, %v1182
        %v1390 = vmul.f32 %v416, %v1186
        %v1391 = vmul.f32 %v417, %v1166
        %v1392 = vmul.f32 %v418, %v1170
        %v1393 = vmul.f32 %v419, %v1174
        %v1394 = vmul.f32 %v420, %v1178
        %v1395 = vmul.f32 %v421, %v1182
        %v1396 = vmul.f32 %v422, %v1186
        %v1397 = vmul.f32 %v423, %v1166
        %v1398 = vmul.f32 %v424, %v1170
        %v1399 = vmul.f32 %v425, %v1174
        %v1400 = vmul.f32 %v426, %v1178
        %v1401 = vmul.f32 %v427, %v1182
        %v1402 = vmul.f32 %v428, %v1186
        %v1403 = vmul.f32 %v429, %v1166
        %v1404 = vmul.f32 %v430, %v1170
        %v1405 = vmul.f32 %v431, %v1174
        %v1406 = vmul.f32 %v432, %v1178
        %v1407 = vmul.f32 %v433, %v1182
        %v1408 = vmul.f32 %v434, %v1186
        %v1409 = vmul.f32 %v435, %v1166
        %v1410 = vmul.f32 %v436, %v1170
        %v1411 = vmul.f32 %v437, %v1174
        %v1412 = vmul.f32 %v438, %v1178
        %v1413 = vmul.f32 %v439, %v1182
        %v1414 = vmul.f32 %v440, %v1186
        %v1415 = vmul.f32 %v441, %v1166
        %v1416 = vmul.f32 %v442, %v1170
        %v1417 = vmul.f32 %v443, %v1174
        %v1418 = vmul.f32 %v444, %v1178
        %v1419 = vmul.f32 %v445, %v1182
        %v1420 = vmul.f32 %v446, %v1186
        %v1421 = vmul.f32 %v447, %v1166
        %v1422 = vmul.f32 %v448, %v1170
        %v1423 = vmul.f32 %v449, %v1174
        %v1424 = vmul.f32 %v450, %v1178
        %v1425 = vmul.f32 %v451, %v1182
        %v1426 = vmul.f32 %v452, %v1186
        %v1427 = vmul.f32 %v453, %v1166
        %v1428 = vmul.f32 %v454, %v1170
        %v1429 = vmul.f32 %v455, %v1174
        %v1430 = vmul.f32 %v456, %v1178
        %v1431 = vmul.f32 %v457, %v1182
        %v1432 = vmul.f32 %v458, %v1186
        %v1433 = vmul.f32 %v459, %v1166
        %v1434 = vmul.f32 %v460, %v1170
        %v1435 = vmul.f32 %v461, %v1174
        %v1436 = vmul.f32 %v462, %v1178
        %v1437 = vmul.f32 %v463, %v1182
        %v1438 = vmul.f32 %v464, %v1186
        %v1439 = vmul.f32 %v465, %v1166
        %v1440 = vmul.f32 %v466, %v1170
        %v1441 = vmul.f32 %v467, %v1174
        %v1442 = vmul.f32 %v468, %v1178
        %v1443 = vmul.f32 %v469, %v1182
        %v1444 = vmul.f32 %v470, %v1186
        %v1445 = vmul.f32 %v471, %v1166
        %v1446 = vmul.f32 %v472, %v1170
        %v1447 = vmul.f32 %v473, %v1174
        %v1448 = vmul.f32 %v474, %v1178
        %v1449 = vmul.f32 %v475, %v1182
        %v1450 = vmul.f32 %v476, %v1186
        %v1451 = vmul.f32 %v477, %v1166
        %v1452 = vmul.f32 %v478, %v1170
        %v1453 = vmul.f32 %v479, %v1174
        %v1454 = vmul.f32 %v480, %v1178
        %v1455 = vmul.f32 %v481, %v1182
        %v1456 = vmul.f32 %v482, %v1186
        %v1457 = vmul.f32 %v483, %v1166
        %v1458 = vmul.f32 %v484, %v1170
        %v1459 = vmul.f32 %v485, %v1174
        %v1460 = vmul.f32 %v486, %v1178
        %v1461 = vmul.f32 %v487, %v1182
        %v1462 = vmul.f32 %v488, %v1186
        %v1463 = vmul.f32 %v489, %v1166
        %v1464 = vmul.f32 %v490, %v1170
        %v1465 = vmul.f32 %v491, %v1174
        %v1466 = vmul.f32 %v492, %v1178
        %v1467 = vmul.f32 %v493, %v1182
        %v1468 = vmul.f32 %v494, %v1186
        %v1469 = vmul.f32 %v495, %v1166
        %v1470 = vmul.f32 %v496, %v1170
        %v1471 = vmul.f32 %v497, %v1174
        %v1472 = vmul.f32 %v498, %v1178
        %v1473 = vmul.f32 %v499, %v1182
        %v1474 = vmul.f32 %v500, %v1186
        %v1475 = vmul.f32 %v501, %v1166
        %v1476 = vmul.f32 %v502, %v1170
        %v1477 = vmul.f32 %v503, %v1174
        %v1478 = vmul.f32 %v504, %v1178
        %v1479 = vmul.f32 %v505, %v1182
        %v1480 = vmul.f32 %v506, %v1186
        %v1481 = vmul.f32 %v507, %v1166
        %v1482 = vmul.f32 %v508, %v1170
        %v1483 = vmul.f32 %v509, %v1174
        %v1484 = vmul.f32 %v510, %v1178
        %v1485 = vmul.f32 %v511, %v1182
        %v1486 = vmul.f32 %v512, %v1186
        %v1487 = vmul.f32 %v513, %v1166
        %v1488 = vmul.f32 %v514, %v1170
        %v1489 = vmul.f32 %v515, %v1174
        %v1490 = vmul.f32 %v516, %v1178
        %v1491 = vmul.f32 %v517, %v1182
        %v1492 = vmul.f32 %v518, %v1186
        %v1493 = vmul.f32 %v519, %v1166
        %v1494 = vmul.f32 %v520, %v1170
        %v1495 = vmul.f32 %v521, %v1174
        %v1496 = vmul.f32 %v522, %v1178
        %v1497 = vmul.f32 %v523, %v1182
        %v1498 = vmul.f32 %v524, %v1186
        %v1499 = vmul.f32 %v525, %v1166
        %v1500 = vmul.f32 %v526, %v1170
        %v1501 = vmul.f32 %v527, %v1174
        %v1502 = vmul.f32 %v528, %v1178
        %v1503 = vmul.f32 %v529, %v1182
        %v1504 = vmul.f32 %v530, %v1186
        %v1505 = vmul.f32 %v531, %v1166
        %v1506 = vmul.f32 %v532, %v1170
        %v1507 = vmul.f32 %v533, %v1174
        %v1508 = vmul.f32 %v534, %v1178
        %v1509 = vmul.f32 %v535, %v1182
        %v1510 = vmul.f32 %v536, %v1186
        %v1511 = vmul.f32 %v537, %v1166
        %v1512 = vmul.f32 %v538, %v1170
        %v1513 = vmul.f32 %v539, %v1174
        %v1514 = vmul.f32 %v540, %v1178
        %v1515 = vmul.f32 %v541, %v1182
        %v1516 = vmul.f32 %v542, %v1186
        %v1517 = vmul.f32 %v543, %v1166
        %v1518 = vmul.f32 %v544, %v1170
        %v1519 = vmul.f32 %v545, %v1174
        %v1520 = vmul.f32 %v546, %v1178
        %v1521 = vmul.f32 %v547, %v1182
        %v1522 = vmul.f32 %v548, %v1186
        %v1523 = vmul.f32 %v549, %v1166
        %v1524 = vmul.f32 %v550, %v1170
        %v1525 = vmul.f32 %v551, %v1174
        %v1526 = vmul.f32 %v552, %v1178
        %v1527 = vmul.f32 %v553, %v1182
        %v1528 = vmul.f32 %v554, %v1186
        %v1529 = vmul.f32 %v555, %v1166
        %v1530 = vmul.f32 %v556, %v1170
        %v1531 = vmul.f32 %v557, %v1174
        %v1532 = vmul.f32 %v558, %v1178
        %v1533 = vmul.f32 %v559, %v1182
        %v1534 = vmul.f32 %v560, %v1186
        %v1535 = vmul.f32 %v561, %v1166
        %v1536 = vmul.f32 %v562, %v1170
        %v1537 = vmul.f32 %v563, %v1174
        %v1538 = vmul.f32 %v564, %v1178
        %v1539 = vmul.f32 %v565, %v1182
        %v1540 = vmul.f32 %v566, %v1186
        %v1541 = vmul.f32 %v567, %v1166
        %v1542 = vmul.f32 %v568, %v1170
        %v1543 = vmul.f32 %v569, %v1174
        %v1544 = vmul.f32 %v570, %v1178
        %v1545 = vmul.f32 %v571, %v1182
        %v1546 = vmul.f32 %v572, %v1186
        %v1547 = vmul.f32 %v573, %v1166
        %v1548 = vmul.f32 %v574, %v1170
        %v1549 = vmul.f32 %v575, %v1174
        %v1550 = vmul.f32 %v576, %v1178
        %v1551 = vmul.f32 %v577, %v1182
        %v1552 = vmul.f32 %v578, %v1186
        %v1553 = vmul.f32 %v579, %v1166
        %v1554 = vmul.f32 %v580, %v1170
        %v1555 = vmul.f32 %v581, %v1174
        %v1556 = vmul.f32 %v582, %v1178
        %v1557 = vmul.f32 %v583, %v1182
        %v1558 = vmul.f32 %v584, %v1186
        %v1559 = vmul.f32 %v585, %v1166
        %v1560 = vmul.f32 %v586, %v1170
        %v1561 = vmul.f32 %v587, %v1174
        %v1562 = vmul.f32 %v588, %v1178
        %v1563 = vmul.f32 %v589, %v1182
        %v1564 = vmul.f32 %v590, %v1186
        %v1565 = vmul.f32 %v591, %v1166
        %v1566 = vmul.f32 %v592, %v1170
        %v1567 = vmul.f32 %v593, %v1174
        %v1568 = vmul.f32 %v594, %v1178
        %v1569 = vmul.f32 %v595, %v1182
        %v1570 = vmul.f32 %v596, %v1186
        %v1571 = vmul.f32 %v597, %v1166
        %v1572 = vmul.f32 %v598, %v1170
        %v1573 = vmul.f32 %v599, %v1174
        %v1574 = vmul.f32 %v600, %v1178
        %v1575 = vmul.f32 %v601, %v1182
        %v1576 = vmul.f32 %v602, %v1186
        %v1577 = vmul.f32 %v603, %v1166
        %v1578 = vmul.f32 %v604, %v1170
        %v1579 = vmul.f32 %v605, %v1174
        %v1580 = vmul.f32 %v606, %v1178
        %v1581 = vmul.f32 %v607, %v1182
        %v1582 = vmul.f32 %v608, %v1186
        %v1583 = vmul.f32 %v609, %v1166
        %v1584 = vmul.f32 %v610, %v1170
        %v1585 = vmul.f32 %v611, %v1174
        %v1586 = vmul.f32 %v612, %v1178
        %v1587 = vmul.f32 %v613, %v1182
        %v1588 = vmul.f32 %v614, %v1186
        %v1589 = vmul.f32 %v615, %v1166
        %v1590 = vmul.f32 %v616, %v1170
        %v1591 = vmul.f32 %v617, %v1174
        %v1592 = vmul.f32 %v618, %v1178
        %v1593 = vmul.f32 %v619, %v1182
        %v1594 = vmul.f32 %v620, %v1186
        %v1595 = vmul.f32 %v621, %v1166
        %v1596 = vmul.f32 %v622, %v1170
        %v1597 = vmul.f32 %v623, %v1174
        %v1598 = vmul.f32 %v624, %v1178
        %v1599 = vmul.f32 %v625, %v1182
        %v1600 = vmul.f32 %v626, %v1186
        %v1601 = vmul.f32 %v627, %v1166
        %v1602 = vmul.f32 %v628, %v1170
        %v1603 = vmul.f32 %v629, %v1174
        %v1604 = vmul.f32 %v630, %v1178
        %v1605 = vmul.f32 %v631, %v1182
        %v1606 = vmul.f32 %v632, %v1186
        %v1607 = vmul.f32 %v633, %v1166
        %v1608 = vmul.f32 %v634, %v1170
        %v1609 = vmul.f32 %v635, %v1174
        %v1610 = vmul.f32 %v636, %v1178
        %v1611 = vmul.f32 %v637, %v1182
        %v1612 = vmul.f32 %v638, %v1186
        %v1613 = vmul.f32 %v639, %v1166
        %v1614 = vmul.f32 %v640, %v1170
        %v1615 = vmul.f32 %v641, %v1174
        %v1616 = vmul.f32 %v642, %v1178
        %v1617 = vmul.f32 %v643, %v1182
        %v1618 = vmul.f32 %v644, %v1186
        %v1619 = vmul.f32 %v645, %v1166
        %v1620 = vmul.f32 %v646, %v1170
        %v1621 = vmul.f32 %v647, %v1174
        %v1622 = vmul.f32 %v648, %v1178
        %v1623 = vmul.f32 %v649, %v1182
        %v1624 = vmul.f32 %v650, %v1186
        %v1625 = vmul.f32 %v651, %v1166
        %v1626 = vmul.f32 %v652, %v1170
        %v1627 = vmul.f32 %v653, %v1174
        %v1628 = vmul.f32 %v654, %v1178
        %v1629 = vmul.f32 %v655, %v1182
        %v1630 = vmul.f32 %v656, %v1186
        %v1631 = vmul.f32 %v657, %v1166
        %v1632 = vmul.f32 %v658, %v1170
        %v1633 = vmul.f32 %v659, %v1174
        %v1634 = vmul.f32 %v660, %v1178
        %v1635 = vmul.f32 %v661, %v1182
        %v1636 = vmul.f32 %v662, %v1186
        %v1637 = vmul.f32 %v663, %v1166
        %v1638 = vmul.f32 %v664, %v1170
        %v1639 = vmul.f32 %v665, %v1174
        %v1640 = vmul.f32 %v666, %v1178
        %v1641 = vmul.f32 %v667, %v1182
        %v1642 = vmul.f32 %v668, %v1186
        %v1643 = vmul.f32 %v669, %v1166
        %v1644 = vmul.f32 %v670, %v1170
        %v1645 = vmul.f32 %v671, %v1174
        %v1646 = vmul.f32 %v672, %v1178
        %v1647 = vmul.f32 %v673, %v1182
        %v1648 = vmul.f32 %v674, %v1186
        %v1649 = vmul.f32 %v675, %v1166
        %v1650 = vmul.f32 %v676, %v1170
        %v1651 = vmul.f32 %v677, %v1174
        %v1652 = vmul.f32 %v678, %v1178
        %v1653 = vmul.f32 %v679, %v1182
        %v1654 = vmul.f32 %v680, %v1186
        %v1655 = vmul.f32 %v681, %v1166
        %v1656 = vmul.f32 %v682, %v1170
        %v1657 = vmul.f32 %v683, %v1174
        %v1658 = vmul.f32 %v684, %v1178
        %v1659 = vmul.f32 %v685, %v1182
        %v1660 = vmul.f32 %v686, %v1186
        %v1661 = vmul.f32 %v687, %v1166
        %v1662 = vmul.f32 %v688, %v1170
        %v1663 = vmul.f32 %v689, %v1174
        %v1664 = vmul.f32 %v690, %v1178
        %v1665 = vmul.f32 %v691, %v1182
        %v1666 = vmul.f32 %v692, %v1186
        %v1667 = vmul.f32 %v693, %v1166
        %v1668 = vmul.f32 %v694, %v1170
        %v1669 = vmul.f32 %v695, %v1174
        %v1670 = vmul.f32 %v696, %v1178
        %v1671 = vmul.f32 %v697, %v1182
        %v1672 = vmul.f32 %v698, %v1186
        %v1673 = vmul.f32 %v699, %v1166
        %v1674 = vmul.f32 %v700, %v1170
        %v1675 = vmul.f32 %v701, %v1174
        %v1676 = vmul.f32 %v702, %v1178
        %v1677 = vmul.f32 %v703, %v1182
        %v1678 = vmul.f32 %v704, %v1186
        %v1679 = vmul.f32 %v705, %v1166
        %v1680 = vmul.f32 %v706, %v1170
        %v1681 = vmul.f32 %v707, %v1174
        %v1682 = vmul.f32 %v708, %v1178
        %v1683 = vmul.f32 %v709, %v1182
        %v1684 = vmul.f32 %v710, %v1186
        %v1685 = vmul.f32 %v711, %v1166
        %v1686 = vmul.f32 %v712, %v1170
        %v1687 = vmul.f32 %v713, %v1174
        %v1688 = vmul.f32 %v714, %v1178
        %v1689 = vmul.f32 %v715, %v1182
        %v1690 = vmul.f32 %v716, %v1186
        %v1691 = vmul.f32 %v717, %v1166
        %v1692 = vmul.f32 %v718, %v1170
        %v1693 = vmul.f32 %v719, %v1174
        %v1694 = vmul.f32 %v720, %v1178
        %v1695 = vmul.f32 %v721, %v1182
        %v1696 = vmul.f32 %v722, %v1186
        %v1697 = vmul.f32 %v723, %v1166
        %v1698 = vmul.f32 %v724, %v1170
        %v1699 = vmul.f32 %v725, %v1174
        %v1700 = vmul.f32 %v726, %v1178
        %v1701 = vmul.f32 %v727, %v1182
        %v1702 = vmul.f32 %v728, %v1186
        %v1703 = vmul.f32 %v729, %v1166
        %v1704 = vmul.f32 %v730, %v1170
        %v1705 = vmul.f32 %v731, %v1174
        %v1706 = vmul.f32 %v732, %v1178
        %v1707 = vmul.f32 %v733, %v1182
        %v1708 = vmul.f32 %v734, %v1186
        %v1709 = vmul.f32 %v735, %v1166
        %v1710 = vmul.f32 %v736, %v1170
        %v1711 = vmul.f32 %v737, %v1174
        %v1712 = vmul.f32 %v738, %v1178
        %v1713 = vmul.f32 %v739, %v1182
        %v1714 = vmul.f32 %v740, %v1186
        %v1715 = vmul.f32 %v741, %v1166
        %v1716 = vmul.f32 %v742, %v1170
        %v1717 = vmul.f32 %v743, %v1174
        %v1718 = vmul.f32 %v744, %v1178
        %v1719 = vmul.f32 %v745, %v1182
        %v1720 = vmul.f32 %v746, %v1186
        %v1721 = vmul.f32 %v747, %v1166
        %v1722 = vmul.f32 %v748, %v1170
        %v1723 = vmul.f32 %v749, %v1174
        %v1724 = vmul.f32 %v750, %v1178
        %v1725 = vmul.f32 %v751, %v1182
        %v1726 = vmul.f32 %v752, %v1186
        %v1727 = vmul.f32 %v753, %v1166
        %v1728 = vmul.f32 %v754, %v1170
        %v1729 = vmul.f32 %v755, %v1174
        %v1730 = vmul.f32 %v756, %v1178
        %v1731 = vmul.f32 %v757, %v1182
        %v1732 = vmul.f32 %v758, %v1186
        %v1733 = vmul.f32 %v759, %v1166
        %v1734 = vmul.f32 %v760, %v1170
        %v1735 = vmul.f32 %v761, %v1174
        %v1736 = vmul.f32 %v762, %v1178
        %v1737 = vmul.f32 %v763, %v1182
        %v1738 = vmul.f32 %v764, %v1186
        %v1739 = vmul.f32 %v765, %v1166
        %v1740 = vmul.f32 %v766, %v1170
        %v1741 = vmul.f32 %v767, %v1174
        %v1742 = vmul.f32 %v768, %v1178
        %v1743 = vmul.f32 %v769, %v1182
        %v1744 = vmul.f32 %v770, %v1186
        %v1745 = vmul.f32 %v771, %v1166
        %v1746 = vmul.f32 %v772, %v1170
        %v1747 = vmul.f32 %v773, %v1174
        %v1748 = vmul.f32 %v774, %v1178
        %v1749 = vmul.f32 %v775, %v1182
        %v1750 = vmul.f32 %v776, %v1186
        %v1751 = vmul.f32 %v777, %v1166
        %v1752 = vmul.f32 %v778, %v1170
        %v1753 = vmul.f32 %v779, %v1174
        %v1754 = vmul.f32 %v780, %v1178
        %v1755 = vmul.f32 %v781, %v1182
        %v1756 = vmul.f32 %v782, %v1186
        %v1757 = vmul.f32 %v783, %v1166
        %v1758 = vmul.f32 %v784, %v1170
        %v1759 = vmul.f32 %v785, %v1174
        %v1760 = vmul.f32 %v786, %v1178
        %v1761 = vmul.f32 %v787, %v1182
        %v1762 = vmul.f32 %v788, %v1186
        %v1763 = vmul.f32 %v789, %v1166
        %v1764 = vmul.f32 %v790, %v1170
        %v1765 = vmul.f32 %v791, %v1174
        %v1766 = vmul.f32 %v792, %v1178
        %v1767 = vmul.f32 %v793, %v1182
        %v1768 = vmul.f32 %v794, %v1186
        %v1769 = vmul.f32 %v795, %v1166
        %v1770 = vmul.f32 %v796, %v1170
        %v1771 = vmul.f32 %v797, %v1174
        %v1772 = vmul.f32 %v798, %v1178
        %v1773 = vmul.f32 %v799, %v1182
        %v1774 = vmul.f32 %v800, %v1186
        %v1775 = vmul.f32 %v801, %v1166
        %v1776 = vmul.f32 %v802, %v1170
        %v1777 = vmul.f32 %v803, %v1174
        %v1778 = vmul.f32 %v804, %v1178
        %v1779 = vmul.f32 %v805, %v1182
        %v1780 = vmul.f32 %v806, %v1186
        %v1781 = vmul.f32 %v807, %v1166
        %v1782 = vmul.f32 %v808, %v1170
        %v1783 = vmul.f32 %v809, %v1174
        %v1784 = vmul.f32 %v810, %v1178
        %v1785 = vmul.f32 %v811, %v1182
        %v1786 = vmul.f32 %v812, %v1186
        %v1787 = vmul.f32 %v813, %v1166
        %v1788 = vmul.f32 %v814, %v1170
        %v1789 = vmul.f32 %v815, %v1174
        %v1790 = vmul.f32 %v816, %v1178
        %v1791 = vmul.f32 %v817, %v1182
        %v1792 = vmul.f32 %v818, %v1186
        %v1793 = vmul.f32 %v819, %v1166
        %v1794 = vmul.f32 %v820, %v1170
        %v1795 = vmul.f32 %v821, %v1174
        %v1796 = vmul.f32 %v822, %v1178
        %v1797 = vmul.f32 %v823, %v1182
        %v1798 = vmul.f32 %v824, %v1186
        %v1799 = vmul.f32 %v825, %v1166
        %v1800 = vmul.f32 %v826, %v1170
        %v1801 = vmul.f32 %v827, %v1174
        %v1802 = vmul.f32 %v828, %v1178
        %v1803 = vmul.f32 %v829, %v1182
        %v1804 = vmul.f32 %v830, %v1186
        %v1805 = vmul.f32 %v831, %v1166
        %v1806 = vmul.f32 %v832, %v1170
        %v1807 = vmul.f32 %v833, %v1174
        %v1808 = vmul.f32 %v834, %v1178
        %v1809 = vmul.f32 %v835, %v1182
        %v1810 = vmul.f32 %v836, %v1186
        %v1811 = vmul.f32 %v837, %v1166
        %v1812 = vmul.f32 %v838, %v1170
        %v1813 = vmul.f32 %v839, %v1174
        %v1814 = vmul.f32 %v840, %v1178
        %v1815 = vmul.f32 %v841, %v1182
        %v1816 = vmul.f32 %v842, %v1186
        %v1817 = vmul.f32 %v843, %v1166
        %v1818 = vmul.f32 %v844, %v1170
        %v1819 = vmul.f32 %v845, %v1174
        %v1820 = vmul.f32 %v846, %v1178
        %v1821 = vmul.f32 %v847, %v1182
        %v1822 = vmul.f32 %v848, %v1186
        %v1823 = vmul.f32 %v849, %v1166
        %v1824 = vmul.f32 %v850, %v1170
        %v1825 = vmul.f32 %v851, %v1174
        %v1826 = vmul.f32 %v852, %v1178
        %v1827 = vmul.f32 %v853, %v1182
        %v1828 = vmul.f32 %v854, %v1186
        %v1829 = vmul.f32 %v855, %v1166
        %v1830 = vmul.f32 %v856, %v1170
        %v1831 = vmul.f32 %v857, %v1174
        %v1832 = vmul.f32 %v858, %v1178
        %v1833 = vmul.f32 %v859, %v1182
        %v1834 = vmul.f32 %v860, %v1186
        %v1835 = vmul.f32 %v861, %v1166
        %v1836 = vmul.f32 %v862, %v1170
        %v1837 = vmul.f32 %v863, %v1174
        %v1838 = vmul.f32 %v864, %v1178
        %v1839 = vmul.f32 %v865, %v1182
        %v1840 = vmul.f32 %v866, %v1186
        %v1841 = vmul.f32 %v867, %v1166
        %v1842 = vmul.f32 %v868, %v1170
        %v1843 = vmul.f32 %v869, %v1174
        %v1844 = vmul.f32 %v870, %v1178
        %v1845 = vmul.f32 %v871, %v1182
        %v1846 = vmul.f32 %v872, %v1186
        %v1847 = vmul.f32 %v873, %v1166
        %v1848 = vmul.f32 %v874, %v1170
        %v1849 = vmul.f32 %v875, %v1174
        %v1850 = vmul.f32 %v876, %v1178
        %v1851 = vmul.f32 %v877, %v1182
        %v1852 = vmul.f32 %v878, %v1186
        %v1853 = vmul.f32 %v879, %v1166
        %v1854 = vmul.f32 %v880, %v1170
        %v1855 = vmul.f32 %v881, %v1174
        %v1856 = vmul.f32 %v882, %v1178
        %v1857 = vmul.f32 %v883, %v1182
        %v1858 = vmul.f32 %v884, %v1186
        %v1859 = vmul.f32 %v885, %v1166
        %v1860 = vmul.f32 %v886, %v1170
        %v1861 = vmul.f32 %v887, %v1174
        %v1862 = vmul.f32 %v888, %v1178
        %v1863 = vmul.f32 %v889, %v1182
        %v1864 = vmul.f32 %v890, %v1186
        %v1865 = vmul.f32 %v891, %v1166
        %v1866 = vmul.f32 %v892, %v1170
        %v1867 = vmul.f32 %v893, %v1174
        %v1868 = vmul.f32 %v894, %v1178
        %v1869 = vmul.f32 %v895, %v1182
        %v1870 = vmul.f32 %v896, %v1186
        %v1871 = vmul.f32 %v897, %v1166
        %v1872 = vmul.f32 %v898, %v1170
        %v1873 = vmul.f32 %v899, %v1174
        %v1874 = vmul.f32 %v900, %v1178
        %v1875 = vmul.f32 %v901, %v1182
        %v1876 = vmul.f32 %v902, %v1186
        %v1877 = vmul.f32 %v903, %v1166
        %v1878 = vmul.f32 %v904, %v1170
        %v1879 = vmul.f32 %v905, %v1174
        %v1880 = vmul.f32 %v906, %v1178
        %v1881 = vmul.f32 %v907, %v1182
        %v1882 = vmul.f32 %v908, %v1186
        %v1883 = vmul.f32 %v909, %v1166
        %v1884 = vmul.f32 %v910, %v1170
        %v1885 = vmul.f32 %v911, %v1174
        %v1886 = vmul.f32 %v912, %v1178
        %v1887 = vmul.f32 %v913, %v1182
        %v1888 = vmul.f32 %v914, %v1186
        %v1889 = vmul.f32 %v915, %v1166
        %v1890 = vmul.f32 %v916, %v1170
        %v1891 = vmul.f32 %v917, %v1174
        %v1892 = vmul.f32 %v918, %v1178
        %v1893 = vmul.f32 %v919, %v1182
        %v1894 = vmul.f32 %v920, %v1186
        %v1895 = vmul.f32 %v921, %v1166
        %v1896 = vmul.f32 %v922, %v1170
        %v1897 = vmul.f32 %v923, %v1174
        %v1898 = vmul.f32 %v924, %v1178
        %v1899 = vmul.f32 %v925, %v1182
        %v1900 = vmul.f32 %v926, %v1186
        %v1901 = vmul.f32 %v927, %v1166
        %v1902 = vmul.f32 %v928, %v1170
        %v1903 = vmul.f32 %v929, %v1174
        %v1904 = vmul.f32 %v930, %v1178
        %v1905 = vmul.f32 %v931, %v1182
        %v1906 = vmul.f32 %v932, %v1186
        %v1907 = vmul.f32 %v933, %v1166
        %v1908 = vmul.f32 %v934, %v1170
        %v1909 = vmul.f32 %v935, %v1174
        %v1910 = vmul.f32 %v936, %v1178
        %v1911 = vmul.f32 %v937, %v1182
        %v1912 = vmul.f32 %v938, %v1186
        %v1913 = vmul.f32 %v939, %v1166
        %v1914 = vmul.f32 %v940, %v1170
        %v1915 = vmul.f32 %v941, %v1174
        %v1916 = vmul.f32 %v942, %v1178
        %v1917 = vmul.f32 %v943, %v1182
        %v1918 = vmul.f32 %v944, %v1186
        %v1919 = vmul.f32 %v945, %v1166
        %v1920 = vmul.f32 %v946, %v1170
        %v1921 = vmul.f32 %v947, %v1174
        %v1922 = vmul.f32 %v948, %v1178
        %v1923 = vmul.f32 %v949, %v1182
        %v1924 = vmul.f32 %v950, %v1186
        %v1925 = vmul.f32 %v951, %v1166
        %v1926 = vmul.f32 %v952, %v1170
        %v1927 = vmul.f32 %v953, %v1174
        %v1928 = vmul.f32 %v954, %v1178
        %v1929 = vmul.f32 %v955, %v1182
        %v1930 = vmul.f32 %v956, %v1186
        %v1931 = vmul.f32 %v957, %v1166
        %v1932 = vmul.f32 %v958, %v1170
        %v1933 = vmul.f32 %v959, %v1174
        %v1934 = vmul.f32 %v960, %v1178
        %v1935 = vmul.f32 %v961, %v1182
        %v1936 = vmul.f32 %v962, %v1186
        %v1937 = vmul.f32 %v963, %v1166
        %v1938 = vmul.f32 %v964, %v1170
        %v1939 = vmul.f32 %v965, %v1174
        %v1940 = vmul.f32 %v966, %v1178
        %v1941 = vmul.f32 %v967, %v1182
        %v1942 = vmul.f32 %v968, %v1186
        %v1943 = vmul.f32 %v969, %v1166
        %v1944 = vmul.f32 %v970, %v1170
        %v1945 = vmul.f32 %v971, %v1174
        %v1946 = vmul.f32 %v972, %v1178
        %v1947 = vmul.f32 %v973, %v1182
        %v1948 = vmul.f32 %v974, %v1186
        %v1949 = vmul.f32 %v975, %v1166
        %v1950 = vmul.f32 %v976, %v1170
        %v1951 = vmul.f32 %v977, %v1174
        %v1952 = vmul.f32 %v978, %v1178
        %v1953 = vmul.f32 %v979, %v1182
        %v1954 = vmul.f32 %v980, %v1186
        %v1955 = vmul.f32 %v981, %v1166
        %v1956 = vmul.f32 %v982, %v1170
        %v1957 = vmul.f32 %v983, %v1174
        %v1958 = vmul.f32 %v984, %v1178
        %v1959 = vmul.f32 %v985, %v1182
        %v1960 = vmul.f32 %v986, %v1186
        %v1961 = vmul.f32 %v987, %v1166
        %v1962 = vmul.f32 %v988, %v1170
        %v1963 = vmul.f32 %v989, %v1174
        %v1964 = vmul.f32 %v990, %v1178
        %v1965 = vmul.f32 %v991, %v1182
        %v1966 = vmul.f32 %v992, %v1186
        %v1967 = vmul.f32 %v993, %v1166
        %v1968 = vmul.f32 %v994, %v1170
        %v1969 = vmul.f32 %v995, %v1174
        %v1970 = vmul.f32 %v996, %v1178
        %v1971 = vmul.f32 %v997, %v1182
        %v1972 = vmul.f32 %v998, %v1186
        %v1973 = vmul.f32 %v999, %v1166
        %v1974 = vmul.f32 %v1000, %v1170
        %v1975 = vmul.f32 %v1001, %v1174
        %v1976 = vmul.f32 %v1002, %v1178
        %v1977 = vmul.f32 %v1003, %v1182
        %v1978 = vmul.f32 %v1004, %v1186
        %v1979 = vmul.f32 %v1005, %v1166
        %v1980 = vmul.f32 %v1006, %v1170
        %v1981 = vmul.f32 %v1007, %v1174
        %v1982 = vmul.f32 %v1008, %v1178
        %v1983 = vmul.f32 %v1009, %v1182
        %v1984 = vmul.f32 %v1010, %v1186
        %v1985 = vmul.f32 %v1011, %v1166
        %v1986 = vmul.f32 %v1012, %v1170
        %v1987 = vmul.f32 %v1013, %v1174
        %v1988 = vmul.f32 %v1014, %v1178
        %v1989 = vmul.f32 %v1015, %v1182
        %v1990 = vmul.f32 %v1016, %v1186
        %v1991 = vmul.f32 %v1017, %v1166
        %v1992 = vmul.f32 %v1018, %v1170
        %v1993 = vmul.f32 %v1019, %v1174
        %v1994 = vmul.f32 %v1020, %v1178
        %v1995 = vmul.f32 %v1021, %v1182
        %v1996 = vmul.f32 %v1022, %v1186
        %v1997 = vmul.f32 %v1023, %v1166
        %v1998 = vmul.f32 %v1024, %v1170
        %v1999 = vmul.f32 %v1025, %v1174
        %v2000 = vmul.f32 %v1026, %v1178
        %v2001 = vmul.f32 %v1027, %v1182
        %v2002 = vmul.f32 %v1028, %v1186
        %v2003 = vmul.f32 %v1029, %v1166
        %v2004 = vmul.f32 %v1030, %v1170
        %v2005 = vmul.f32 %v1031, %v1174
        %v2006 = vmul.f32 %v1032, %v1178
        %v2007 = vmul.f32 %v1033, %v1182
        %v2008 = vmul.f32 %v1034, %v1186
        %v2009 = vmul.f32 %v1035, %v1166
        %v2010 = vmul.f32 %v1036, %v1170
        %v2011 = vmul.f32 %v1037, %v1174
        %v2012 = vmul.f32 %v1038, %v1178
        %v2013 = vmul.f32 %v1039, %v1182
        %v2014 = vmul.f32 %v1040, %v1186
        %v2015 = vmul.f32 %v1041, %v1166
        %v2016 = vmul.f32 %v1042, %v1170
        %v2017 = vmul.f32 %v1043, %v1174
        %v2018 = vmul.f32 %v1044, %v1178
        %v2019 = vmul.f32 %v1045, %v1182
        %v2020 = vmul.f32 %v1046, %v1186
        %v2021 = vmul.f32 %v1047, %v1166
        %v2022 = vmul.f32 %v1048, %v1170
        %v2023 = vmul.f32 %v1049, %v1174
        %v2024 = vmul.f32 %v1050, %v1178
        %v2025 = vmul.f32 %v1051, %v1182
        %v2026 = vmul.f32 %v1052, %v1186
        %v2027 = vmul.f32 %v1053, %v1166
        %v2028 = vmul.f32 %v1054, %v1170
        %v2029 = vmul.f32 %v1055, %v1174
        %v2030 = vmul.f32 %v1056, %v1178
        %v2031 = vmul.f32 %v1057, %v1182
        %v2032 = vmul.f32 %v1058, %v1186
        %v2033 = vmul.f32 %v1059, %v1166
        %v2034 = vmul.f32 %v1060, %v1170
        %v2035 = vmul.f32 %v1061, %v1174
        %v2036 = vmul.f32 %v1062, %v1178
        %v2037 = vmul.f32 %v1063, %v1182
        %v2038 = vmul.f32 %v1064, %v1186
        %v2039 = vmul.f32 %v1065, %v1166
        %v2040 = vmul.f32 %v1066, %v1170
        %v2041 = vmul.f32 %v1067, %v1174
        %v2042 = vmul.f32 %v1068, %v1178
        %v2043 = vmul.f32 %v1069, %v1182
        %v2044 = vmul.f32 %v1070, %v1186
        %v2045 = vmul.f32 %v1071, %v1166
        %v2046 = vmul.f32 %v1072, %v1170
        %v2047 = vmul.f32 %v1073, %v1174
        %v2048 = vmul.f32 %v1074, %v1178
        %v2049 = vmul.f32 %v1075, %v1182
        %v2050 = vmul.f32 %v1076, %v1186
        %v2051 = vmul.f32 %v1077, %v1166
        %v2052 = vmul.f32 %v1078, %v1170
        %v2053 = vmul.f32 %v1079, %v1174
        %v2054 = vmul.f32 %v1080, %v1178
        %v2055 = vmul.f32 %v1081, %v1182
        %v2056 = vmul.f32 %v1082, %v1186
        %v2057 = vmul.f32 %v1083, %v1166
        %v2058 = vmul.f32 %v1084, %v1170
        %v2059 = vmul.f32 %v1085, %v1174
        %v2060 = vmul.f32 %v1086, %v1178
        %v2061 = vmul.f32 %v1087, %v1182
        %v2062 = vmul.f32 %v1088, %v1186
        %v2063 = vmul.f32 %v1089, %v1166
        %v2064 = vmul.f32 %v1090, %v1170
        %v2065 = vmul.f32 %v1091, %v1174
        %v2066 = vmul.f32 %v1092, %v1178
        %v2067 = vmul.f32 %v1093, %v1182
        %v2068 = vmul.f32 %v1094, %v1186
        %v2069 = vmul.f32 %v1095, %v1166
        %v2070 = vmul.f32 %v1096, %v1170
        %v2071 = vmul.f32 %v1097, %v1174
        %v2072 = vmul.f32 %v1098, %v1178
        %v2073 = vmul.f32 %v1099, %v1182
        %v2074 = vmul.f32 %v1100, %v1186
        %v2075 = vmul.f32 %v1101, %v1166
        %v2076 = vmul.f32 %v1102, %v1170
        %v2077 = vmul.f32 %v1103, %v1174
        %v2078 = vmul.f32 %v1104, %v1178
        %v2079 = vmul.f32 %v1105, %v1182
        %v2080 = vmul.f32 %v1106, %v1186
        %v2081 = vmul.f32 %v1107, %v1166
        %v2082 = vmul.f32 %v1108, %v1170
        %v2083 = vmul.f32 %v1109, %v1174
        %v2084 = vmul.f32 %v1110, %v1178
        %v2085 = vmul.f32 %v1111, %v1182
        %v2086 = vmul.f32 %v1112, %v1186
        %v2087 = vmul.f32 %v1113, %v1166
        %v2088 = vmul.f32 %v1114, %v1170
        %v2089 = vmul.f32 %v1115, %v1174
        %v2090 = vmul.f32 %v1116, %v1178
        %v2091 = vmul.f32 %v1117, %v1182
        %v2092 = vmul.f32 %v1118, %v1186
        %v2093 = vmul.f32 %v1119, %v1166
        %v2094 = vmul.f32 %v1120, %v1170
        %v2095 = vmul.f32 %v1121, %v1174
        %v2096 = vmul.f32 %v1122, %v1178
        %v2097 = vmul.f32 %v1123, %v1182
        %v2098 = vmul.f32 %v1124, %v1186
        %v2099 = vmul.f32 %v1125, %v1166
        %v2100 = vmul.f32 %v1126, %v1170
        %v2101 = vmul.f32 %v1127, %v1174
        %v2102 = vmul.f32 %v1128, %v1178
        %v2103 = vmul.f32 %v1129, %v1182
        %v2104 = vmul.f32 %v1130, %v1186
        %v2105 = vmul.f32 %v1131, %v1166
        %v2106 = vmul.f32 %v1132, %v1170
        %v2107 = vmul.f32 %v1133, %v1174
        %v2108 = vmul.f32 %v1134, %v1178
        %v2109 = vmul.f32 %v1135, %v1182
        %v2110 = vmul.f32 %v1136, %v1186
        %v2111 = vmul.f32 %v1137, %v1166
        %v2112 = vmul.f32 %v1138, %v1170
        %v2113 = vmul.f32 %v1139, %v1174
        %v2114 = vmul.f32 %v1140, %v1178
        %v2115 = vmul.f32 %v1141, %v1182
        %v2116 = vmul.f32 %v1142, %v1186
        %v2117 = vmul.f32 %v1143, %v1166
        %v2118 = vmul.f32 %v1144, %v1170
        %v2119 = vmul.f32 %v1145, %v1174
        %v2120 = vmul.f32 %v1146, %v1178
        %v2121 = vmul.f32 %v1147, %v1182
        %v2122 = vmul.f32 %v1148, %v1186
        %v2123 = vmul.f32 %v1149, %v1166
        %v2124 = vmul.f32 %v1150, %v1170
        %v2125 = vmul.f32 %v1151, %v1174
        %v2126 = vmul.f32 %v1152, %v1178
        %v2127 = vmul.f32 %v1153, %v1182
        %v2128 = vmul.f32 %v1154, %v1186
        %v2129 = vmul.f32 %v1155, %v1166
        %v2130 = vmul.f32 %v1156, %v1170
        %v2131 = vmul.f32 %v1157, %v1174
        %v2132 = vmul.f32 %v1158, %v1178
        %v2133 = vmul.f32 %v1159, %v1182
        %v2134 = vmul.f32 %v1160, %v1186
        %v2135 = vadd.f32 %v1193, %v1194
        %v2136 = vadd.f32 %v2135, %v1195
        %v2137 = vadd.f32 %v2136, %v1196
        %v2138 = vadd.f32 %v2137, %v1197
        %v2139 = vadd.f32 %v2138, %v1198
        %2140 = vadd.xlane.f32.xlu0 %v2139
        %v2141 = vpop.xlane.xlu0 %2140
        %v2142 = vadd.f32 %v1199, %v1200
        %v2143 = vadd.f32 %v2142, %v1201
        %v2144 = vadd.f32 %v2143, %v1202
        %v2145 = vadd.f32 %v2144, %v1203
        %v2146 = vadd.f32 %v2145, %v1204
        %2147 = vadd.xlane.f32.xlu0 %v2146
        %v2148 = vpop.xlane.xlu0 %2147
        %v2149 = vadd.f32 %v1205, %v1206
        %v2150 = vadd.f32 %v2149, %v1207
        %v2151 = vadd.f32 %v2150, %v1208
        %v2152 = vadd.f32 %v2151, %v1209
        %v2153 = vadd.f32 %v2152, %v1210
        %2154 = vadd.xlane.f32.xlu0 %v2153
        %v2155 = vpop.xlane.xlu0 %2154
        %v2156 = vadd.f32 %v1211, %v1212
        %v2157 = vadd.f32 %v2156, %v1213
        %v2158 = vadd.f32 %v2157, %v1214
        %v2159 = vadd.f32 %v2158, %v1215
        %v2160 = vadd.f32 %v2159, %v1216
        %2161 = vadd.xlane.f32.xlu0 %v2160
        %v2162 = vpop.xlane.xlu0 %2161
        %v2163 = vadd.f32 %v1217, %v1218
        %v2164 = vadd.f32 %v2163, %v1219
        %v2165 = vadd.f32 %v2164, %v1220
        %v2166 = vadd.f32 %v2165, %v1221
        %v2167 = vadd.f32 %v2166, %v1222
        %2168 = vadd.xlane.f32.xlu0 %v2167
        %v2169 = vpop.xlane.xlu0 %2168
        %v2170 = vadd.f32 %v1223, %v1224
        %v2171 = vadd.f32 %v2170, %v1225
        %v2172 = vadd.f32 %v2171, %v1226
        %v2173 = vadd.f32 %v2172, %v1227
        %v2174 = vadd.f32 %v2173, %v1228
        %2175 = vadd.xlane.f32.xlu0 %v2174
        %v2176 = vpop.xlane.xlu0 %2175
        %v2177 = vadd.f32 %v1229, %v1230
        %v2178 = vadd.f32 %v2177, %v1231
        %v2179 = vadd.f32 %v2178, %v1232
        %v2180 = vadd.f32 %v2179, %v1233
        %v2181 = vadd.f32 %v2180, %v1234
        %2182 = vadd.xlane.f32.xlu0 %v2181
        %v2183 = vpop.xlane.xlu0 %2182
        %v2184 = vadd.f32 %v1235, %v1236
        %v2185 = vadd.f32 %v2184, %v1237
        %v2186 = vadd.f32 %v2185, %v1238
        %v2187 = vadd.f32 %v2186, %v1239
        %v2188 = vadd.f32 %v2187, %v1240
        %2189 = vadd.xlane.f32.xlu0 %v2188
        %v2190 = vpop.xlane.xlu0 %2189
        %v2191 = vadd.f32 %v1241, %v1242
        %v2192 = vadd.f32 %v2191, %v1243
        %v2193 = vadd.f32 %v2192, %v1244
        %v2194 = vadd.f32 %v2193, %v1245
        %v2195 = vadd.f32 %v2194, %v1246
        %2196 = vadd.xlane.f32.xlu0 %v2195
        %v2197 = vpop.xlane.xlu0 %2196
        %v2198 = vadd.f32 %v1247, %v1248
        %v2199 = vadd.f32 %v2198, %v1249
        %v2200 = vadd.f32 %v2199, %v1250
        %v2201 = vadd.f32 %v2200, %v1251
        %v2202 = vadd.f32 %v2201, %v1252
        %2203 = vadd.xlane.f32.xlu0 %v2202
        %v2204 = vpop.xlane.xlu0 %2203
        %v2205 = vadd.f32 %v1253, %v1254
        %v2206 = vadd.f32 %v2205, %v1255
        %v2207 = vadd.f32 %v2206, %v1256
        %v2208 = vadd.f32 %v2207, %v1257
        %v2209 = vadd.f32 %v2208, %v1258
        %2210 = vadd.xlane.f32.xlu0 %v2209
        %v2211 = vpop.xlane.xlu0 %2210
        %v2212 = vadd.f32 %v1259, %v1260
        %v2213 = vadd.f32 %v2212, %v1261
        %v2214 = vadd.f32 %v2213, %v1262
        %v2215 = vadd.f32 %v2214, %v1263
        %v2216 = vadd.f32 %v2215, %v1264
        %2217 = vadd.xlane.f32.xlu0 %v2216
        %v2218 = vpop.xlane.xlu0 %2217
        %v2219 = vadd.f32 %v1265, %v1266
        %v2220 = vadd.f32 %v2219, %v1267
        %v2221 = vadd.f32 %v2220, %v1268
        %v2222 = vadd.f32 %v2221, %v1269
        %v2223 = vadd.f32 %v2222, %v1270
        %2224 = vadd.xlane.f32.xlu0 %v2223
        %v2225 = vpop.xlane.xlu0 %2224
        %v2226 = vadd.f32 %v1271, %v1272
        %v2227 = vadd.f32 %v2226, %v1273
        %v2228 = vadd.f32 %v2227, %v1274
        %v2229 = vadd.f32 %v2228, %v1275
        %v2230 = vadd.f32 %v2229, %v1276
        %2231 = vadd.xlane.f32.xlu0 %v2230
        %v2232 = vpop.xlane.xlu0 %2231
        %v2233 = vadd.f32 %v1277, %v1278
        %v2234 = vadd.f32 %v2233, %v1279
        %v2235 = vadd.f32 %v2234, %v1280
        %v2236 = vadd.f32 %v2235, %v1281
        %v2237 = vadd.f32 %v2236, %v1282
        %2238 = vadd.xlane.f32.xlu0 %v2237
        %v2239 = vpop.xlane.xlu0 %2238
        %v2240 = vadd.f32 %v1283, %v1284
        %v2241 = vadd.f32 %v2240, %v1285
        %v2242 = vadd.f32 %v2241, %v1286
        %v2243 = vadd.f32 %v2242, %v1287
        %v2244 = vadd.f32 %v2243, %v1288
        %2245 = vadd.xlane.f32.xlu0 %v2244
        %v2246 = vpop.xlane.xlu0 %2245
        %v2247 = vadd.f32 %v1289, %v1290
        %v2248 = vadd.f32 %v2247, %v1291
        %v2249 = vadd.f32 %v2248, %v1292
        %v2250 = vadd.f32 %v2249, %v1293
        %v2251 = vadd.f32 %v2250, %v1294
        %2252 = vadd.xlane.f32.xlu0 %v2251
        %v2253 = vpop.xlane.xlu0 %2252
        %v2254 = vadd.f32 %v1295, %v1296
        %v2255 = vadd.f32 %v2254, %v1297
        %v2256 = vadd.f32 %v2255, %v1298
        %v2257 = vadd.f32 %v2256, %v1299
        %v2258 = vadd.f32 %v2257, %v1300
        %2259 = vadd.xlane.f32.xlu0 %v2258
        %v2260 = vpop.xlane.xlu0 %2259
        %v2261 = vadd.f32 %v1301, %v1302
        %v2262 = vadd.f32 %v2261, %v1303
        %v2263 = vadd.f32 %v2262, %v1304
        %v2264 = vadd.f32 %v2263, %v1305
        %v2265 = vadd.f32 %v2264, %v1306
        %2266 = vadd.xlane.f32.xlu0 %v2265
        %v2267 = vpop.xlane.xlu0 %2266
        %v2268 = vadd.f32 %v1307, %v1308
        %v2269 = vadd.f32 %v2268, %v1309
        %v2270 = vadd.f32 %v2269, %v1310
        %v2271 = vadd.f32 %v2270, %v1311
        %v2272 = vadd.f32 %v2271, %v1312
        %2273 = vadd.xlane.f32.xlu0 %v2272
        %v2274 = vpop.xlane.xlu0 %2273
        %v2275 = vadd.f32 %v1313, %v1314
        %v2276 = vadd.f32 %v2275, %v1315
        %v2277 = vadd.f32 %v2276, %v1316
        %v2278 = vadd.f32 %v2277, %v1317
        %v2279 = vadd.f32 %v2278, %v1318
        %2280 = vadd.xlane.f32.xlu0 %v2279
        %v2281 = vpop.xlane.xlu0 %2280
        %v2282 = vadd.f32 %v1319, %v1320
        %v2283 = vadd.f32 %v2282, %v1321
        %v2284 = vadd.f32 %v2283, %v1322
        %v2285 = vadd.f32 %v2284, %v1323
        %v2286 = vadd.f32 %v2285, %v1324
        %2287 = vadd.xlane.f32.xlu0 %v2286
        %v2288 = vpop.xlane.xlu0 %2287
        %v2289 = vadd.f32 %v1325, %v1326
        %v2290 = vadd.f32 %v2289, %v1327
        %v2291 = vadd.f32 %v2290, %v1328
        %v2292 = vadd.f32 %v2291, %v1329
        %v2293 = vadd.f32 %v2292, %v1330
        %2294 = vadd.xlane.f32.xlu0 %v2293
        %v2295 = vpop.xlane.xlu0 %2294
        %v2296 = vadd.f32 %v1331, %v1332
        %v2297 = vadd.f32 %v2296, %v1333
        %v2298 = vadd.f32 %v2297, %v1334
        %v2299 = vadd.f32 %v2298, %v1335
        %v2300 = vadd.f32 %v2299, %v1336
        %2301 = vadd.xlane.f32.xlu0 %v2300
        %v2302 = vpop.xlane.xlu0 %2301
        %v2303 = vadd.f32 %v1337, %v1338
        %v2304 = vadd.f32 %v2303, %v1339
        %v2305 = vadd.f32 %v2304, %v1340
        %v2306 = vadd.f32 %v2305, %v1341
        %v2307 = vadd.f32 %v2306, %v1342
        %2308 = vadd.xlane.f32.xlu0 %v2307
        %v2309 = vpop.xlane.xlu0 %2308
        %v2310 = vadd.f32 %v1343, %v1344
        %v2311 = vadd.f32 %v2310, %v1345
        %v2312 = vadd.f32 %v2311, %v1346
        %v2313 = vadd.f32 %v2312, %v1347
        %v2314 = vadd.f32 %v2313, %v1348
        %2315 = vadd.xlane.f32.xlu0 %v2314
        %v2316 = vpop.xlane.xlu0 %2315
        %v2317 = vadd.f32 %v1349, %v1350
        %v2318 = vadd.f32 %v2317, %v1351
        %v2319 = vadd.f32 %v2318, %v1352
        %v2320 = vadd.f32 %v2319, %v1353
        %v2321 = vadd.f32 %v2320, %v1354
        %2322 = vadd.xlane.f32.xlu0 %v2321
        %v2323 = vpop.xlane.xlu0 %2322
        %v2324 = vadd.f32 %v1355, %v1356
        %v2325 = vadd.f32 %v2324, %v1357
        %v2326 = vadd.f32 %v2325, %v1358
        %v2327 = vadd.f32 %v2326, %v1359
        %v2328 = vadd.f32 %v2327, %v1360
        %2329 = vadd.xlane.f32.xlu0 %v2328
        %v2330 = vpop.xlane.xlu0 %2329
        %v2331 = vadd.f32 %v1361, %v1362
        %v2332 = vadd.f32 %v2331, %v1363
        %v2333 = vadd.f32 %v2332, %v1364
        %v2334 = vadd.f32 %v2333, %v1365
        %v2335 = vadd.f32 %v2334, %v1366
        %2336 = vadd.xlane.f32.xlu0 %v2335
        %v2337 = vpop.xlane.xlu0 %2336
        %v2338 = vadd.f32 %v1367, %v1368
        %v2339 = vadd.f32 %v2338, %v1369
        %v2340 = vadd.f32 %v2339, %v1370
        %v2341 = vadd.f32 %v2340, %v1371
        %v2342 = vadd.f32 %v2341, %v1372
        %2343 = vadd.xlane.f32.xlu0 %v2342
        %v2344 = vpop.xlane.xlu0 %2343
        %v2345 = vadd.f32 %v1373, %v1374
        %v2346 = vadd.f32 %v2345, %v1375
        %v2347 = vadd.f32 %v2346, %v1376
        %v2348 = vadd.f32 %v2347, %v1377
        %v2349 = vadd.f32 %v2348, %v1378
        %2350 = vadd.xlane.f32.xlu0 %v2349
        %v2351 = vpop.xlane.xlu0 %2350
        %v2352 = vadd.f32 %v1379, %v1380
        %v2353 = vadd.f32 %v2352, %v1381
        %v2354 = vadd.f32 %v2353, %v1382
        %v2355 = vadd.f32 %v2354, %v1383
        %v2356 = vadd.f32 %v2355, %v1384
        %2357 = vadd.xlane.f32.xlu0 %v2356
        %v2358 = vpop.xlane.xlu0 %2357
        %v2359 = vadd.f32 %v1385, %v1386
        %v2360 = vadd.f32 %v2359, %v1387
        %v2361 = vadd.f32 %v2360, %v1388
        %v2362 = vadd.f32 %v2361, %v1389
        %v2363 = vadd.f32 %v2362, %v1390
        %2364 = vadd.xlane.f32.xlu0 %v2363
        %v2365 = vpop.xlane.xlu0 %2364
        %v2366 = vadd.f32 %v1391, %v1392
        %v2367 = vadd.f32 %v2366, %v1393
        %v2368 = vadd.f32 %v2367, %v1394
        %v2369 = vadd.f32 %v2368, %v1395
        %v2370 = vadd.f32 %v2369, %v1396
        %2371 = vadd.xlane.f32.xlu0 %v2370
        %v2372 = vpop.xlane.xlu0 %2371
        %v2373 = vadd.f32 %v1397, %v1398
        %v2374 = vadd.f32 %v2373, %v1399
        %v2375 = vadd.f32 %v2374, %v1400
        %v2376 = vadd.f32 %v2375, %v1401
        %v2377 = vadd.f32 %v2376, %v1402
        %2378 = vadd.xlane.f32.xlu0 %v2377
        %v2379 = vpop.xlane.xlu0 %2378
        %v2380 = vadd.f32 %v1403, %v1404
        %v2381 = vadd.f32 %v2380, %v1405
        %v2382 = vadd.f32 %v2381, %v1406
        %v2383 = vadd.f32 %v2382, %v1407
        %v2384 = vadd.f32 %v2383, %v1408
        %2385 = vadd.xlane.f32.xlu0 %v2384
        %v2386 = vpop.xlane.xlu0 %2385
        %v2387 = vadd.f32 %v1409, %v1410
        %v2388 = vadd.f32 %v2387, %v1411
        %v2389 = vadd.f32 %v2388, %v1412
        %v2390 = vadd.f32 %v2389, %v1413
        %v2391 = vadd.f32 %v2390, %v1414
        %2392 = vadd.xlane.f32.xlu0 %v2391
        %v2393 = vpop.xlane.xlu0 %2392
        %v2394 = vadd.f32 %v1415, %v1416
        %v2395 = vadd.f32 %v2394, %v1417
        %v2396 = vadd.f32 %v2395, %v1418
        %v2397 = vadd.f32 %v2396, %v1419
        %v2398 = vadd.f32 %v2397, %v1420
        %2399 = vadd.xlane.f32.xlu0 %v2398
        %v2400 = vpop.xlane.xlu0 %2399
        %v2401 = vadd.f32 %v1421, %v1422
        %v2402 = vadd.f32 %v2401, %v1423
        %v2403 = vadd.f32 %v2402, %v1424
        %v2404 = vadd.f32 %v2403, %v1425
        %v2405 = vadd.f32 %v2404, %v1426
        %2406 = vadd.xlane.f32.xlu0 %v2405
        %v2407 = vpop.xlane.xlu0 %2406
        %v2408 = vadd.f32 %v1427, %v1428
        %v2409 = vadd.f32 %v2408, %v1429
        %v2410 = vadd.f32 %v2409, %v1430
        %v2411 = vadd.f32 %v2410, %v1431
        %v2412 = vadd.f32 %v2411, %v1432
        %2413 = vadd.xlane.f32.xlu0 %v2412
        %v2414 = vpop.xlane.xlu0 %2413
        %v2415 = vadd.f32 %v1433, %v1434
        %v2416 = vadd.f32 %v2415, %v1435
        %v2417 = vadd.f32 %v2416, %v1436
        %v2418 = vadd.f32 %v2417, %v1437
        %v2419 = vadd.f32 %v2418, %v1438
        %2420 = vadd.xlane.f32.xlu0 %v2419
        %v2421 = vpop.xlane.xlu0 %2420
        %v2422 = vadd.f32 %v1439, %v1440
        %v2423 = vadd.f32 %v2422, %v1441
        %v2424 = vadd.f32 %v2423, %v1442
        %v2425 = vadd.f32 %v2424, %v1443
        %v2426 = vadd.f32 %v2425, %v1444
        %2427 = vadd.xlane.f32.xlu0 %v2426
        %v2428 = vpop.xlane.xlu0 %2427
        %v2429 = vadd.f32 %v1445, %v1446
        %v2430 = vadd.f32 %v2429, %v1447
        %v2431 = vadd.f32 %v2430, %v1448
        %v2432 = vadd.f32 %v2431, %v1449
        %v2433 = vadd.f32 %v2432, %v1450
        %2434 = vadd.xlane.f32.xlu0 %v2433
        %v2435 = vpop.xlane.xlu0 %2434
        %v2436 = vadd.f32 %v1451, %v1452
        %v2437 = vadd.f32 %v2436, %v1453
        %v2438 = vadd.f32 %v2437, %v1454
        %v2439 = vadd.f32 %v2438, %v1455
        %v2440 = vadd.f32 %v2439, %v1456
        %2441 = vadd.xlane.f32.xlu0 %v2440
        %v2442 = vpop.xlane.xlu0 %2441
        %v2443 = vadd.f32 %v1457, %v1458
        %v2444 = vadd.f32 %v2443, %v1459
        %v2445 = vadd.f32 %v2444, %v1460
        %v2446 = vadd.f32 %v2445, %v1461
        %v2447 = vadd.f32 %v2446, %v1462
        %2448 = vadd.xlane.f32.xlu0 %v2447
        %v2449 = vpop.xlane.xlu0 %2448
        %v2450 = vadd.f32 %v1463, %v1464
        %v2451 = vadd.f32 %v2450, %v1465
        %v2452 = vadd.f32 %v2451, %v1466
        %v2453 = vadd.f32 %v2452, %v1467
        %v2454 = vadd.f32 %v2453, %v1468
        %2455 = vadd.xlane.f32.xlu0 %v2454
        %v2456 = vpop.xlane.xlu0 %2455
        %v2457 = vadd.f32 %v1469, %v1470
        %v2458 = vadd.f32 %v2457, %v1471
        %v2459 = vadd.f32 %v2458, %v1472
        %v2460 = vadd.f32 %v2459, %v1473
        %v2461 = vadd.f32 %v2460, %v1474
        %2462 = vadd.xlane.f32.xlu0 %v2461
        %v2463 = vpop.xlane.xlu0 %2462
        %v2464 = vadd.f32 %v1475, %v1476
        %v2465 = vadd.f32 %v2464, %v1477
        %v2466 = vadd.f32 %v2465, %v1478
        %v2467 = vadd.f32 %v2466, %v1479
        %v2468 = vadd.f32 %v2467, %v1480
        %2469 = vadd.xlane.f32.xlu0 %v2468
        %v2470 = vpop.xlane.xlu0 %2469
        %v2471 = vadd.f32 %v1481, %v1482
        %v2472 = vadd.f32 %v2471, %v1483
        %v2473 = vadd.f32 %v2472, %v1484
        %v2474 = vadd.f32 %v2473, %v1485
        %v2475 = vadd.f32 %v2474, %v1486
        %2476 = vadd.xlane.f32.xlu0 %v2475
        %v2477 = vpop.xlane.xlu0 %2476
        %v2478 = vadd.f32 %v1487, %v1488
        %v2479 = vadd.f32 %v2478, %v1489
        %v2480 = vadd.f32 %v2479, %v1490
        %v2481 = vadd.f32 %v2480, %v1491
        %v2482 = vadd.f32 %v2481, %v1492
        %2483 = vadd.xlane.f32.xlu0 %v2482
        %v2484 = vpop.xlane.xlu0 %2483
        %v2485 = vadd.f32 %v1493, %v1494
        %v2486 = vadd.f32 %v2485, %v1495
        %v2487 = vadd.f32 %v2486, %v1496
        %v2488 = vadd.f32 %v2487, %v1497
        %v2489 = vadd.f32 %v2488, %v1498
        %2490 = vadd.xlane.f32.xlu0 %v2489
        %v2491 = vpop.xlane.xlu0 %2490
        %v2492 = vadd.f32 %v1499, %v1500
        %v2493 = vadd.f32 %v2492, %v1501
        %v2494 = vadd.f32 %v2493, %v1502
        %v2495 = vadd.f32 %v2494, %v1503
        %v2496 = vadd.f32 %v2495, %v1504
        %2497 = vadd.xlane.f32.xlu0 %v2496
        %v2498 = vpop.xlane.xlu0 %2497
        %v2499 = vadd.f32 %v1505, %v1506
        %v2500 = vadd.f32 %v2499, %v1507
        %v2501 = vadd.f32 %v2500, %v1508
        %v2502 = vadd.f32 %v2501, %v1509
        %v2503 = vadd.f32 %v2502, %v1510
        %2504 = vadd.xlane.f32.xlu0 %v2503
        %v2505 = vpop.xlane.xlu0 %2504
        %v2506 = vadd.f32 %v1511, %v1512
        %v2507 = vadd.f32 %v2506, %v1513
        %v2508 = vadd.f32 %v2507, %v1514
        %v2509 = vadd.f32 %v2508, %v1515
        %v2510 = vadd.f32 %v2509, %v1516
        %2511 = vadd.xlane.f32.xlu0 %v2510
        %v2512 = vpop.xlane.xlu0 %2511
        %v2513 = vadd.f32 %v1517, %v1518
        %v2514 = vadd.f32 %v2513, %v1519
        %v2515 = vadd.f32 %v2514, %v1520
        %v2516 = vadd.f32 %v2515, %v1521
        %v2517 = vadd.f32 %v2516, %v1522
        %2518 = vadd.xlane.f32.xlu0 %v2517
        %v2519 = vpop.xlane.xlu0 %2518
        %v2520 = vadd.f32 %v1523, %v1524
        %v2521 = vadd.f32 %v2520, %v1525
        %v2522 = vadd.f32 %v2521, %v1526
        %v2523 = vadd.f32 %v2522, %v1527
        %v2524 = vadd.f32 %v2523, %v1528
        %2525 = vadd.xlane.f32.xlu0 %v2524
        %v2526 = vpop.xlane.xlu0 %2525
        %v2527 = vadd.f32 %v1529, %v1530
        %v2528 = vadd.f32 %v2527, %v1531
        %v2529 = vadd.f32 %v2528, %v1532
        %v2530 = vadd.f32 %v2529, %v1533
        %v2531 = vadd.f32 %v2530, %v1534
        %2532 = vadd.xlane.f32.xlu0 %v2531
        %v2533 = vpop.xlane.xlu0 %2532
        %v2534 = vadd.f32 %v1535, %v1536
        %v2535 = vadd.f32 %v2534, %v1537
        %v2536 = vadd.f32 %v2535, %v1538
        %v2537 = vadd.f32 %v2536, %v1539
        %v2538 = vadd.f32 %v2537, %v1540
        %2539 = vadd.xlane.f32.xlu0 %v2538
        %v2540 = vpop.xlane.xlu0 %2539
        %v2541 = vadd.f32 %v1541, %v1542
        %v2542 = vadd.f32 %v2541, %v1543
        %v2543 = vadd.f32 %v2542, %v1544
        %v2544 = vadd.f32 %v2543, %v1545
        %v2545 = vadd.f32 %v2544, %v1546
        %2546 = vadd.xlane.f32.xlu0 %v2545
        %v2547 = vpop.xlane.xlu0 %2546
        %v2548 = vadd.f32 %v1547, %v1548
        %v2549 = vadd.f32 %v2548, %v1549
        %v2550 = vadd.f32 %v2549, %v1550
        %v2551 = vadd.f32 %v2550, %v1551
        %v2552 = vadd.f32 %v2551, %v1552
        %2553 = vadd.xlane.f32.xlu0 %v2552
        %v2554 = vpop.xlane.xlu0 %2553
        %v2555 = vadd.f32 %v1553, %v1554
        %v2556 = vadd.f32 %v2555, %v1555
        %v2557 = vadd.f32 %v2556, %v1556
        %v2558 = vadd.f32 %v2557, %v1557
        %v2559 = vadd.f32 %v2558, %v1558
        %2560 = vadd.xlane.f32.xlu0 %v2559
        %v2561 = vpop.xlane.xlu0 %2560
        %v2562 = vadd.f32 %v1559, %v1560
        %v2563 = vadd.f32 %v2562, %v1561
        %v2564 = vadd.f32 %v2563, %v1562
        %v2565 = vadd.f32 %v2564, %v1563
        %v2566 = vadd.f32 %v2565, %v1564
        %2567 = vadd.xlane.f32.xlu0 %v2566
        %v2568 = vpop.xlane.xlu0 %2567
        %v2569 = vadd.f32 %v1565, %v1566
        %v2570 = vadd.f32 %v2569, %v1567
        %v2571 = vadd.f32 %v2570, %v1568
        %v2572 = vadd.f32 %v2571, %v1569
        %v2573 = vadd.f32 %v2572, %v1570
        %2574 = vadd.xlane.f32.xlu0 %v2573
        %v2575 = vpop.xlane.xlu0 %2574
        %v2576 = vadd.f32 %v1571, %v1572
        %v2577 = vadd.f32 %v2576, %v1573
        %v2578 = vadd.f32 %v2577, %v1574
        %v2579 = vadd.f32 %v2578, %v1575
        %v2580 = vadd.f32 %v2579, %v1576
        %2581 = vadd.xlane.f32.xlu0 %v2580
        %v2582 = vpop.xlane.xlu0 %2581
        %v2583 = vadd.f32 %v1577, %v1578
        %v2584 = vadd.f32 %v2583, %v1579
        %v2585 = vadd.f32 %v2584, %v1580
        %v2586 = vadd.f32 %v2585, %v1581
        %v2587 = vadd.f32 %v2586, %v1582
        %2588 = vadd.xlane.f32.xlu0 %v2587
        %v2589 = vpop.xlane.xlu0 %2588
        %v2590 = vadd.f32 %v1583, %v1584
        %v2591 = vadd.f32 %v2590, %v1585
        %v2592 = vadd.f32 %v2591, %v1586
        %v2593 = vadd.f32 %v2592, %v1587
        %v2594 = vadd.f32 %v2593, %v1588
        %2595 = vadd.xlane.f32.xlu0 %v2594
        %v2596 = vpop.xlane.xlu0 %2595
        %v2597 = vadd.f32 %v1589, %v1590
        %v2598 = vadd.f32 %v2597, %v1591
        %v2599 = vadd.f32 %v2598, %v1592
        %v2600 = vadd.f32 %v2599, %v1593
        %v2601 = vadd.f32 %v2600, %v1594
        %2602 = vadd.xlane.f32.xlu0 %v2601
        %v2603 = vpop.xlane.xlu0 %2602
        %v2604 = vadd.f32 %v1595, %v1596
        %v2605 = vadd.f32 %v2604, %v1597
        %v2606 = vadd.f32 %v2605, %v1598
        %v2607 = vadd.f32 %v2606, %v1599
        %v2608 = vadd.f32 %v2607, %v1600
        %2609 = vadd.xlane.f32.xlu0 %v2608
        %v2610 = vpop.xlane.xlu0 %2609
        %v2611 = vadd.f32 %v1601, %v1602
        %v2612 = vadd.f32 %v2611, %v1603
        %v2613 = vadd.f32 %v2612, %v1604
        %v2614 = vadd.f32 %v2613, %v1605
        %v2615 = vadd.f32 %v2614, %v1606
        %2616 = vadd.xlane.f32.xlu0 %v2615
        %v2617 = vpop.xlane.xlu0 %2616
        %v2618 = vadd.f32 %v1607, %v1608
        %v2619 = vadd.f32 %v2618, %v1609
        %v2620 = vadd.f32 %v2619, %v1610
        %v2621 = vadd.f32 %v2620, %v1611
        %v2622 = vadd.f32 %v2621, %v1612
        %2623 = vadd.xlane.f32.xlu0 %v2622
        %v2624 = vpop.xlane.xlu0 %2623
        %v2625 = vadd.f32 %v1613, %v1614
        %v2626 = vadd.f32 %v2625, %v1615
        %v2627 = vadd.f32 %v2626, %v1616
        %v2628 = vadd.f32 %v2627, %v1617
        %v2629 = vadd.f32 %v2628, %v1618
        %2630 = vadd.xlane.f32.xlu0 %v2629
        %v2631 = vpop.xlane.xlu0 %2630
        %v2632 = vadd.f32 %v1619, %v1620
        %v2633 = vadd.f32 %v2632, %v1621
        %v2634 = vadd.f32 %v2633, %v1622
        %v2635 = vadd.f32 %v2634, %v1623
        %v2636 = vadd.f32 %v2635, %v1624
        %2637 = vadd.xlane.f32.xlu0 %v2636
        %v2638 = vpop.xlane.xlu0 %2637
        %v2639 = vadd.f32 %v1625, %v1626
        %v2640 = vadd.f32 %v2639, %v1627
        %v2641 = vadd.f32 %v2640, %v1628
        %v2642 = vadd.f32 %v2641, %v1629
        %v2643 = vadd.f32 %v2642, %v1630
        %2644 = vadd.xlane.f32.xlu0 %v2643
        %v2645 = vpop.xlane.xlu0 %2644
        %v2646 = vadd.f32 %v1631, %v1632
        %v2647 = vadd.f32 %v2646, %v1633
        %v2648 = vadd.f32 %v2647, %v1634
        %v2649 = vadd.f32 %v2648, %v1635
        %v2650 = vadd.f32 %v2649, %v1636
        %2651 = vadd.xlane.f32.xlu0 %v2650
        %v2652 = vpop.xlane.xlu0 %2651
        %v2653 = vadd.f32 %v1637, %v1638
        %v2654 = vadd.f32 %v2653, %v1639
        %v2655 = vadd.f32 %v2654, %v1640
        %v2656 = vadd.f32 %v2655, %v1641
        %v2657 = vadd.f32 %v2656, %v1642
        %2658 = vadd.xlane.f32.xlu0 %v2657
        %v2659 = vpop.xlane.xlu0 %2658
        %v2660 = vadd.f32 %v1643, %v1644
        %v2661 = vadd.f32 %v2660, %v1645
        %v2662 = vadd.f32 %v2661, %v1646
        %v2663 = vadd.f32 %v2662, %v1647
        %v2664 = vadd.f32 %v2663, %v1648
        %2665 = vadd.xlane.f32.xlu0 %v2664
        %v2666 = vpop.xlane.xlu0 %2665
        %v2667 = vadd.f32 %v1649, %v1650
        %v2668 = vadd.f32 %v2667, %v1651
        %v2669 = vadd.f32 %v2668, %v1652
        %v2670 = vadd.f32 %v2669, %v1653
        %v2671 = vadd.f32 %v2670, %v1654
        %2672 = vadd.xlane.f32.xlu0 %v2671
        %v2673 = vpop.xlane.xlu0 %2672
        %v2674 = vadd.f32 %v1655, %v1656
        %v2675 = vadd.f32 %v2674, %v1657
        %v2676 = vadd.f32 %v2675, %v1658
        %v2677 = vadd.f32 %v2676, %v1659
        %v2678 = vadd.f32 %v2677, %v1660
        %2679 = vadd.xlane.f32.xlu0 %v2678
        %v2680 = vpop.xlane.xlu0 %2679
        %v2681 = vadd.f32 %v1661, %v1662
        %v2682 = vadd.f32 %v2681, %v1663
        %v2683 = vadd.f32 %v2682, %v1664
        %v2684 = vadd.f32 %v2683, %v1665
        %v2685 = vadd.f32 %v2684, %v1666
        %2686 = vadd.xlane.f32.xlu0 %v2685
        %v2687 = vpop.xlane.xlu0 %2686
        %v2688 = vadd.f32 %v1667, %v1668
        %v2689 = vadd.f32 %v2688, %v1669
        %v2690 = vadd.f32 %v2689, %v1670
        %v2691 = vadd.f32 %v2690, %v1671
        %v2692 = vadd.f32 %v2691, %v1672
        %2693 = vadd.xlane.f32.xlu0 %v2692
        %v2694 = vpop.xlane.xlu0 %2693
        %v2695 = vadd.f32 %v1673, %v1674
        %v2696 = vadd.f32 %v2695, %v1675
        %v2697 = vadd.f32 %v2696, %v1676
        %v2698 = vadd.f32 %v2697, %v1677
        %v2699 = vadd.f32 %v2698, %v1678
        %2700 = vadd.xlane.f32.xlu0 %v2699
        %v2701 = vpop.xlane.xlu0 %2700
        %v2702 = vadd.f32 %v1679, %v1680
        %v2703 = vadd.f32 %v2702, %v1681
        %v2704 = vadd.f32 %v2703, %v1682
        %v2705 = vadd.f32 %v2704, %v1683
        %v2706 = vadd.f32 %v2705, %v1684
        %2707 = vadd.xlane.f32.xlu0 %v2706
        %v2708 = vpop.xlane.xlu0 %2707
        %v2709 = vadd.f32 %v1685, %v1686
        %v2710 = vadd.f32 %v2709, %v1687
        %v2711 = vadd.f32 %v2710, %v1688
        %v2712 = vadd.f32 %v2711, %v1689
        %v2713 = vadd.f32 %v2712, %v1690
        %2714 = vadd.xlane.f32.xlu0 %v2713
        %v2715 = vpop.xlane.xlu0 %2714
        %v2716 = vadd.f32 %v1691, %v1692
        %v2717 = vadd.f32 %v2716, %v1693
        %v2718 = vadd.f32 %v2717, %v1694
        %v2719 = vadd.f32 %v2718, %v1695
        %v2720 = vadd.f32 %v2719, %v1696
        %2721 = vadd.xlane.f32.xlu0 %v2720
        %v2722 = vpop.xlane.xlu0 %2721
        %v2723 = vadd.f32 %v1697, %v1698
        %v2724 = vadd.f32 %v2723, %v1699
        %v2725 = vadd.f32 %v2724, %v1700
        %v2726 = vadd.f32 %v2725, %v1701
        %v2727 = vadd.f32 %v2726, %v1702
        %2728 = vadd.xlane.f32.xlu0 %v2727
        %v2729 = vpop.xlane.xlu0 %2728
        %v2730 = vadd.f32 %v1703, %v1704
        %v2731 = vadd.f32 %v2730, %v1705
        %v2732 = vadd.f32 %v2731, %v1706
        %v2733 = vadd.f32 %v2732, %v1707
        %v2734 = vadd.f32 %v2733, %v1708
        %2735 = vadd.xlane.f32.xlu0 %v2734
        %v2736 = vpop.xlane.xlu0 %2735
        %v2737 = vadd.f32 %v1709, %v1710
        %v2738 = vadd.f32 %v2737, %v1711
        %v2739 = vadd.f32 %v2738, %v1712
        %v2740 = vadd.f32 %v2739, %v1713
        %v2741 = vadd.f32 %v2740, %v1714
        %2742 = vadd.xlane.f32.xlu0 %v2741
        %v2743 = vpop.xlane.xlu0 %2742
        %v2744 = vadd.f32 %v1715, %v1716
        %v2745 = vadd.f32 %v2744, %v1717
        %v2746 = vadd.f32 %v2745, %v1718
        %v2747 = vadd.f32 %v2746, %v1719
        %v2748 = vadd.f32 %v2747, %v1720
        %2749 = vadd.xlane.f32.xlu0 %v2748
        %v2750 = vpop.xlane.xlu0 %2749
        %v2751 = vadd.f32 %v1721, %v1722
        %v2752 = vadd.f32 %v2751, %v1723
        %v2753 = vadd.f32 %v2752, %v1724
        %v2754 = vadd.f32 %v2753, %v1725
        %v2755 = vadd.f32 %v2754, %v1726
        %2756 = vadd.xlane.f32.xlu0 %v2755
        %v2757 = vpop.xlane.xlu0 %2756
        %v2758 = vadd.f32 %v1727, %v1728
        %v2759 = vadd.f32 %v2758, %v1729
        %v2760 = vadd.f32 %v2759, %v1730
        %v2761 = vadd.f32 %v2760, %v1731
        %v2762 = vadd.f32 %v2761, %v1732
        %2763 = vadd.xlane.f32.xlu0 %v2762
        %v2764 = vpop.xlane.xlu0 %2763
        %v2765 = vadd.f32 %v1733, %v1734
        %v2766 = vadd.f32 %v2765, %v1735
        %v2767 = vadd.f32 %v2766, %v1736
        %v2768 = vadd.f32 %v2767, %v1737
        %v2769 = vadd.f32 %v2768, %v1738
        %2770 = vadd.xlane.f32.xlu0 %v2769
        %v2771 = vpop.xlane.xlu0 %2770
        %v2772 = vadd.f32 %v1739, %v1740
        %v2773 = vadd.f32 %v2772, %v1741
        %v2774 = vadd.f32 %v2773, %v1742
        %v2775 = vadd.f32 %v2774, %v1743
        %v2776 = vadd.f32 %v2775, %v1744
        %2777 = vadd.xlane.f32.xlu0 %v2776
        %v2778 = vpop.xlane.xlu0 %2777
        %v2779 = vadd.f32 %v1745, %v1746
        %v2780 = vadd.f32 %v2779, %v1747
        %v2781 = vadd.f32 %v2780, %v1748
        %v2782 = vadd.f32 %v2781, %v1749
        %v2783 = vadd.f32 %v2782, %v1750
        %2784 = vadd.xlane.f32.xlu0 %v2783
        %v2785 = vpop.xlane.xlu0 %2784
        %v2786 = vadd.f32 %v1751, %v1752
        %v2787 = vadd.f32 %v2786, %v1753
        %v2788 = vadd.f32 %v2787, %v1754
        %v2789 = vadd.f32 %v2788, %v1755
        %v2790 = vadd.f32 %v2789, %v1756
        %2791 = vadd.xlane.f32.xlu0 %v2790
        %v2792 = vpop.xlane.xlu0 %2791
        %v2793 = vadd.f32 %v1757, %v1758
        %v2794 = vadd.f32 %v2793, %v1759
        %v2795 = vadd.f32 %v2794, %v1760
        %v2796 = vadd.f32 %v2795, %v1761
        %v2797 = vadd.f32 %v2796, %v1762
        %2798 = vadd.xlane.f32.xlu0 %v2797
        %v2799 = vpop.xlane.xlu0 %2798
        %v2800 = vadd.f32 %v1763, %v1764
        %v2801 = vadd.f32 %v2800, %v1765
        %v2802 = vadd.f32 %v2801, %v1766
        %v2803 = vadd.f32 %v2802, %v1767
        %v2804 = vadd.f32 %v2803, %v1768
        %2805 = vadd.xlane.f32.xlu0 %v2804
        %v2806 = vpop.xlane.xlu0 %2805
        %v2807 = vadd.f32 %v1769, %v1770
        %v2808 = vadd.f32 %v2807, %v1771
        %v2809 = vadd.f32 %v2808, %v1772
        %v2810 = vadd.f32 %v2809, %v1773
        %v2811 = vadd.f32 %v2810, %v1774
        %2812 = vadd.xlane.f32.xlu0 %v2811
        %v2813 = vpop.xlane.xlu0 %2812
        %v2814 = vadd.f32 %v1775, %v1776
        %v2815 = vadd.f32 %v2814, %v1777
        %v2816 = vadd.f32 %v2815, %v1778
        %v2817 = vadd.f32 %v2816, %v1779
        %v2818 = vadd.f32 %v2817, %v1780
        %2819 = vadd.xlane.f32.xlu0 %v2818
        %v2820 = vpop.xlane.xlu0 %2819
        %v2821 = vadd.f32 %v1781, %v1782
        %v2822 = vadd.f32 %v2821, %v1783
        %v2823 = vadd.f32 %v2822, %v1784
        %v2824 = vadd.f32 %v2823, %v1785
        %v2825 = vadd.f32 %v2824, %v1786
        %2826 = vadd.xlane.f32.xlu0 %v2825
        %v2827 = vpop.xlane.xlu0 %2826
        %v2828 = vadd.f32 %v1787, %v1788
        %v2829 = vadd.f32 %v2828, %v1789
        %v2830 = vadd.f32 %v2829, %v1790
        %v2831 = vadd.f32 %v2830, %v1791
        %v2832 = vadd.f32 %v2831, %v1792
        %2833 = vadd.xlane.f32.xlu0 %v2832
        %v2834 = vpop.xlane.xlu0 %2833
        %v2835 = vadd.f32 %v1793, %v1794
        %v2836 = vadd.f32 %v2835, %v1795
        %v2837 = vadd.f32 %v2836, %v1796
        %v2838 = vadd.f32 %v2837, %v1797
        %v2839 = vadd.f32 %v2838, %v1798
        %2840 = vadd.xlane.f32.xlu0 %v2839
        %v2841 = vpop.xlane.xlu0 %2840
        %v2842 = vadd.f32 %v1799, %v1800
        %v2843 = vadd.f32 %v2842, %v1801
        %v2844 = vadd.f32 %v2843, %v1802
        %v2845 = vadd.f32 %v2844, %v1803
        %v2846 = vadd.f32 %v2845, %v1804
        %2847 = vadd.xlane.f32.xlu0 %v2846
        %v2848 = vpop.xlane.xlu0 %2847
        %v2849 = vadd.f32 %v1805, %v1806
        %v2850 = vadd.f32 %v2849, %v1807
        %v2851 = vadd.f32 %v2850, %v1808
        %v2852 = vadd.f32 %v2851, %v1809
        %v2853 = vadd.f32 %v2852, %v1810
        %2854 = vadd.xlane.f32.xlu0 %v2853
        %v2855 = vpop.xlane.xlu0 %2854
        %v2856 = vadd.f32 %v1811, %v1812
        %v2857 = vadd.f32 %v2856, %v1813
        %v2858 = vadd.f32 %v2857, %v1814
        %v2859 = vadd.f32 %v2858, %v1815
        %v2860 = vadd.f32 %v2859, %v1816
        %2861 = vadd.xlane.f32.xlu0 %v2860
        %v2862 = vpop.xlane.xlu0 %2861
        %v2863 = vadd.f32 %v1817, %v1818
        %v2864 = vadd.f32 %v2863, %v1819
        %v2865 = vadd.f32 %v2864, %v1820
        %v2866 = vadd.f32 %v2865, %v1821
        %v2867 = vadd.f32 %v2866, %v1822
        %2868 = vadd.xlane.f32.xlu0 %v2867
        %v2869 = vpop.xlane.xlu0 %2868
        %v2870 = vadd.f32 %v1823, %v1824
        %v2871 = vadd.f32 %v2870, %v1825
        %v2872 = vadd.f32 %v2871, %v1826
        %v2873 = vadd.f32 %v2872, %v1827
        %v2874 = vadd.f32 %v2873, %v1828
        %2875 = vadd.xlane.f32.xlu0 %v2874
        %v2876 = vpop.xlane.xlu0 %2875
        %v2877 = vadd.f32 %v1829, %v1830
        %v2878 = vadd.f32 %v2877, %v1831
        %v2879 = vadd.f32 %v2878, %v1832
        %v2880 = vadd.f32 %v2879, %v1833
        %v2881 = vadd.f32 %v2880, %v1834
        %2882 = vadd.xlane.f32.xlu0 %v2881
        %v2883 = vpop.xlane.xlu0 %2882
        %v2884 = vadd.f32 %v1835, %v1836
        %v2885 = vadd.f32 %v2884, %v1837
        %v2886 = vadd.f32 %v2885, %v1838
        %v2887 = vadd.f32 %v2886, %v1839
        %v2888 = vadd.f32 %v2887, %v1840
        %2889 = vadd.xlane.f32.xlu0 %v2888
        %v2890 = vpop.xlane.xlu0 %2889
        %v2891 = vadd.f32 %v1841, %v1842
        %v2892 = vadd.f32 %v2891, %v1843
        %v2893 = vadd.f32 %v2892, %v1844
        %v2894 = vadd.f32 %v2893, %v1845
        %v2895 = vadd.f32 %v2894, %v1846
        %2896 = vadd.xlane.f32.xlu0 %v2895
        %v2897 = vpop.xlane.xlu0 %2896
        %v2898 = vadd.f32 %v1847, %v1848
        %v2899 = vadd.f32 %v2898, %v1849
        %v2900 = vadd.f32 %v2899, %v1850
        %v2901 = vadd.f32 %v2900, %v1851
        %v2902 = vadd.f32 %v2901, %v1852
        %2903 = vadd.xlane.f32.xlu0 %v2902
        %v2904 = vpop.xlane.xlu0 %2903
        %v2905 = vadd.f32 %v1853, %v1854
        %v2906 = vadd.f32 %v2905, %v1855
        %v2907 = vadd.f32 %v2906, %v1856
        %v2908 = vadd.f32 %v2907, %v1857
        %v2909 = vadd.f32 %v2908, %v1858
        %2910 = vadd.xlane.f32.xlu0 %v2909
        %v2911 = vpop.xlane.xlu0 %2910
        %v2912 = vadd.f32 %v1859, %v1860
        %v2913 = vadd.f32 %v2912, %v1861
        %v2914 = vadd.f32 %v2913, %v1862
        %v2915 = vadd.f32 %v2914, %v1863
        %v2916 = vadd.f32 %v2915, %v1864
        %2917 = vadd.xlane.f32.xlu0 %v2916
        %v2918 = vpop.xlane.xlu0 %2917
        %v2919 = vadd.f32 %v1865, %v1866
        %v2920 = vadd.f32 %v2919, %v1867
        %v2921 = vadd.f32 %v2920, %v1868
        %v2922 = vadd.f32 %v2921, %v1869
        %v2923 = vadd.f32 %v2922, %v1870
        %2924 = vadd.xlane.f32.xlu0 %v2923
        %v2925 = vpop.xlane.xlu0 %2924
        %v2926 = vadd.f32 %v1871, %v1872
        %v2927 = vadd.f32 %v2926, %v1873
        %v2928 = vadd.f32 %v2927, %v1874
        %v2929 = vadd.f32 %v2928, %v1875
        %v2930 = vadd.f32 %v2929, %v1876
        %2931 = vadd.xlane.f32.xlu0 %v2930
        %v2932 = vpop.xlane.xlu0 %2931
        %v2933 = vadd.f32 %v1877, %v1878
        %v2934 = vadd.f32 %v2933, %v1879
        %v2935 = vadd.f32 %v2934, %v1880
        %v2936 = vadd.f32 %v2935, %v1881
        %v2937 = vadd.f32 %v2936, %v1882
        %2938 = vadd.xlane.f32.xlu0 %v2937
        %v2939 = vpop.xlane.xlu0 %2938
        %v2940 = vadd.f32 %v1883, %v1884
        %v2941 = vadd.f32 %v2940, %v1885
        %v2942 = vadd.f32 %v2941, %v1886
        %v2943 = vadd.f32 %v2942, %v1887
        %v2944 = vadd.f32 %v2943, %v1888
        %2945 = vadd.xlane.f32.xlu0 %v2944
        %v2946 = vpop.xlane.xlu0 %2945
        %v2947 = vadd.f32 %v1889, %v1890
        %v2948 = vadd.f32 %v2947, %v1891
        %v2949 = vadd.f32 %v2948, %v1892
        %v2950 = vadd.f32 %v2949, %v1893
        %v2951 = vadd.f32 %v2950, %v1894
        %2952 = vadd.xlane.f32.xlu0 %v2951
        %v2953 = vpop.xlane.xlu0 %2952
        %v2954 = vadd.f32 %v1895, %v1896
        %v2955 = vadd.f32 %v2954, %v1897
        %v2956 = vadd.f32 %v2955, %v1898
        %v2957 = vadd.f32 %v2956, %v1899
        %v2958 = vadd.f32 %v2957, %v1900
        %2959 = vadd.xlane.f32.xlu0 %v2958
        %v2960 = vpop.xlane.xlu0 %2959
        %v2961 = vadd.f32 %v1901, %v1902
        %v2962 = vadd.f32 %v2961, %v1903
        %v2963 = vadd.f32 %v2962, %v1904
        %v2964 = vadd.f32 %v2963, %v1905
        %v2965 = vadd.f32 %v2964, %v1906
        %2966 = vadd.xlane.f32.xlu0 %v2965
        %v2967 = vpop.xlane.xlu0 %2966
        %v2968 = vadd.f32 %v1907, %v1908
        %v2969 = vadd.f32 %v2968, %v1909
        %v2970 = vadd.f32 %v2969, %v1910
        %v2971 = vadd.f32 %v2970, %v1911
        %v2972 = vadd.f32 %v2971, %v1912
        %2973 = vadd.xlane.f32.xlu0 %v2972
        %v2974 = vpop.xlane.xlu0 %2973
        %v2975 = vadd.f32 %v1913, %v1914
        %v2976 = vadd.f32 %v2975, %v1915
        %v2977 = vadd.f32 %v2976, %v1916
        %v2978 = vadd.f32 %v2977, %v1917
        %v2979 = vadd.f32 %v2978, %v1918
        %2980 = vadd.xlane.f32.xlu0 %v2979
        %v2981 = vpop.xlane.xlu0 %2980
        %v2982 = vadd.f32 %v1919, %v1920
        %v2983 = vadd.f32 %v2982, %v1921
        %v2984 = vadd.f32 %v2983, %v1922
        %v2985 = vadd.f32 %v2984, %v1923
        %v2986 = vadd.f32 %v2985, %v1924
        %2987 = vadd.xlane.f32.xlu0 %v2986
        %v2988 = vpop.xlane.xlu0 %2987
        %v2989 = vadd.f32 %v1925, %v1926
        %v2990 = vadd.f32 %v2989, %v1927
        %v2991 = vadd.f32 %v2990, %v1928
        %v2992 = vadd.f32 %v2991, %v1929
        %v2993 = vadd.f32 %v2992, %v1930
        %2994 = vadd.xlane.f32.xlu0 %v2993
        %v2995 = vpop.xlane.xlu0 %2994
        %v2996 = vadd.f32 %v1931, %v1932
        %v2997 = vadd.f32 %v2996, %v1933
        %v2998 = vadd.f32 %v2997, %v1934
        %v2999 = vadd.f32 %v2998, %v1935
        %v3000 = vadd.f32 %v2999, %v1936
        %3001 = vadd.xlane.f32.xlu0 %v3000
        %v3002 = vpop.xlane.xlu0 %3001
        %v3003 = vadd.f32 %v1937, %v1938
        %v3004 = vadd.f32 %v3003, %v1939
        %v3005 = vadd.f32 %v3004, %v1940
        %v3006 = vadd.f32 %v3005, %v1941
        %v3007 = vadd.f32 %v3006, %v1942
        %3008 = vadd.xlane.f32.xlu0 %v3007
        %v3009 = vpop.xlane.xlu0 %3008
        %v3010 = vadd.f32 %v1943, %v1944
        %v3011 = vadd.f32 %v3010, %v1945
        %v3012 = vadd.f32 %v3011, %v1946
        %v3013 = vadd.f32 %v3012, %v1947
        %v3014 = vadd.f32 %v3013, %v1948
        %3015 = vadd.xlane.f32.xlu0 %v3014
        %v3016 = vpop.xlane.xlu0 %3015
        %v3017 = vadd.f32 %v1949, %v1950
        %v3018 = vadd.f32 %v3017, %v1951
        %v3019 = vadd.f32 %v3018, %v1952
        %v3020 = vadd.f32 %v3019, %v1953
        %v3021 = vadd.f32 %v3020, %v1954
        %3022 = vadd.xlane.f32.xlu0 %v3021
        %v3023 = vpop.xlane.xlu0 %3022
        %v3024 = vadd.f32 %v1955, %v1956
        %v3025 = vadd.f32 %v3024, %v1957
        %v3026 = vadd.f32 %v3025, %v1958
        %v3027 = vadd.f32 %v3026, %v1959
        %v3028 = vadd.f32 %v3027, %v1960
        %3029 = vadd.xlane.f32.xlu0 %v3028
        %v3030 = vpop.xlane.xlu0 %3029
        %v3031 = vadd.f32 %v1961, %v1962
        %v3032 = vadd.f32 %v3031, %v1963
        %v3033 = vadd.f32 %v3032, %v1964
        %v3034 = vadd.f32 %v3033, %v1965
        %v3035 = vadd.f32 %v3034, %v1966
        %3036 = vadd.xlane.f32.xlu0 %v3035
        %v3037 = vpop.xlane.xlu0 %3036
        %v3038 = vadd.f32 %v1967, %v1968
        %v3039 = vadd.f32 %v3038, %v1969
        %v3040 = vadd.f32 %v3039, %v1970
        %v3041 = vadd.f32 %v3040, %v1971
        %v3042 = vadd.f32 %v3041, %v1972
        %3043 = vadd.xlane.f32.xlu0 %v3042
        %v3044 = vpop.xlane.xlu0 %3043
        %v3045 = vadd.f32 %v1973, %v1974
        %v3046 = vadd.f32 %v3045, %v1975
        %v3047 = vadd.f32 %v3046, %v1976
        %v3048 = vadd.f32 %v3047, %v1977
        %v3049 = vadd.f32 %v3048, %v1978
        %3050 = vadd.xlane.f32.xlu0 %v3049
        %v3051 = vpop.xlane.xlu0 %3050
        %v3052 = vadd.f32 %v1979, %v1980
        %v3053 = vadd.f32 %v3052, %v1981
        %v3054 = vadd.f32 %v3053, %v1982
        %v3055 = vadd.f32 %v3054, %v1983
        %v3056 = vadd.f32 %v3055, %v1984
        %3057 = vadd.xlane.f32.xlu0 %v3056
        %v3058 = vpop.xlane.xlu0 %3057
        %v3059 = vadd.f32 %v1985, %v1986
        %v3060 = vadd.f32 %v3059, %v1987
        %v3061 = vadd.f32 %v3060, %v1988
        %v3062 = vadd.f32 %v3061, %v1989
        %v3063 = vadd.f32 %v3062, %v1990
        %3064 = vadd.xlane.f32.xlu0 %v3063
        %v3065 = vpop.xlane.xlu0 %3064
        %v3066 = vadd.f32 %v1991, %v1992
        %v3067 = vadd.f32 %v3066, %v1993
        %v3068 = vadd.f32 %v3067, %v1994
        %v3069 = vadd.f32 %v3068, %v1995
        %v3070 = vadd.f32 %v3069, %v1996
        %3071 = vadd.xlane.f32.xlu0 %v3070
        %v3072 = vpop.xlane.xlu0 %3071
        %v3073 = vadd.f32 %v1997, %v1998
        %v3074 = vadd.f32 %v3073, %v1999
        %v3075 = vadd.f32 %v3074, %v2000
        %v3076 = vadd.f32 %v3075, %v2001
        %v3077 = vadd.f32 %v3076, %v2002
        %3078 = vadd.xlane.f32.xlu0 %v3077
        %v3079 = vpop.xlane.xlu0 %3078
        %v3080 = vadd.f32 %v2003, %v2004
        %v3081 = vadd.f32 %v3080, %v2005
        %v3082 = vadd.f32 %v3081, %v2006
        %v3083 = vadd.f32 %v3082, %v2007
        %v3084 = vadd.f32 %v3083, %v2008
        %3085 = vadd.xlane.f32.xlu0 %v3084
        %v3086 = vpop.xlane.xlu0 %3085
        %v3087 = vadd.f32 %v2009, %v2010
        %v3088 = vadd.f32 %v3087, %v2011
        %v3089 = vadd.f32 %v3088, %v2012
        %v3090 = vadd.f32 %v3089, %v2013
        %v3091 = vadd.f32 %v3090, %v2014
        %3092 = vadd.xlane.f32.xlu0 %v3091
        %v3093 = vpop.xlane.xlu0 %3092
        %v3094 = vadd.f32 %v2015, %v2016
        %v3095 = vadd.f32 %v3094, %v2017
        %v3096 = vadd.f32 %v3095, %v2018
        %v3097 = vadd.f32 %v3096, %v2019
        %v3098 = vadd.f32 %v3097, %v2020
        %3099 = vadd.xlane.f32.xlu0 %v3098
        %v3100 = vpop.xlane.xlu0 %3099
        %v3101 = vadd.f32 %v2021, %v2022
        %v3102 = vadd.f32 %v3101, %v2023
        %v3103 = vadd.f32 %v3102, %v2024
        %v3104 = vadd.f32 %v3103, %v2025
        %v3105 = vadd.f32 %v3104, %v2026
        %3106 = vadd.xlane.f32.xlu0 %v3105
        %v3107 = vpop.xlane.xlu0 %3106
        %v3108 = vadd.f32 %v2027, %v2028
        %v3109 = vadd.f32 %v3108, %v2029
        %v3110 = vadd.f32 %v3109, %v2030
        %v3111 = vadd.f32 %v3110, %v2031
        %v3112 = vadd.f32 %v3111, %v2032
        %3113 = vadd.xlane.f32.xlu0 %v3112
        %v3114 = vpop.xlane.xlu0 %3113
        %v3115 = vadd.f32 %v2033, %v2034
        %v3116 = vadd.f32 %v3115, %v2035
        %v3117 = vadd.f32 %v3116, %v2036
        %v3118 = vadd.f32 %v3117, %v2037
        %v3119 = vadd.f32 %v3118, %v2038
        %3120 = vadd.xlane.f32.xlu0 %v3119
        %v3121 = vpop.xlane.xlu0 %3120
        %v3122 = vadd.f32 %v2039, %v2040
        %v3123 = vadd.f32 %v3122, %v2041
        %v3124 = vadd.f32 %v3123, %v2042
        %v3125 = vadd.f32 %v3124, %v2043
        %v3126 = vadd.f32 %v3125, %v2044
        %3127 = vadd.xlane.f32.xlu0 %v3126
        %v3128 = vpop.xlane.xlu0 %3127
        %v3129 = vadd.f32 %v2045, %v2046
        %v3130 = vadd.f32 %v3129, %v2047
        %v3131 = vadd.f32 %v3130, %v2048
        %v3132 = vadd.f32 %v3131, %v2049
        %v3133 = vadd.f32 %v3132, %v2050
        %3134 = vadd.xlane.f32.xlu0 %v3133
        %v3135 = vpop.xlane.xlu0 %3134
        %v3136 = vadd.f32 %v2051, %v2052
        %v3137 = vadd.f32 %v3136, %v2053
        %v3138 = vadd.f32 %v3137, %v2054
        %v3139 = vadd.f32 %v3138, %v2055
        %v3140 = vadd.f32 %v3139, %v2056
        %3141 = vadd.xlane.f32.xlu0 %v3140
        %v3142 = vpop.xlane.xlu0 %3141
        %v3143 = vadd.f32 %v2057, %v2058
        %v3144 = vadd.f32 %v3143, %v2059
        %v3145 = vadd.f32 %v3144, %v2060
        %v3146 = vadd.f32 %v3145, %v2061
        %v3147 = vadd.f32 %v3146, %v2062
        %3148 = vadd.xlane.f32.xlu0 %v3147
        %v3149 = vpop.xlane.xlu0 %3148
        %v3150 = vadd.f32 %v2063, %v2064
        %v3151 = vadd.f32 %v3150, %v2065
        %v3152 = vadd.f32 %v3151, %v2066
        %v3153 = vadd.f32 %v3152, %v2067
        %v3154 = vadd.f32 %v3153, %v2068
        %3155 = vadd.xlane.f32.xlu0 %v3154
        %v3156 = vpop.xlane.xlu0 %3155
        %v3157 = vadd.f32 %v2069, %v2070
        %v3158 = vadd.f32 %v3157, %v2071
        %v3159 = vadd.f32 %v3158, %v2072
        %v3160 = vadd.f32 %v3159, %v2073
        %v3161 = vadd.f32 %v3160, %v2074
        %3162 = vadd.xlane.f32.xlu0 %v3161
        %v3163 = vpop.xlane.xlu0 %3162
        %v3164 = vadd.f32 %v2075, %v2076
        %v3165 = vadd.f32 %v3164, %v2077
        %v3166 = vadd.f32 %v3165, %v2078
        %v3167 = vadd.f32 %v3166, %v2079
        %v3168 = vadd.f32 %v3167, %v2080
        %3169 = vadd.xlane.f32.xlu0 %v3168
        %v3170 = vpop.xlane.xlu0 %3169
        %v3171 = vadd.f32 %v2081, %v2082
        %v3172 = vadd.f32 %v3171, %v2083
        %v3173 = vadd.f32 %v3172, %v2084
        %v3174 = vadd.f32 %v3173, %v2085
        %v3175 = vadd.f32 %v3174, %v2086
        %3176 = vadd.xlane.f32.xlu0 %v3175
        %v3177 = vpop.xlane.xlu0 %3176
        %v3178 = vadd.f32 %v2087, %v2088
        %v3179 = vadd.f32 %v3178, %v2089
        %v3180 = vadd.f32 %v3179, %v2090
        %v3181 = vadd.f32 %v3180, %v2091
        %v3182 = vadd.f32 %v3181, %v2092
        %3183 = vadd.xlane.f32.xlu0 %v3182
        %v3184 = vpop.xlane.xlu0 %3183
        %v3185 = vadd.f32 %v2093, %v2094
        %v3186 = vadd.f32 %v3185, %v2095
        %v3187 = vadd.f32 %v3186, %v2096
        %v3188 = vadd.f32 %v3187, %v2097
        %v3189 = vadd.f32 %v3188, %v2098
        %3190 = vadd.xlane.f32.xlu0 %v3189
        %v3191 = vpop.xlane.xlu0 %3190
        %v3192 = vadd.f32 %v2099, %v2100
        %v3193 = vadd.f32 %v3192, %v2101
        %v3194 = vadd.f32 %v3193, %v2102
        %v3195 = vadd.f32 %v3194, %v2103
        %v3196 = vadd.f32 %v3195, %v2104
        %3197 = vadd.xlane.f32.xlu0 %v3196
        %v3198 = vpop.xlane.xlu0 %3197
        %v3199 = vadd.f32 %v2105, %v2106
        %v3200 = vadd.f32 %v3199, %v2107
        %v3201 = vadd.f32 %v3200, %v2108
        %v3202 = vadd.f32 %v3201, %v2109
        %v3203 = vadd.f32 %v3202, %v2110
        %3204 = vadd.xlane.f32.xlu0 %v3203
        %v3205 = vpop.xlane.xlu0 %3204
        %v3206 = vadd.f32 %v2111, %v2112
        %v3207 = vadd.f32 %v3206, %v2113
        %v3208 = vadd.f32 %v3207, %v2114
        %v3209 = vadd.f32 %v3208, %v2115
        %v3210 = vadd.f32 %v3209, %v2116
        %3211 = vadd.xlane.f32.xlu0 %v3210
        %v3212 = vpop.xlane.xlu0 %3211
        %v3213 = vadd.f32 %v2117, %v2118
        %v3214 = vadd.f32 %v3213, %v2119
        %v3215 = vadd.f32 %v3214, %v2120
        %v3216 = vadd.f32 %v3215, %v2121
        %v3217 = vadd.f32 %v3216, %v2122
        %3218 = vadd.xlane.f32.xlu0 %v3217
        %v3219 = vpop.xlane.xlu0 %3218
        %v3220 = vadd.f32 %v2123, %v2124
        %v3221 = vadd.f32 %v3220, %v2125
        %v3222 = vadd.f32 %v3221, %v2126
        %v3223 = vadd.f32 %v3222, %v2127
        %v3224 = vadd.f32 %v3223, %v2128
        %3225 = vadd.xlane.f32.xlu0 %v3224
        %v3226 = vpop.xlane.xlu0 %3225
        %v3227 = vadd.f32 %v2129, %v2130
        %v3228 = vadd.f32 %v3227, %v2131
        %v3229 = vadd.f32 %v3228, %v2132
        %v3230 = vadd.f32 %v3229, %v2133
        %v3231 = vadd.f32 %v3230, %v2134
        %3232 = vadd.xlane.f32.xlu0 %v3231
        %v3233 = vpop.xlane.xlu0 %3232
        %v3234 = vld [vmem:[#allocation2] sm:$0x1]
        %v3236 = vlaneseq
        %v3237 = vshrl.u32 %v3236, 7
        %v3238 = vsub.s32 0, %v3237
        %v3239 = vrot.slane %v3234, %v3238
        %v3241 = vadd.f32 %v2141, %v3239
        %v3242 = vadd.f32 %v2148, %v3239
        %v3243 = vadd.f32 %v2155, %v3239
        %v3244 = vadd.f32 %v2162, %v3239
        %v3245 = vadd.f32 %v2169, %v3239
        %v3246 = vadd.f32 %v2176, %v3239
        %v3247 = vadd.f32 %v2183, %v3239
        %v3248 = vadd.f32 %v2190, %v3239
        %v3249 = vadd.f32 %v2197, %v3239
        %v3250 = vadd.f32 %v2204, %v3239
        %v3251 = vadd.f32 %v2211, %v3239
        %v3252 = vadd.f32 %v2218, %v3239
        %v3253 = vadd.f32 %v2225, %v3239
        %v3254 = vadd.f32 %v2232, %v3239
        %v3255 = vadd.f32 %v2239, %v3239
        %v3256 = vadd.f32 %v2246, %v3239
        %v3257 = vadd.f32 %v2253, %v3239
        %v3258 = vadd.f32 %v2260, %v3239
        %v3259 = vadd.f32 %v2267, %v3239
        %v3260 = vadd.f32 %v2274, %v3239
        %v3261 = vadd.f32 %v2281, %v3239
        %v3262 = vadd.f32 %v2288, %v3239
        %v3263 = vadd.f32 %v2295, %v3239
        %v3264 = vadd.f32 %v2302, %v3239
        %v3265 = vadd.f32 %v2309, %v3239
        %v3266 = vadd.f32 %v2316, %v3239
        %v3267 = vadd.f32 %v2323, %v3239
        %v3268 = vadd.f32 %v2330, %v3239
        %v3269 = vadd.f32 %v2337, %v3239
        %v3270 = vadd.f32 %v2344, %v3239
        %v3271 = vadd.f32 %v2351, %v3239
        %v3272 = vadd.f32 %v2358, %v3239
        %v3273 = vadd.f32 %v2365, %v3239
        %v3274 = vadd.f32 %v2372, %v3239
        %v3275 = vadd.f32 %v2379, %v3239
        %v3276 = vadd.f32 %v2386, %v3239
        %v3277 = vadd.f32 %v2393, %v3239
        %v3278 = vadd.f32 %v2400, %v3239
        %v3279 = vadd.f32 %v2407, %v3239
        %v3280 = vadd.f32 %v2414, %v3239
        %v3281 = vadd.f32 %v2421, %v3239
        %v3282 = vadd.f32 %v2428, %v3239
        %v3283 = vadd.f32 %v2435, %v3239
        %v3284 = vadd.f32 %v2442, %v3239
        %v3285 = vadd.f32 %v2449, %v3239
        %v3286 = vadd.f32 %v2456, %v3239
        %v3287 = vadd.f32 %v2463, %v3239
        %v3288 = vadd.f32 %v2470, %v3239
        %v3289 = vadd.f32 %v2477, %v3239
        %v3290 = vadd.f32 %v2484, %v3239
        %v3291 = vadd.f32 %v2491, %v3239
        %v3292 = vadd.f32 %v2498, %v3239
        %v3293 = vadd.f32 %v2505, %v3239
        %v3294 = vadd.f32 %v2512, %v3239
        %v3295 = vadd.f32 %v2519, %v3239
        %v3296 = vadd.f32 %v2526, %v3239
        %v3297 = vadd.f32 %v2533, %v3239
        %v3298 = vadd.f32 %v2540, %v3239
        %v3299 = vadd.f32 %v2547, %v3239
        %v3300 = vadd.f32 %v2554, %v3239
        %v3301 = vadd.f32 %v2561, %v3239
        %v3302 = vadd.f32 %v2568, %v3239
        %v3303 = vadd.f32 %v2575, %v3239
        %v3304 = vadd.f32 %v2582, %v3239
        %v3305 = vadd.f32 %v2589, %v3239
        %v3306 = vadd.f32 %v2596, %v3239
        %v3307 = vadd.f32 %v2603, %v3239
        %v3308 = vadd.f32 %v2610, %v3239
        %v3309 = vadd.f32 %v2617, %v3239
        %v3310 = vadd.f32 %v2624, %v3239
        %v3311 = vadd.f32 %v2631, %v3239
        %v3312 = vadd.f32 %v2638, %v3239
        %v3313 = vadd.f32 %v2645, %v3239
        %v3314 = vadd.f32 %v2652, %v3239
        %v3315 = vadd.f32 %v2659, %v3239
        %v3316 = vadd.f32 %v2666, %v3239
        %v3317 = vadd.f32 %v2673, %v3239
        %v3318 = vadd.f32 %v2680, %v3239
        %v3319 = vadd.f32 %v2687, %v3239
        %v3320 = vadd.f32 %v2694, %v3239
        %v3321 = vadd.f32 %v2701, %v3239
        %v3322 = vadd.f32 %v2708, %v3239
        %v3323 = vadd.f32 %v2715, %v3239
        %v3324 = vadd.f32 %v2722, %v3239
        %v3325 = vadd.f32 %v2729, %v3239
        %v3326 = vadd.f32 %v2736, %v3239
        %v3327 = vadd.f32 %v2743, %v3239
        %v3328 = vadd.f32 %v2750, %v3239
        %v3329 = vadd.f32 %v2757, %v3239
        %v3330 = vadd.f32 %v2764, %v3239
        %v3331 = vadd.f32 %v2771, %v3239
        %v3332 = vadd.f32 %v2778, %v3239
        %v3333 = vadd.f32 %v2785, %v3239
        %v3334 = vadd.f32 %v2792, %v3239
        %v3335 = vadd.f32 %v2799, %v3239
        %v3336 = vadd.f32 %v2806, %v3239
        %v3337 = vadd.f32 %v2813, %v3239
        %v3338 = vadd.f32 %v2820, %v3239
        %v3339 = vadd.f32 %v2827, %v3239
        %v3340 = vadd.f32 %v2834, %v3239
        %v3341 = vadd.f32 %v2841, %v3239
        %v3342 = vadd.f32 %v2848, %v3239
        %v3343 = vadd.f32 %v2855, %v3239
        %v3344 = vadd.f32 %v2862, %v3239
        %v3345 = vadd.f32 %v2869, %v3239
        %v3346 = vadd.f32 %v2876, %v3239
        %v3347 = vadd.f32 %v2883, %v3239
        %v3348 = vadd.f32 %v2890, %v3239
        %v3349 = vadd.f32 %v2897, %v3239
        %v3350 = vadd.f32 %v2904, %v3239
        %v3351 = vadd.f32 %v2911, %v3239
        %v3352 = vadd.f32 %v2918, %v3239
        %v3353 = vadd.f32 %v2925, %v3239
        %v3354 = vadd.f32 %v2932, %v3239
        %v3355 = vadd.f32 %v2939, %v3239
        %v3356 = vadd.f32 %v2946, %v3239
        %v3357 = vadd.f32 %v2953, %v3239
        %v3358 = vadd.f32 %v2960, %v3239
        %v3359 = vadd.f32 %v2967, %v3239
        %v3360 = vadd.f32 %v2974, %v3239
        %v3361 = vadd.f32 %v2981, %v3239
        %v3362 = vadd.f32 %v2988, %v3239
        %v3363 = vadd.f32 %v2995, %v3239
        %v3364 = vadd.f32 %v3002, %v3239
        %v3365 = vadd.f32 %v3009, %v3239
        %v3366 = vadd.f32 %v3016, %v3239
        %v3367 = vadd.f32 %v3023, %v3239
        %v3368 = vadd.f32 %v3030, %v3239
        %v3369 = vadd.f32 %v3037, %v3239
        %v3370 = vadd.f32 %v3044, %v3239
        %v3371 = vadd.f32 %v3051, %v3239
        %v3372 = vadd.f32 %v3058, %v3239
        %v3373 = vadd.f32 %v3065, %v3239
        %v3374 = vadd.f32 %v3072, %v3239
        %v3375 = vadd.f32 %v3079, %v3239
        %v3376 = vadd.f32 %v3086, %v3239
        %v3377 = vadd.f32 %v3093, %v3239
        %v3378 = vadd.f32 %v3100, %v3239
        %v3379 = vadd.f32 %v3107, %v3239
        %v3380 = vadd.f32 %v3114, %v3239
        %v3381 = vadd.f32 %v3121, %v3239
        %v3382 = vadd.f32 %v3128, %v3239
        %v3383 = vadd.f32 %v3135, %v3239
        %v3384 = vadd.f32 %v3142, %v3239
        %v3385 = vadd.f32 %v3149, %v3239
        %v3386 = vadd.f32 %v3156, %v3239
        %v3387 = vadd.f32 %v3163, %v3239
        %v3388 = vadd.f32 %v3170, %v3239
        %v3389 = vadd.f32 %v3177, %v3239
        %v3390 = vadd.f32 %v3184, %v3239
        %v3391 = vadd.f32 %v3191, %v3239
        %v3392 = vadd.f32 %v3198, %v3239
        %v3393 = vadd.f32 %v3205, %v3239
        %v3394 = vadd.f32 %v3212, %v3239
        %v3395 = vadd.f32 %v3219, %v3239
        %v3396 = vadd.f32 %v3226, %v3239
        %v3397 = vadd.f32 %v3233, %v3239
        %vm3398 = vcmask 7168
        %3399 = vst.msk [vmem:[%s207] sm:$0xff] %vm3398, %v3241
        %3400 = vst.msk [vmem:[%s207 + $0x8] sm:$0xff] %vm3398, %v3242
        %3401 = vst.msk [vmem:[%s207 + $0x10] sm:$0xff] %vm3398, %v3243
        %3402 = vst.msk [vmem:[%s207 + $0x18] sm:$0xff] %vm3398, %v3244
        %3403 = vst.msk [vmem:[%s207 + $0x20] sm:$0xff] %vm3398, %v3245
        %3404 = vst.msk [vmem:[%s207 + $0x28] sm:$0xff] %vm3398, %v3246
        %3405 = vst.msk [vmem:[%s207 + $0x30] sm:$0xff] %vm3398, %v3247
        %3406 = vst.msk [vmem:[%s207 + $0x38] sm:$0xff] %vm3398, %v3248
        %3407 = vst.msk [vmem:[%s207 + $0x40] sm:$0xff] %vm3398, %v3249
        %3408 = vst.msk [vmem:[%s207 + $0x48] sm:$0xff] %vm3398, %v3250
        %3409 = vst.msk [vmem:[%s207 + $0x50] sm:$0xff] %vm3398, %v3251
        %3410 = vst.msk [vmem:[%s207 + $0x58] sm:$0xff] %vm3398, %v3252
        %3411 = vst.msk [vmem:[%s207 + $0x60] sm:$0xff] %vm3398, %v3253
        %3412 = vst.msk [vmem:[%s207 + $0x68] sm:$0xff] %vm3398, %v3254
        %3413 = vst.msk [vmem:[%s207 + $0x70] sm:$0xff] %vm3398, %v3255
        %3414 = vst.msk [vmem:[%s207 + $0x78] sm:$0xff] %vm3398, %v3256
        %3415 = vst.msk [vmem:[%s207 + $0x80] sm:$0xff] %vm3398, %v3257
        %3416 = vst.msk [vmem:[%s207 + $0x88] sm:$0xff] %vm3398, %v3258
        %3417 = vst.msk [vmem:[%s207 + $0x90] sm:$0xff] %vm3398, %v3259
        %3418 = vst.msk [vmem:[%s207 + $0x98] sm:$0xff] %vm3398, %v3260
        %3419 = vst.msk [vmem:[%s207 + $0xa0] sm:$0xff] %vm3398, %v3261
        %3420 = vst.msk [vmem:[%s207 + $0xa8] sm:$0xff] %vm3398, %v3262
        %3421 = vst.msk [vmem:[%s207 + $0xb0] sm:$0xff] %vm3398, %v3263
        %3422 = vst.msk [vmem:[%s207 + $0xb8] sm:$0xff] %vm3398, %v3264
        %3423 = vst.msk [vmem:[%s207 + $0xc0] sm:$0xff] %vm3398, %v3265
        %3424 = vst.msk [vmem:[%s207 + $0xc8] sm:$0xff] %vm3398, %v3266
        %3425 = vst.msk [vmem:[%s207 + $0xd0] sm:$0xff] %vm3398, %v3267
        %3426 = vst.msk [vmem:[%s207 + $0xd8] sm:$0xff] %vm3398, %v3268
        %3427 = vst.msk [vmem:[%s207 + $0xe0] sm:$0xff] %vm3398, %v3269
        %3428 = vst.msk [vmem:[%s207 + $0xe8] sm:$0xff] %vm3398, %v3270
        %3429 = vst.msk [vmem:[%s207 + $0xf0] sm:$0xff] %vm3398, %v3271
        %3430 = vst.msk [vmem:[%s207 + $0xf8] sm:$0xff] %vm3398, %v3272
        %3431 = vst.msk [vmem:[%s207 + $0x100] sm:$0xff] %vm3398, %v3273
        %3432 = vst.msk [vmem:[%s207 + $0x108] sm:$0xff] %vm3398, %v3274
        %3433 = vst.msk [vmem:[%s207 + $0x110] sm:$0xff] %vm3398, %v3275
        %3434 = vst.msk [vmem:[%s207 + $0x118] sm:$0xff] %vm3398, %v3276
        %3435 = vst.msk [vmem:[%s207 + $0x120] sm:$0xff] %vm3398, %v3277
        %3436 = vst.msk [vmem:[%s207 + $0x128] sm:$0xff] %vm3398, %v3278
        %3437 = vst.msk [vmem:[%s207 + $0x130] sm:$0xff] %vm3398, %v3279
        %3438 = vst.msk [vmem:[%s207 + $0x138] sm:$0xff] %vm3398, %v3280
        %3439 = vst.msk [vmem:[%s207 + $0x140] sm:$0xff] %vm3398, %v3281
        %3440 = vst.msk [vmem:[%s207 + $0x148] sm:$0xff] %vm3398, %v3282
        %3441 = vst.msk [vmem:[%s207 + $0x150] sm:$0xff] %vm3398, %v3283
        %3442 = vst.msk [vmem:[%s207 + $0x158] sm:$0xff] %vm3398, %v3284
        %3443 = vst.msk [vmem:[%s207 + $0x160] sm:$0xff] %vm3398, %v3285
        %3444 = vst.msk [vmem:[%s207 + $0x168] sm:$0xff] %vm3398, %v3286
        %3445 = vst.msk [vmem:[%s207 + $0x170] sm:$0xff] %vm3398, %v3287
        %3446 = vst.msk [vmem:[%s207 + $0x178] sm:$0xff] %vm3398, %v3288
        %3447 = vst.msk [vmem:[%s207 + $0x180] sm:$0xff] %vm3398, %v3289
        %3448 = vst.msk [vmem:[%s207 + $0x188] sm:$0xff] %vm3398, %v3290
        %3449 = vst.msk [vmem:[%s207 + $0x190] sm:$0xff] %vm3398, %v3291
        %3450 = vst.msk [vmem:[%s207 + $0x198] sm:$0xff] %vm3398, %v3292
        %3451 = vst.msk [vmem:[%s207 + $0x1a0] sm:$0xff] %vm3398, %v3293
        %3452 = vst.msk [vmem:[%s207 + $0x1a8] sm:$0xff] %vm3398, %v3294
        %3453 = vst.msk [vmem:[%s207 + $0x1b0] sm:$0xff] %vm3398, %v3295
        %3454 = vst.msk [vmem:[%s207 + $0x1b8] sm:$0xff] %vm3398, %v3296
        %3455 = vst.msk [vmem:[%s207 + $0x1c0] sm:$0xff] %vm3398, %v3297
        %3456 = vst.msk [vmem:[%s207 + $0x1c8] sm:$0xff] %vm3398, %v3298
        %3457 = vst.msk [vmem:[%s207 + $0x1d0] sm:$0xff] %vm3398, %v3299
        %3458 = vst.msk [vmem:[%s207 + $0x1d8] sm:$0xff] %vm3398, %v3300
        %3459 = vst.msk [vmem:[%s207 + $0x1e0] sm:$0xff] %vm3398, %v3301
        %3460 = vst.msk [vmem:[%s207 + $0x1e8] sm:$0xff] %vm3398, %v3302
        %3461 = vst.msk [vmem:[%s207 + $0x1f0] sm:$0xff] %vm3398, %v3303
        %3462 = vst.msk [vmem:[%s207 + $0x1f8] sm:$0xff] %vm3398, %v3304
        %3463 = vst.msk [vmem:[%s207 + $0x200] sm:$0xff] %vm3398, %v3305
        %3464 = vst.msk [vmem:[%s207 + $0x208] sm:$0xff] %vm3398, %v3306
        %3465 = vst.msk [vmem:[%s207 + $0x210] sm:$0xff] %vm3398, %v3307
        %3466 = vst.msk [vmem:[%s207 + $0x218] sm:$0xff] %vm3398, %v3308
        %3467 = vst.msk [vmem:[%s207 + $0x220] sm:$0xff] %vm3398, %v3309
        %3468 = vst.msk [vmem:[%s207 + $0x228] sm:$0xff] %vm3398, %v3310
        %3469 = vst.msk [vmem:[%s207 + $0x230] sm:$0xff] %vm3398, %v3311
        %3470 = vst.msk [vmem:[%s207 + $0x238] sm:$0xff] %vm3398, %v3312
        %3471 = vst.msk [vmem:[%s207 + $0x240] sm:$0xff] %vm3398, %v3313
        %3472 = vst.msk [vmem:[%s207 + $0x248] sm:$0xff] %vm3398, %v3314
        %3473 = vst.msk [vmem:[%s207 + $0x250] sm:$0xff] %vm3398, %v3315
        %3474 = vst.msk [vmem:[%s207 + $0x258] sm:$0xff] %vm3398, %v3316
        %3475 = vst.msk [vmem:[%s207 + $0x260] sm:$0xff] %vm3398, %v3317
        %3476 = vst.msk [vmem:[%s207 + $0x268] sm:$0xff] %vm3398, %v3318
        %3477 = vst.msk [vmem:[%s207 + $0x270] sm:$0xff] %vm3398, %v3319
        %3478 = vst.msk [vmem:[%s207 + $0x278] sm:$0xff] %vm3398, %v3320
        %3479 = vst.msk [vmem:[%s207 + $0x280] sm:$0xff] %vm3398, %v3321
        %3480 = vst.msk [vmem:[%s207 + $0x288] sm:$0xff] %vm3398, %v3322
        %3481 = vst.msk [vmem:[%s207 + $0x290] sm:$0xff] %vm3398, %v3323
        %3482 = vst.msk [vmem:[%s207 + $0x298] sm:$0xff] %vm3398, %v3324
        %3483 = vst.msk [vmem:[%s207 + $0x2a0] sm:$0xff] %vm3398, %v3325
        %3484 = vst.msk [vmem:[%s207 + $0x2a8] sm:$0xff] %vm3398, %v3326
        %3485 = vst.msk [vmem:[%s207 + $0x2b0] sm:$0xff] %vm3398, %v3327
        %3486 = vst.msk [vmem:[%s207 + $0x2b8] sm:$0xff] %vm3398, %v3328
        %3487 = vst.msk [vmem:[%s207 + $0x2c0] sm:$0xff] %vm3398, %v3329
        %3488 = vst.msk [vmem:[%s207 + $0x2c8] sm:$0xff] %vm3398, %v3330
        %3489 = vst.msk [vmem:[%s207 + $0x2d0] sm:$0xff] %vm3398, %v3331
        %3490 = vst.msk [vmem:[%s207 + $0x2d8] sm:$0xff] %vm3398, %v3332
        %3491 = vst.msk [vmem:[%s207 + $0x2e0] sm:$0xff] %vm3398, %v3333
        %3492 = vst.msk [vmem:[%s207 + $0x2e8] sm:$0xff] %vm3398, %v3334
        %3493 = vst.msk [vmem:[%s207 + $0x2f0] sm:$0xff] %vm3398, %v3335
        %3494 = vst.msk [vmem:[%s207 + $0x2f8] sm:$0xff] %vm3398, %v3336
        %3495 = vst.msk [vmem:[%s207 + $0x300] sm:$0xff] %vm3398, %v3337
        %3496 = vst.msk [vmem:[%s207 + $0x308] sm:$0xff] %vm3398, %v3338
        %3497 = vst.msk [vmem:[%s207 + $0x310] sm:$0xff] %vm3398, %v3339
        %3498 = vst.msk [vmem:[%s207 + $0x318] sm:$0xff] %vm3398, %v3340
        %3499 = vst.msk [vmem:[%s207 + $0x320] sm:$0xff] %vm3398, %v3341
        %3500 = vst.msk [vmem:[%s207 + $0x328] sm:$0xff] %vm3398, %v3342
        %3501 = vst.msk [vmem:[%s207 + $0x330] sm:$0xff] %vm3398, %v3343
        %3502 = vst.msk [vmem:[%s207 + $0x338] sm:$0xff] %vm3398, %v3344
        %3503 = vst.msk [vmem:[%s207 + $0x340] sm:$0xff] %vm3398, %v3345
        %3504 = vst.msk [vmem:[%s207 + $0x348] sm:$0xff] %vm3398, %v3346
        %3505 = vst.msk [vmem:[%s207 + $0x350] sm:$0xff] %vm3398, %v3347
        %3506 = vst.msk [vmem:[%s207 + $0x358] sm:$0xff] %vm3398, %v3348
        %3507 = vst.msk [vmem:[%s207 + $0x360] sm:$0xff] %vm3398, %v3349
        %3508 = vst.msk [vmem:[%s207 + $0x368] sm:$0xff] %vm3398, %v3350
        %3509 = vst.msk [vmem:[%s207 + $0x370] sm:$0xff] %vm3398, %v3351
        %3510 = vst.msk [vmem:[%s207 + $0x378] sm:$0xff] %vm3398, %v3352
        %3511 = vst.msk [vmem:[%s207 + $0x380] sm:$0xff] %vm3398, %v3353
        %3512 = vst.msk [vmem:[%s207 + $0x388] sm:$0xff] %vm3398, %v3354
        %3513 = vst.msk [vmem:[%s207 + $0x390] sm:$0xff] %vm3398, %v3355
        %3514 = vst.msk [vmem:[%s207 + $0x398] sm:$0xff] %vm3398, %v3356
        %3515 = vst.msk [vmem:[%s207 + $0x3a0] sm:$0xff] %vm3398, %v3357
        %3516 = vst.msk [vmem:[%s207 + $0x3a8] sm:$0xff] %vm3398, %v3358
        %3517 = vst.msk [vmem:[%s207 + $0x3b0] sm:$0xff] %vm3398, %v3359
        %3518 = vst.msk [vmem:[%s207 + $0x3b8] sm:$0xff] %vm3398, %v3360
        %3519 = vst.msk [vmem:[%s207 + $0x3c0] sm:$0xff] %vm3398, %v3361
        %3520 = vst.msk [vmem:[%s207 + $0x3c8] sm:$0xff] %vm3398, %v3362
        %3521 = vst.msk [vmem:[%s207 + $0x3d0] sm:$0xff] %vm3398, %v3363
        %3522 = vst.msk [vmem:[%s207 + $0x3d8] sm:$0xff] %vm3398, %v3364
        %3523 = vst.msk [vmem:[%s207 + $0x3e0] sm:$0xff] %vm3398, %v3365
        %3524 = vst.msk [vmem:[%s207 + $0x3e8] sm:$0xff] %vm3398, %v3366
        %3525 = vst.msk [vmem:[%s207 + $0x3f0] sm:$0xff] %vm3398, %v3367
        %3526 = vst.msk [vmem:[%s207 + $0x3f8] sm:$0xff] %vm3398, %v3368
        %3527 = vst.msk [vmem:[%s207 + $0x400] sm:$0xff] %vm3398, %v3369
        %3528 = vst.msk [vmem:[%s207 + $0x408] sm:$0xff] %vm3398, %v3370
        %3529 = vst.msk [vmem:[%s207 + $0x410] sm:$0xff] %vm3398, %v3371
        %3530 = vst.msk [vmem:[%s207 + $0x418] sm:$0xff] %vm3398, %v3372
        %3531 = vst.msk [vmem:[%s207 + $0x420] sm:$0xff] %vm3398, %v3373
        %3532 = vst.msk [vmem:[%s207 + $0x428] sm:$0xff] %vm3398, %v3374
        %3533 = vst.msk [vmem:[%s207 + $0x430] sm:$0xff] %vm3398, %v3375
        %3534 = vst.msk [vmem:[%s207 + $0x438] sm:$0xff] %vm3398, %v3376
        %3535 = vst.msk [vmem:[%s207 + $0x440] sm:$0xff] %vm3398, %v3377
        %3536 = vst.msk [vmem:[%s207 + $0x448] sm:$0xff] %vm3398, %v3378
        %3537 = vst.msk [vmem:[%s207 + $0x450] sm:$0xff] %vm3398, %v3379
        %3538 = vst.msk [vmem:[%s207 + $0x458] sm:$0xff] %vm3398, %v3380
        %3539 = vst.msk [vmem:[%s207 + $0x460] sm:$0xff] %vm3398, %v3381
        %3540 = vst.msk [vmem:[%s207 + $0x468] sm:$0xff] %vm3398, %v3382
        %3541 = vst.msk [vmem:[%s207 + $0x470] sm:$0xff] %vm3398, %v3383
        %3542 = vst.msk [vmem:[%s207 + $0x478] sm:$0xff] %vm3398, %v3384
        %3543 = vst.msk [vmem:[%s207 + $0x480] sm:$0xff] %vm3398, %v3385
        %3544 = vst.msk [vmem:[%s207 + $0x488] sm:$0xff] %vm3398, %v3386
        %3545 = vst.msk [vmem:[%s207 + $0x490] sm:$0xff] %vm3398, %v3387
        %3546 = vst.msk [vmem:[%s207 + $0x498] sm:$0xff] %vm3398, %v3388
        %3547 = vst.msk [vmem:[%s207 + $0x4a0] sm:$0xff] %vm3398, %v3389
        %3548 = vst.msk [vmem:[%s207 + $0x4a8] sm:$0xff] %vm3398, %v3390
        %3549 = vst.msk [vmem:[%s207 + $0x4b0] sm:$0xff] %vm3398, %v3391
        %3550 = vst.msk [vmem:[%s207 + $0x4b8] sm:$0xff] %vm3398, %v3392
        %3551 = vst.msk [vmem:[%s207 + $0x4c0] sm:$0xff] %vm3398, %v3393
        %3552 = vst.msk [vmem:[%s207 + $0x4c8] sm:$0xff] %vm3398, %v3394
        %3553 = vst.msk [vmem:[%s207 + $0x4d0] sm:$0xff] %vm3398, %v3395
        %3554 = vst.msk [vmem:[%s207 + $0x4d8] sm:$0xff] %vm3398, %v3396
        %3555 = vst.msk [vmem:[%s207 + $0x4e0] sm:$0xff] %vm3398, %v3397
        %s3556 = sand.u32 %s96, 1
        %s3557 = sand.u32 %s96, 1
        %s3558 = smul.addr %s3557, 1256
        %s3559 = scalar_lea.vmem [#allocation7], %s3558
        // Predicated region
        $region41: #{tpu_custom_call.1} parent=31 // pred_check
          %p3560 = pneg %p106
        $region42: #{tpu_custom_call.1} parent=31 // pred_check_branch
          %3562 = sbr.rel (%p3560) target = $region44
        $region43: #{tpu_custom_call.1} parent=31 // pred_region
          %s3563 = smul.u32 157, %s20
          %s3564 = ssub.s32 313, %s3563
          %p3565 = scmp.lt.s32.totalorder %s3564, 157
          %s3566 = scalar_select %p3565, %s3564, 157
          %s3567 = smul.u32 128, %s3566
          %p3568 = scmp.ne.s32.totalorder 0, %s3567
          %s3569 = smul.addr %s3563, 8
          %s3570 = scalar_lea.vmem %s3, %s3569
          // Predicated region
          $region45: #{tpu_custom_call.1} parent=43 // pred_check
            %p3571 = pneg %p3568
          $region46: #{tpu_custom_call.1} parent=43 // pred_check_branch
            %3573 = sbr.rel (%p3571) target = $region48
          $region47: #{tpu_custom_call.1} parent=43 // pred_region
            // Predicated region
            $region49: #{tpu_custom_call.1} parent=47 // pred_check
              _
            $region50: #{tpu_custom_call.1} parent=47 // pred_check_branch
              %3575 = sbr.rel (0) target = $region52
            $region51: #{tpu_custom_call.1} parent=47 // pred_region
              // Predicated region
              $region71: #{tpu_custom_call.1} parent=51 // pred_check
                _
              $region72: #{tpu_custom_call.1} parent=51 // pred_check_branch
                %3751 = sbr.rel (0) target = $region74
              $region73: #{tpu_custom_call.1} parent=51 // pred_region
                %s3752 = sshrl.u32 %s3566, 6
                // While loop
                $region75: #{tpu_custom_call.1} parent=73 // loop_pre_header
                  _
                $region76: #{tpu_custom_call.1} parent=73 // loop_header
                  %s3754 = sphi 0, %s3756
                  %p3755 = scmp.ge.s32.totalorder %s3754, %s3752
                  %s3759 = sphi 0, %s3892
                  %s3760 = sphi %s3559, %s3895
                  %s3761 = sphi %s3570, %s3896
                $region77: #{tpu_custom_call.1} parent=73 // loop_header_branch
                  %3758 = sbr.rel (%p3755) target = $region81
                $region78: #{tpu_custom_call.1} parent=73 // loop_body
                  %v3762 = vld [vmem:[%s3760] sm:$0xff]
                  %3763 = vst [vmem:[%s3761] sm:$0xff] %v3762
                  %v3764 = vld [vmem:[%s3760 + $0x8] sm:$0xff]
                  %3765 = vst [vmem:[%s3761 + $0x8] sm:$0xff] %v3764
                  %v3766 = vld [vmem:[%s3760 + $0x10] sm:$0xff]
                  %3767 = vst [vmem:[%s3761 + $0x10] sm:$0xff] %v3766
                  %v3768 = vld [vmem:[%s3760 + $0x18] sm:$0xff]
                  %3769 = vst [vmem:[%s3761 + $0x18] sm:$0xff] %v3768
                  %v3770 = vld [vmem:[%s3760 + $0x20] sm:$0xff]
                  %3771 = vst [vmem:[%s3761 + $0x20] sm:$0xff] %v3770
                  %v3772 = vld [vmem:[%s3760 + $0x28] sm:$0xff]
                  %3773 = vst [vmem:[%s3761 + $0x28] sm:$0xff] %v3772
                  %v3774 = vld [vmem:[%s3760 + $0x30] sm:$0xff]
                  %3775 = vst [vmem:[%s3761 + $0x30] sm:$0xff] %v3774
                  %v3776 = vld [vmem:[%s3760 + $0x38] sm:$0xff]
                  %3777 = vst [vmem:[%s3761 + $0x38] sm:$0xff] %v3776
                  %v3778 = vld [vmem:[%s3760 + $0x40] sm:$0xff]
                  %3779 = vst [vmem:[%s3761 + $0x40] sm:$0xff] %v3778
                  %v3780 = vld [vmem:[%s3760 + $0x48] sm:$0xff]
                  %3781 = vst [vmem:[%s3761 + $0x48] sm:$0xff] %v3780
                  %v3782 = vld [vmem:[%s3760 + $0x50] sm:$0xff]
                  %3783 = vst [vmem:[%s3761 + $0x50] sm:$0xff] %v3782
                  %v3784 = vld [vmem:[%s3760 + $0x58] sm:$0xff]
                  %3785 = vst [vmem:[%s3761 + $0x58] sm:$0xff] %v3784
                  %v3786 = vld [vmem:[%s3760 + $0x60] sm:$0xff]
                  %3787 = vst [vmem:[%s3761 + $0x60] sm:$0xff] %v3786
                  %v3788 = vld [vmem:[%s3760 + $0x68] sm:$0xff]
                  %3789 = vst [vmem:[%s3761 + $0x68] sm:$0xff] %v3788
                  %v3790 = vld [vmem:[%s3760 + $0x70] sm:$0xff]
                  %3791 = vst [vmem:[%s3761 + $0x70] sm:$0xff] %v3790
                  %v3792 = vld [vmem:[%s3760 + $0x78] sm:$0xff]
                  %3793 = vst [vmem:[%s3761 + $0x78] sm:$0xff] %v3792
                  %v3794 = vld [vmem:[%s3760 + $0x80] sm:$0xff]
                  %3795 = vst [vmem:[%s3761 + $0x80] sm:$0xff] %v3794
                  %v3796 = vld [vmem:[%s3760 + $0x88] sm:$0xff]
                  %3797 = vst [vmem:[%s3761 + $0x88] sm:$0xff] %v3796
                  %v3798 = vld [vmem:[%s3760 + $0x90] sm:$0xff]
                  %3799 = vst [vmem:[%s3761 + $0x90] sm:$0xff] %v3798
                  %v3800 = vld [vmem:[%s3760 + $0x98] sm:$0xff]
                  %3801 = vst [vmem:[%s3761 + $0x98] sm:$0xff] %v3800
                  %v3802 = vld [vmem:[%s3760 + $0xa0] sm:$0xff]
                  %3803 = vst [vmem:[%s3761 + $0xa0] sm:$0xff] %v3802
                  %v3804 = vld [vmem:[%s3760 + $0xa8] sm:$0xff]
                  %3805 = vst [vmem:[%s3761 + $0xa8] sm:$0xff] %v3804
                  %v3806 = vld [vmem:[%s3760 + $0xb0] sm:$0xff]
                  %3807 = vst [vmem:[%s3761 + $0xb0] sm:$0xff] %v3806
                  %v3808 = vld [vmem:[%s3760 + $0xb8] sm:$0xff]
                  %3809 = vst [vmem:[%s3761 + $0xb8] sm:$0xff] %v3808
                  %v3810 = vld [vmem:[%s3760 + $0xc0] sm:$0xff]
                  %3811 = vst [vmem:[%s3761 + $0xc0] sm:$0xff] %v3810
                  %v3812 = vld [vmem:[%s3760 + $0xc8] sm:$0xff]
                  %3813 = vst [vmem:[%s3761 + $0xc8] sm:$0xff] %v3812
                  %v3814 = vld [vmem:[%s3760 + $0xd0] sm:$0xff]
                  %3815 = vst [vmem:[%s3761 + $0xd0] sm:$0xff] %v3814
                  %v3816 = vld [vmem:[%s3760 + $0xd8] sm:$0xff]
                  %3817 = vst [vmem:[%s3761 + $0xd8] sm:$0xff] %v3816
                  %v3818 = vld [vmem:[%s3760 + $0xe0] sm:$0xff]
                  %3819 = vst [vmem:[%s3761 + $0xe0] sm:$0xff] %v3818
                  %v3820 = vld [vmem:[%s3760 + $0xe8] sm:$0xff]
                  %3821 = vst [vmem:[%s3761 + $0xe8] sm:$0xff] %v3820
                  %v3822 = vld [vmem:[%s3760 + $0xf0] sm:$0xff]
                  %3823 = vst [vmem:[%s3761 + $0xf0] sm:$0xff] %v3822
                  %v3824 = vld [vmem:[%s3760 + $0xf8] sm:$0xff]
                  %3825 = vst [vmem:[%s3761 + $0xf8] sm:$0xff] %v3824
                  %v3826 = vld [vmem:[%s3760 + $0x100] sm:$0xff]
                  %3827 = vst [vmem:[%s3761 + $0x100] sm:$0xff] %v3826
                  %v3828 = vld [vmem:[%s3760 + $0x108] sm:$0xff]
                  %3829 = vst [vmem:[%s3761 + $0x108] sm:$0xff] %v3828
                  %v3830 = vld [vmem:[%s3760 + $0x110] sm:$0xff]
                  %3831 = vst [vmem:[%s3761 + $0x110] sm:$0xff] %v3830
                  %v3832 = vld [vmem:[%s3760 + $0x118] sm:$0xff]
                  %3833 = vst [vmem:[%s3761 + $0x118] sm:$0xff] %v3832
                  %v3834 = vld [vmem:[%s3760 + $0x120] sm:$0xff]
                  %3835 = vst [vmem:[%s3761 + $0x120] sm:$0xff] %v3834
                  %v3836 = vld [vmem:[%s3760 + $0x128] sm:$0xff]
                  %3837 = vst [vmem:[%s3761 + $0x128] sm:$0xff] %v3836
                  %v3838 = vld [vmem:[%s3760 + $0x130] sm:$0xff]
                  %3839 = vst [vmem:[%s3761 + $0x130] sm:$0xff] %v3838
                  %v3840 = vld [vmem:[%s3760 + $0x138] sm:$0xff]
                  %3841 = vst [vmem:[%s3761 + $0x138] sm:$0xff] %v3840
                  %v3842 = vld [vmem:[%s3760 + $0x140] sm:$0xff]
                  %3843 = vst [vmem:[%s3761 + $0x140] sm:$0xff] %v3842
                  %v3844 = vld [vmem:[%s3760 + $0x148] sm:$0xff]
                  %3845 = vst [vmem:[%s3761 + $0x148] sm:$0xff] %v3844
                  %v3846 = vld [vmem:[%s3760 + $0x150] sm:$0xff]
                  %3847 = vst [vmem:[%s3761 + $0x150] sm:$0xff] %v3846
                  %v3848 = vld [vmem:[%s3760 + $0x158] sm:$0xff]
                  %3849 = vst [vmem:[%s3761 + $0x158] sm:$0xff] %v3848
                  %v3850 = vld [vmem:[%s3760 + $0x160] sm:$0xff]
                  %3851 = vst [vmem:[%s3761 + $0x160] sm:$0xff] %v3850
                  %v3852 = vld [vmem:[%s3760 + $0x168] sm:$0xff]
                  %3853 = vst [vmem:[%s3761 + $0x168] sm:$0xff] %v3852
                  %v3854 = vld [vmem:[%s3760 + $0x170] sm:$0xff]
                  %3855 = vst [vmem:[%s3761 + $0x170] sm:$0xff] %v3854
                  %v3856 = vld [vmem:[%s3760 + $0x178] sm:$0xff]
                  %3857 = vst [vmem:[%s3761 + $0x178] sm:$0xff] %v3856
                  %v3858 = vld [vmem:[%s3760 + $0x180] sm:$0xff]
                  %3859 = vst [vmem:[%s3761 + $0x180] sm:$0xff] %v3858
                  %v3860 = vld [vmem:[%s3760 + $0x188] sm:$0xff]
                  %3861 = vst [vmem:[%s3761 + $0x188] sm:$0xff] %v3860
                  %v3862 = vld [vmem:[%s3760 + $0x190] sm:$0xff]
                  %3863 = vst [vmem:[%s3761 + $0x190] sm:$0xff] %v3862
                  %v3864 = vld [vmem:[%s3760 + $0x198] sm:$0xff]
                  %3865 = vst [vmem:[%s3761 + $0x198] sm:$0xff] %v3864
                  %v3866 = vld [vmem:[%s3760 + $0x1a0] sm:$0xff]
                  %3867 = vst [vmem:[%s3761 + $0x1a0] sm:$0xff] %v3866
                  %v3868 = vld [vmem:[%s3760 + $0x1a8] sm:$0xff]
                  %3869 = vst [vmem:[%s3761 + $0x1a8] sm:$0xff] %v3868
                  %v3870 = vld [vmem:[%s3760 + $0x1b0] sm:$0xff]
                  %3871 = vst [vmem:[%s3761 + $0x1b0] sm:$0xff] %v3870
                  %v3872 = vld [vmem:[%s3760 + $0x1b8] sm:$0xff]
                  %3873 = vst [vmem:[%s3761 + $0x1b8] sm:$0xff] %v3872
                  %v3874 = vld [vmem:[%s3760 + $0x1c0] sm:$0xff]
                  %3875 = vst [vmem:[%s3761 + $0x1c0] sm:$0xff] %v3874
                  %v3876 = vld [vmem:[%s3760 + $0x1c8] sm:$0xff]
                  %3877 = vst [vmem:[%s3761 + $0x1c8] sm:$0xff] %v3876
                  %v3878 = vld [vmem:[%s3760 + $0x1d0] sm:$0xff]
                  %3879 = vst [vmem:[%s3761 + $0x1d0] sm:$0xff] %v3878
                  %v3880 = vld [vmem:[%s3760 + $0x1d8] sm:$0xff]
                  %3881 = vst [vmem:[%s3761 + $0x1d8] sm:$0xff] %v3880
                  %v3882 = vld [vmem:[%s3760 + $0x1e0] sm:$0xff]
                  %3883 = vst [vmem:[%s3761 + $0x1e0] sm:$0xff] %v3882
                  %v3884 = vld [vmem:[%s3760 + $0x1e8] sm:$0xff]
                  %3885 = vst [vmem:[%s3761 + $0x1e8] sm:$0xff] %v3884
                  %v3886 = vld [vmem:[%s3760 + $0x1f0] sm:$0xff]
                  %3887 = vst [vmem:[%s3761 + $0x1f0] sm:$0xff] %v3886
                  %v3888 = vld [vmem:[%s3760 + $0x1f8] sm:$0xff]
                  %3889 = vst [vmem:[%s3761 + $0x1f8] sm:$0xff] %v3888
                  %s3890 = sadd.s32 1, %s3759
                  %p3891 = scmp.ge.s32.totalorder %s3890, %s3752
                  %s3892 = scalar_select %p3891, 0, %s3890
                  %s3893 = smul.u32 %s3892, 512
                  %s3894 = smul.u32 %s3892, 512
                  %s3895 = scalar_lea.vmem %s3559, %s3893 [#allocation7]
                  %s3896 = scalar_lea.vmem %s3570, %s3894
                $region79: #{tpu_custom_call.1} parent=73 // loop_footer
                  %s3756 = sadd.s32 %s3754, 1
                $region80: #{tpu_custom_call.1} parent=73 // loop_footer_branch
                  %3753 = sbr.rel target = $region76
                $region81: #{tpu_custom_call.1} parent=73 // loop_exit
                  _
                %s3897 = sshrl.u32 %s3566, 6
                %s3898 = sand.u32 %s3566, 63
                %s3899 = smul.u32 %s3897, 64
                %s3900 = smul.u32 8, %s3899
                %s3901 = scalar_lea.vmem %s3559, %s3900 [#allocation7]
                %s3902 = smul.u32 8, %s3899
                %s3903 = scalar_lea.vmem %s3570, %s3902
                // While loop
                $region82: #{tpu_custom_call.1} parent=73 // loop_pre_header
                  _
                $region83: #{tpu_custom_call.1} parent=73 // loop_header
                  %s3905 = sphi 0, %s3907
                  %p3906 = scmp.ge.s32.totalorder %s3905, %s3898
                  %s3910 = sphi 0, %s3917
                  %s3911 = sphi %s3901, %s3920
                  %s3912 = sphi %s3903, %s3921
                $region84: #{tpu_custom_call.1} parent=73 // loop_header_branch
                  %3909 = sbr.rel (%p3906) target = $region88
                $region85: #{tpu_custom_call.1} parent=73 // loop_body
                  %v3913 = vld [vmem:[%s3911] sm:$0xff]
                  %3914 = vst [vmem:[%s3912] sm:$0xff] %v3913
                  %s3915 = sadd.s32 1, %s3910
                  %p3916 = scmp.ge.s32.totalorder %s3915, %s3898
                  %s3917 = scalar_select %p3916, 0, %s3915
                  %s3918 = smul.u32 %s3917, 8
                  %s3919 = smul.u32 %s3917, 8
                  %s3920 = scalar_lea.vmem %s3901, %s3918 [#allocation7]
                  %s3921 = scalar_lea.vmem %s3903, %s3919
                $region86: #{tpu_custom_call.1} parent=73 // loop_footer
                  %s3907 = sadd.s32 %s3905, 1
                $region87: #{tpu_custom_call.1} parent=73 // loop_footer_branch
                  %3904 = sbr.rel target = $region83
                $region88: #{tpu_custom_call.1} parent=73 // loop_exit
                  _
              $region74: #{tpu_custom_call.1} parent=51 // pred_fallthru
                _
              // Predicated region
              $region89: #{tpu_custom_call.1} parent=51 // pred_check
                _
              $region90: #{tpu_custom_call.1} parent=51 // pred_check_branch
                %3923 = sbr.rel target = $region92
              $region91: #{tpu_custom_call.1} parent=51 // pred_region
                _
              $region92: #{tpu_custom_call.1} parent=51 // pred_fallthru
                _
            $region52: #{tpu_custom_call.1} parent=47 // pred_fallthru
              _
            // Predicated region
            $region53: #{tpu_custom_call.1} parent=47 // pred_check
              _
            $region54: #{tpu_custom_call.1} parent=47 // pred_check_branch
              %3577 = sbr.rel target = $region56
            $region55: #{tpu_custom_call.1} parent=47 // pred_region
              %s3579 = ssub.s32 256, 1
              %s3580 = sshrl.u32 %s3566, 6
              // While loop
              $region57: #{tpu_custom_call.1} parent=55 // loop_pre_header
                _
              $region58: #{tpu_custom_call.1} parent=55 // loop_header
                %s3582 = sphi 0, %s3584
                %p3583 = scmp.ge.s32.totalorder %s3582, %s3580
                %s3587 = sphi 0, %s3720
                %s3588 = sphi %s3559, %s3723
                %s3589 = sphi %s3570, %s3724
              $region59: #{tpu_custom_call.1} parent=55 // loop_header_branch
                %3586 = sbr.rel (%p3583) target = $region63
              $region60: #{tpu_custom_call.1} parent=55 // loop_body
                %v3590 = vld [vmem:[%s3588] sm:%s3579]
                %3591 = vst [vmem:[%s3589] sm:%s3579] %v3590
                %v3592 = vld [vmem:[%s3588 + $0x8] sm:%s3579]
                %3593 = vst [vmem:[%s3589 + $0x8] sm:%s3579] %v3592
                %v3594 = vld [vmem:[%s3588 + $0x10] sm:%s3579]
                %3595 = vst [vmem:[%s3589 + $0x10] sm:%s3579] %v3594
                %v3596 = vld [vmem:[%s3588 + $0x18] sm:%s3579]
                %3597 = vst [vmem:[%s3589 + $0x18] sm:%s3579] %v3596
                %v3598 = vld [vmem:[%s3588 + $0x20] sm:%s3579]
                %3599 = vst [vmem:[%s3589 + $0x20] sm:%s3579] %v3598
                %v3600 = vld [vmem:[%s3588 + $0x28] sm:%s3579]
                %3601 = vst [vmem:[%s3589 + $0x28] sm:%s3579] %v3600
                %v3602 = vld [vmem:[%s3588 + $0x30] sm:%s3579]
                %3603 = vst [vmem:[%s3589 + $0x30] sm:%s3579] %v3602
                %v3604 = vld [vmem:[%s3588 + $0x38] sm:%s3579]
                %3605 = vst [vmem:[%s3589 + $0x38] sm:%s3579] %v3604
                %v3606 = vld [vmem:[%s3588 + $0x40] sm:%s3579]
                %3607 = vst [vmem:[%s3589 + $0x40] sm:%s3579] %v3606
                %v3608 = vld [vmem:[%s3588 + $0x48] sm:%s3579]
                %3609 = vst [vmem:[%s3589 + $0x48] sm:%s3579] %v3608
                %v3610 = vld [vmem:[%s3588 + $0x50] sm:%s3579]
                %3611 = vst [vmem:[%s3589 + $0x50] sm:%s3579] %v3610
                %v3612 = vld [vmem:[%s3588 + $0x58] sm:%s3579]
                %3613 = vst [vmem:[%s3589 + $0x58] sm:%s3579] %v3612
                %v3614 = vld [vmem:[%s3588 + $0x60] sm:%s3579]
                %3615 = vst [vmem:[%s3589 + $0x60] sm:%s3579] %v3614
                %v3616 = vld [vmem:[%s3588 + $0x68] sm:%s3579]
                %3617 = vst [vmem:[%s3589 + $0x68] sm:%s3579] %v3616
                %v3618 = vld [vmem:[%s3588 + $0x70] sm:%s3579]
                %3619 = vst [vmem:[%s3589 + $0x70] sm:%s3579] %v3618
                %v3620 = vld [vmem:[%s3588 + $0x78] sm:%s3579]
                %3621 = vst [vmem:[%s3589 + $0x78] sm:%s3579] %v3620
                %v3622 = vld [vmem:[%s3588 + $0x80] sm:%s3579]
                %3623 = vst [vmem:[%s3589 + $0x80] sm:%s3579] %v3622
                %v3624 = vld [vmem:[%s3588 + $0x88] sm:%s3579]
                %3625 = vst [vmem:[%s3589 + $0x88] sm:%s3579] %v3624
                %v3626 = vld [vmem:[%s3588 + $0x90] sm:%s3579]
                %3627 = vst [vmem:[%s3589 + $0x90] sm:%s3579] %v3626
                %v3628 = vld [vmem:[%s3588 + $0x98] sm:%s3579]
                %3629 = vst [vmem:[%s3589 + $0x98] sm:%s3579] %v3628
                %v3630 = vld [vmem:[%s3588 + $0xa0] sm:%s3579]
                %3631 = vst [vmem:[%s3589 + $0xa0] sm:%s3579] %v3630
                %v3632 = vld [vmem:[%s3588 + $0xa8] sm:%s3579]
                %3633 = vst [vmem:[%s3589 + $0xa8] sm:%s3579] %v3632
                %v3634 = vld [vmem:[%s3588 + $0xb0] sm:%s3579]
                %3635 = vst [vmem:[%s3589 + $0xb0] sm:%s3579] %v3634
                %v3636 = vld [vmem:[%s3588 + $0xb8] sm:%s3579]
                %3637 = vst [vmem:[%s3589 + $0xb8] sm:%s3579] %v3636
                %v3638 = vld [vmem:[%s3588 + $0xc0] sm:%s3579]
                %3639 = vst [vmem:[%s3589 + $0xc0] sm:%s3579] %v3638
                %v3640 = vld [vmem:[%s3588 + $0xc8] sm:%s3579]
                %3641 = vst [vmem:[%s3589 + $0xc8] sm:%s3579] %v3640
                %v3642 = vld [vmem:[%s3588 + $0xd0] sm:%s3579]
                %3643 = vst [vmem:[%s3589 + $0xd0] sm:%s3579] %v3642
                %v3644 = vld [vmem:[%s3588 + $0xd8] sm:%s3579]
                %3645 = vst [vmem:[%s3589 + $0xd8] sm:%s3579] %v3644
                %v3646 = vld [vmem:[%s3588 + $0xe0] sm:%s3579]
                %3647 = vst [vmem:[%s3589 + $0xe0] sm:%s3579] %v3646
                %v3648 = vld [vmem:[%s3588 + $0xe8] sm:%s3579]
                %3649 = vst [vmem:[%s3589 + $0xe8] sm:%s3579] %v3648
                %v3650 = vld [vmem:[%s3588 + $0xf0] sm:%s3579]
                %3651 = vst [vmem:[%s3589 + $0xf0] sm:%s3579] %v3650
                %v3652 = vld [vmem:[%s3588 + $0xf8] sm:%s3579]
                %3653 = vst [vmem:[%s3589 + $0xf8] sm:%s3579] %v3652
                %v3654 = vld [vmem:[%s3588 + $0x100] sm:%s3579]
                %3655 = vst [vmem:[%s3589 + $0x100] sm:%s3579] %v3654
                %v3656 = vld [vmem:[%s3588 + $0x108] sm:%s3579]
                %3657 = vst [vmem:[%s3589 + $0x108] sm:%s3579] %v3656
                %v3658 = vld [vmem:[%s3588 + $0x110] sm:%s3579]
                %3659 = vst [vmem:[%s3589 + $0x110] sm:%s3579] %v3658
                %v3660 = vld [vmem:[%s3588 + $0x118] sm:%s3579]
                %3661 = vst [vmem:[%s3589 + $0x118] sm:%s3579] %v3660
                %v3662 = vld [vmem:[%s3588 + $0x120] sm:%s3579]
                %3663 = vst [vmem:[%s3589 + $0x120] sm:%s3579] %v3662
                %v3664 = vld [vmem:[%s3588 + $0x128] sm:%s3579]
                %3665 = vst [vmem:[%s3589 + $0x128] sm:%s3579] %v3664
                %v3666 = vld [vmem:[%s3588 + $0x130] sm:%s3579]
                %3667 = vst [vmem:[%s3589 + $0x130] sm:%s3579] %v3666
                %v3668 = vld [vmem:[%s3588 + $0x138] sm:%s3579]
                %3669 = vst [vmem:[%s3589 + $0x138] sm:%s3579] %v3668
                %v3670 = vld [vmem:[%s3588 + $0x140] sm:%s3579]
                %3671 = vst [vmem:[%s3589 + $0x140] sm:%s3579] %v3670
                %v3672 = vld [vmem:[%s3588 + $0x148] sm:%s3579]
                %3673 = vst [vmem:[%s3589 + $0x148] sm:%s3579] %v3672
                %v3674 = vld [vmem:[%s3588 + $0x150] sm:%s3579]
                %3675 = vst [vmem:[%s3589 + $0x150] sm:%s3579] %v3674
                %v3676 = vld [vmem:[%s3588 + $0x158] sm:%s3579]
                %3677 = vst [vmem:[%s3589 + $0x158] sm:%s3579] %v3676
                %v3678 = vld [vmem:[%s3588 + $0x160] sm:%s3579]
                %3679 = vst [vmem:[%s3589 + $0x160] sm:%s3579] %v3678
                %v3680 = vld [vmem:[%s3588 + $0x168] sm:%s3579]
                %3681 = vst [vmem:[%s3589 + $0x168] sm:%s3579] %v3680
                %v3682 = vld [vmem:[%s3588 + $0x170] sm:%s3579]
                %3683 = vst [vmem:[%s3589 + $0x170] sm:%s3579] %v3682
                %v3684 = vld [vmem:[%s3588 + $0x178] sm:%s3579]
                %3685 = vst [vmem:[%s3589 + $0x178] sm:%s3579] %v3684
                %v3686 = vld [vmem:[%s3588 + $0x180] sm:%s3579]
                %3687 = vst [vmem:[%s3589 + $0x180] sm:%s3579] %v3686
                %v3688 = vld [vmem:[%s3588 + $0x188] sm:%s3579]
                %3689 = vst [vmem:[%s3589 + $0x188] sm:%s3579] %v3688
                %v3690 = vld [vmem:[%s3588 + $0x190] sm:%s3579]
                %3691 = vst [vmem:[%s3589 + $0x190] sm:%s3579] %v3690
                %v3692 = vld [vmem:[%s3588 + $0x198] sm:%s3579]
                %3693 = vst [vmem:[%s3589 + $0x198] sm:%s3579] %v3692
                %v3694 = vld [vmem:[%s3588 + $0x1a0] sm:%s3579]
                %3695 = vst [vmem:[%s3589 + $0x1a0] sm:%s3579] %v3694
                %v3696 = vld [vmem:[%s3588 + $0x1a8] sm:%s3579]
                %3697 = vst [vmem:[%s3589 + $0x1a8] sm:%s3579] %v3696
                %v3698 = vld [vmem:[%s3588 + $0x1b0] sm:%s3579]
                %3699 = vst [vmem:[%s3589 + $0x1b0] sm:%s3579] %v3698
                %v3700 = vld [vmem:[%s3588 + $0x1b8] sm:%s3579]
                %3701 = vst [vmem:[%s3589 + $0x1b8] sm:%s3579] %v3700
                %v3702 = vld [vmem:[%s3588 + $0x1c0] sm:%s3579]
                %3703 = vst [vmem:[%s3589 + $0x1c0] sm:%s3579] %v3702
                %v3704 = vld [vmem:[%s3588 + $0x1c8] sm:%s3579]
                %3705 = vst [vmem:[%s3589 + $0x1c8] sm:%s3579] %v3704
                %v3706 = vld [vmem:[%s3588 + $0x1d0] sm:%s3579]
                %3707 = vst [vmem:[%s3589 + $0x1d0] sm:%s3579] %v3706
                %v3708 = vld [vmem:[%s3588 + $0x1d8] sm:%s3579]
                %3709 = vst [vmem:[%s3589 + $0x1d8] sm:%s3579] %v3708
                %v3710 = vld [vmem:[%s3588 + $0x1e0] sm:%s3579]
                %3711 = vst [vmem:[%s3589 + $0x1e0] sm:%s3579] %v3710
                %v3712 = vld [vmem:[%s3588 + $0x1e8] sm:%s3579]
                %3713 = vst [vmem:[%s3589 + $0x1e8] sm:%s3579] %v3712
                %v3714 = vld [vmem:[%s3588 + $0x1f0] sm:%s3579]
                %3715 = vst [vmem:[%s3589 + $0x1f0] sm:%s3579] %v3714
                %v3716 = vld [vmem:[%s3588 + $0x1f8] sm:%s3579]
                %3717 = vst [vmem:[%s3589 + $0x1f8] sm:%s3579] %v3716
                %s3718 = sadd.s32 1, %s3587
                %p3719 = scmp.ge.s32.totalorder %s3718, %s3580
                %s3720 = scalar_select %p3719, 0, %s3718
                %s3721 = smul.u32 %s3720, 512
                %s3722 = smul.u32 %s3720, 512
                %s3723 = scalar_lea.vmem %s3559, %s3721 [#allocation7]
                %s3724 = scalar_lea.vmem %s3570, %s3722
              $region61: #{tpu_custom_call.1} parent=55 // loop_footer
                %s3584 = sadd.s32 %s3582, 1
              $region62: #{tpu_custom_call.1} parent=55 // loop_footer_branch
                %3581 = sbr.rel target = $region58
              $region63: #{tpu_custom_call.1} parent=55 // loop_exit
                _
              %s3725 = sshrl.u32 %s3566, 6
              %s3726 = sand.u32 %s3566, 63
              %s3727 = smul.u32 %s3725, 64
              %s3728 = smul.u32 8, %s3727
              %s3729 = scalar_lea.vmem %s3559, %s3728 [#allocation7]
              %s3730 = smul.u32 8, %s3727
              %s3731 = scalar_lea.vmem %s3570, %s3730
              // While loop
              $region64: #{tpu_custom_call.1} parent=55 // loop_pre_header
                _
              $region65: #{tpu_custom_call.1} parent=55 // loop_header
                %s3733 = sphi 0, %s3735
                %p3734 = scmp.ge.s32.totalorder %s3733, %s3726
                %s3738 = sphi 0, %s3745
                %s3739 = sphi %s3729, %s3748
                %s3740 = sphi %s3731, %s3749
              $region66: #{tpu_custom_call.1} parent=55 // loop_header_branch
                %3737 = sbr.rel (%p3734) target = $region70
              $region67: #{tpu_custom_call.1} parent=55 // loop_body
                %v3741 = vld [vmem:[%s3739] sm:%s3579]
                %3742 = vst [vmem:[%s3740] sm:%s3579] %v3741
                %s3743 = sadd.s32 1, %s3738
                %p3744 = scmp.ge.s32.totalorder %s3743, %s3726
                %s3745 = scalar_select %p3744, 0, %s3743
                %s3746 = smul.u32 %s3745, 8
                %s3747 = smul.u32 %s3745, 8
                %s3748 = scalar_lea.vmem %s3729, %s3746 [#allocation7]
                %s3749 = scalar_lea.vmem %s3731, %s3747
              $region68: #{tpu_custom_call.1} parent=55 // loop_footer
                %s3735 = sadd.s32 %s3733, 1
              $region69: #{tpu_custom_call.1} parent=55 // loop_footer_branch
                %3732 = sbr.rel target = $region65
              $region70: #{tpu_custom_call.1} parent=55 // loop_exit
                _
            $region56: #{tpu_custom_call.1} parent=47 // pred_fallthru
              _
          $region48: #{tpu_custom_call.1} parent=43 // pred_fallthru
            _
          %3924 = vnop
        $region44: #{tpu_custom_call.1} parent=31 // pred_fallthru
          _
      $region32: #{tpu_custom_call.1} parent=5 // pred_fallthru
        _
      %p3925 = scmp.le.s32.totalorder 2, %s15
      // Predicated region
      $region93: #{tpu_custom_call.1} parent=5 // pred_check
        %p3926 = pneg %p3925
      $region94: #{tpu_custom_call.1} parent=5 // pred_check_branch
        %3928 = sbr.rel (%p3926) target = $region96
      $region95: #{tpu_custom_call.1} parent=5 // pred_region
        %s3929 = ssub.s32 %s15, 2
        // Predicated region
        $region97: #{tpu_custom_call.1} parent=95 // pred_check
          %p3930 = pneg %p112
        $region98: #{tpu_custom_call.1} parent=95 // pred_check_branch
          %3932 = sbr.rel (%p3930) target = $region100
        $region99: #{tpu_custom_call.1} parent=95 // pred_region
          %s3933 = sand.u32 %s97, 1
          %s3934 = sand.u32 %s97, 1
          %s3935 = smul.addr %s3934, 1256
          %s3936 = scalar_lea.vmem [#allocation7], %s3935
        $region100: #{tpu_custom_call.1} parent=95 // pred_fallthru
          _
      $region96: #{tpu_custom_call.1} parent=5 // pred_fallthru
        _
    $region6: #{tpu_custom_call.1} parent=1 // loop_footer
      %s19 = sadd.s32 1, %s15
    $region7: #{tpu_custom_call.1} parent=1 // loop_footer_branch
      %14 = sbr.rel target = $region3
    $region8: #{tpu_custom_call.1} parent=1 // loop_exit
      _
    %3937 = vsyncpa [#allocation4], 1
    %s3938 = scalar_lea.sflag [#allocation4], 1
    %3939 = vsyncpa %s3938, 1
    %3940 = vsyncpa [#allocation6], 1

</llo_original>
